<compile_context>
chip_gen: v7x
topology: tpu7x:2x2x1
jax: 0.10.0
libtpu: 0.0.40
codegen_flags: <defaults>
</compile_context>

<pallas_src>
import functools

import numpy as np

import jax
import jax.numpy as jnp
from jax.experimental import pallas as pl
from jax.experimental.pallas import tpu as pltpu

VMEM_SPEC = pl.BlockSpec(memory_space=pltpu.MemorySpace.VMEM)

HIDDEN = 32
N_LAYERS = 5
BP = 8  # padded batch size = one native sublane group


# ----------------------------------------------------------------------------
# Pallas kernels
# ----------------------------------------------------------------------------
def _conv_pool_kernel(patches_ref, w_ref, b_ref, pool_ref, o_ref):
    # Conv1 (as im2col matmul) + ReLU + AvgPool (as a block-diagonal pooling
    # matrix matmul), fused in one kernel.
    c = jnp.dot(patches_ref[...], w_ref[...], preferred_element_type=jnp.float32)
    c = jnp.maximum(c + b_ref[...], 0.0)                    # (B*Lo1, 32)
    o_ref[...] = jnp.dot(pool_ref[...], c, preferred_element_type=jnp.float32)


def _residual_kernel(p2_ref, p4_ref, w2_ref, b2_ref, w4_ref, b4_ref,
                     w3_ref, b3_ref, shift_ref, o_ref):
    # res = relu(conv3(relu(conv2(p1)))) + relu(conv4(p1)); conv3 is realized
    # in-kernel as sum_k S_k @ x2 @ W3_k with batch-block-diagonal shift
    # matrices S_k, so x2 never leaves VMEM.
    x2 = jnp.maximum(
        jnp.dot(p2_ref[...], w2_ref[...], preferred_element_type=jnp.float32)
        + b2_ref[...], 0.0)                                  # (T*Bp, 64)
    y4 = jnp.maximum(
        jnp.dot(p4_ref[...], w4_ref[...], preferred_element_type=jnp.float32)
        + b4_ref[...], 0.0)                                  # (T*Bp, 64)
    c3 = jnp.dot(jnp.dot(shift_ref[0], x2, preferred_element_type=jnp.float32),
                 w3_ref[0], preferred_element_type=jnp.float32)
    for k in (1, 2):
        c3 = c3 + jnp.dot(
            jnp.dot(shift_ref[k], x2, preferred_element_type=jnp.float32),
            w3_ref[k], preferred_element_type=jnp.float32)
    o_ref[...] = jnp.maximum(c3 + b3_ref[...], 0.0) + y4


def _bigru_layer_kernel(x_ref, wih_ref, whh_ref, bx_ref, bh_ref, o_ref,
                        gx_scr, *, T, Bp, H):
    # x_ref:   (T*Bp, 2H)   rows ordered (time, padded-batch)
    # wih_ref: (2H, 6H)     [fwd Wih^T | bwd Wih^T], gate order (r,z,n)
    # whh_ref: (2H, 6H)     block-diagonal [Whh_f^T, Whh_b^T], bf16
    # bx_ref:  (1, 6H)      b_ih + [b_hr, b_hz, 0]  per direction
    # bh_ref:  (1, 6H)      [0, 0, b_hn]            per direction
    # o_ref:   (T*Bp, 2H)   fwd states in lanes [0,H), bwd in lanes [H,2H)
    # gx_scr:  (T*Bp, 6H)   hoisted input projections for both directions
    G = 3 * H
    # One big matmul for the input projection of every timestep / direction.
    gx_scr[...] = (jnp.dot(x_ref[...], wih_ref[...],
                           preferred_element_type=jnp.float32) + bx_ref[...])
    bh = bh_ref[...]
    h_f = jnp.zeros((Bp, H), jnp.float32)
    h_b = jnp.zeros((Bp, H), jnp.float32)
    # Fully unrolled recurrence (T is static and small) -> static, tile-aligned
    # slices and LLO visibility across steps.
    for s in range(T):
        h_all = jnp.concatenate([h_f, h_b], axis=-1)          # (Bp, 2H) f32
        # Single merged-gates, merged-directions hidden matmul (bf16 operands,
        # f32 accumulation); elementwise math stays f32 (v5e friendly).
        gh = jnp.dot(h_all.astype(jnp.bfloat16), whh_ref[...],
                     preferred_element_type=jnp.float32) + bh  # (Bp, 6H)
        ga = gx_scr[s * Bp:(s + 1) * Bp, :]                    # fwd @ time s
        gb = gx_scr[(T - 1 - s) * Bp:(T - s) * Bp, :]          # bwd @ time T-1-s
        # forward direction
        r_f = jax.nn.sigmoid(ga[:, 0:H] + gh[:, 0:H])
        z_f = jax.nn.sigmoid(ga[:, H:2 * H] + gh[:, H:2 * H])
        n_f = jnp.tanh(ga[:, 2 * H:G] + r_f * gh[:, 2 * H:G])
        h_f = (1.0 - z_f) * n_f + z_f * h_f
        # backward direction
        r_b = jax.nn.sigmoid(gb[:, G:G + H] + gh[:, G:G + H])
        z_b = jax.nn.sigmoid(gb[:, G + H:G + 2 * H] + gh[:, G + H:G + 2 * H])
        n_b = jnp.tanh(gb[:, G + 2 * H:2 * G] + r_b * gh[:, G + 2 * H:2 * G])
        h_b = (1.0 - z_b) * n_b + z_b * h_b
        # Write both halves of the concatenated output directly.
        o_ref[s * Bp:(s + 1) * Bp, 0:H] = h_f
        o_ref[(T - 1 - s) * Bp:(T - s) * Bp, H:2 * H] = h_b


def _attention_kernel(rnn_ref, w1_ref, b1_ref, w2_ref, ind_ref, ind_t_ref,
                      o_ref, *, T, Bp, F):
    # rnn_ref: (T*Bp, F=2H) rows ordered (time, padded-batch)
    # ind_ref: (Bp, T*Bp)   batch indicator (per-batch time reduction matrix)
    # o_ref:   (Bp, 2F)     lane-dense output: [last-step | attn-weighted sum]
    r = rnn_ref[...]
    h = jnp.maximum(
        jnp.dot(r, w1_ref[...], preferred_element_type=jnp.float32)
        + b1_ref[...], 0.0)                                              # (T*Bp, 128)
    s = jnp.dot(h, w2_ref[...], preferred_element_type=jnp.float32)     # (T*Bp, 1)
    # Subtracting a global constant is a valid per-batch softmax stabilization.
    e = jnp.exp(s - jnp.max(s))
    denom = jnp.dot(ind_ref[...], e, preferred_element_type=jnp.float32)       # (Bp, 1)
    denom_rows = jnp.dot(ind_t_ref[...], denom,
                         preferred_element_type=jnp.float32)                   # (T*Bp, 1)
    a = e / denom_rows
    weighted = jnp.dot(ind_ref[...], a * r, preferred_element_type=jnp.float32)  # (Bp, F)
    last = r[(T - 1) * Bp:T * Bp, :]                                              # (Bp, F)
    o_ref[...] = jnp.concatenate([last, weighted], axis=-1)


# ----------------------------------------------------------------------------
# pallas_call wrappers
# ----------------------------------------------------------------------------
def conv_pool(patches, w, b, pool, out_rows):
    return pl.pallas_call(
        _conv_pool_kernel,
        out_shape=jax.ShapeDtypeStruct((out_rows, w.shape[1]), jnp.float32),
        in_specs=[VMEM_SPEC] * 4,
        out_specs=VMEM_SPEC,
    )(patches, w, b, pool)


def residual_block(p2, p4, prep, rows):
    return pl.pallas_call(
        _residual_kernel,
        out_shape=jax.ShapeDtypeStruct((rows, 64), jnp.float32),
        in_specs=[VMEM_SPEC] * 9,
        out_specs=VMEM_SPEC,
    )(p2, p4, prep["w2m"], prep["b2"], prep["w4m"], prep["b4"],
      prep["w3m"], prep["b3"], prep["shift"])


def bigru_layer(x, wih, whh, bx, bh, T, Bp, H):
    kern = functools.partial(_bigru_layer_kernel, T=T, Bp=Bp, H=H)
    return pl.pallas_call(
        kern,
        out_shape=jax.ShapeDtypeStruct((T * Bp, 2 * H), jnp.float32),
        in_specs=[VMEM_SPEC] * 5,
        out_specs=VMEM_SPEC,
        scratch_shapes=[pltpu.VMEM((T * Bp, 6 * H), jnp.float32)],
    )(x, wih, whh, bx, bh)


def attention_head(rnn, w1, b1, w2, ind, ind_t, T, Bp):
    F = rnn.shape[1]
    kern = functools.partial(_attention_kernel, T=T, Bp=Bp, F=F)
    return pl.pallas_call(
        kern,
        out_shape=jax.ShapeDtypeStruct((Bp, 2 * F), jnp.float32),
        in_specs=[VMEM_SPEC] * 6,
        out_specs=VMEM_SPEC,
    )(rnn, w1, b1, w2, ind, ind_t)


# ----------------------------------------------------------------------------
# Host-side glue (im2col / layout plumbing) and constant matrices
# ----------------------------------------------------------------------------
def _im2col_1d(x, kernel_size, stride, padding, dilation=1):
    # x: (B, L, C) -> (B, L_out, K, C)
    B, L, C = x.shape
    xp = jnp.pad(x, ((0, 0), (padding, padding), (0, 0)))
    Lp = L + 2 * padding
    eff_k = (kernel_size - 1) * dilation + 1
    L_out = (Lp - eff_k) // stride + 1
    cols = [xp[:, k * dilation:k * dilation + stride * L_out:stride, :]
            for k in range(kernel_size)]
    return jnp.stack(cols, axis=2)


def _to_tbp(x_blf, Bp):
    # (B, Lo, F) -> (Lo * Bp, F) with rows ordered (time, padded-batch).
    B, Lo, F = x_blf.shape
    assert B <= Bp
    x = jnp.transpose(x_blf, (1, 0, 2))
    x = jnp.pad(x, ((0, 0), (0, Bp - B), (0, 0)))
    return x.reshape(Lo * Bp, F)


def _pool_matrix(B, Lo1, Lo2):
    # AvgPool1d(k=3, s=2, p=1, count_include_pad=True) as a (B*Lo2, B*Lo1) matrix.
    P = np.zeros((B * Lo2, B * Lo1), np.float32)
    for b in range(B):
        for j in range(Lo2):
            for k in range(3):
                i = 2 * j - 1 + k
                if 0 <= i < Lo1:
                    P[b * Lo2 + j, b * Lo1 + i] = 1.0 / 3.0
    return jnp.asarray(P)


def _shift_matrices(T, Bp):
    # conv3 (k=3, s=1, p=1) tap-k shift matrices acting on (time, batch) rows.
    S = np.zeros((3, T * Bp, T * Bp), np.float32)
    for k in range(3):
        for t in range(T):
            s = t - 1 + k
            if 0 <= s < T:
                for b in range(Bp):
                    S[k, t * Bp + b, s * Bp + b] = 1.0
    return jnp.asarray(S)


def _batch_indicator(T, Bp):
    M = np.zeros((Bp, T * Bp), np.float32)
    for b in range(Bp):
        for t in range(T):
            M[b, t * Bp + b] = 1.0
    return jnp.asarray(M)


# ----------------------------------------------------------------------------
# Parameter preparation (torch layout -> kernel layout, done once)
# ----------------------------------------------------------------------------
def prepare_params(params, B, L):
    H = HIDDEN
    Lo1 = (L + 2 * 2 - 6) // 2 + 1          # Conv1 output length
    Lo2 = (Lo1 + 2 * 1 - 3) // 2 + 1        # AvgPool output length
    T = (Lo2 + 2 * 2 - 5) // 2 + 1          # ResidualBlock output length

    prep = {
        "w1m": jnp.transpose(params["conv1_w"], (2, 1, 0)).reshape(6 * 16, 32),
        "b1": params["conv1_b"].reshape(1, 32),
        "pool": _pool_matrix(B, Lo1, Lo2),
        "w2m": jnp.transpose(params["conv2_w"], (2, 1, 0)).reshape(3 * 32, 64),
        "b2": params["conv2_b"].reshape(1, 64),
        "w4m": jnp.transpose(params["conv4_w"], (2, 1, 0)).reshape(32, 64),
        "b4": params["conv4_b"].reshape(1, 64),
        "w3m": jnp.stack([params["conv3_w"][:, :, k].T for k in range(3)], axis=0),
        "b3": params["conv3_b"].reshape(1, 64),
        "shift": _shift_matrices(T, BP),
        "att_w1": params["att_w1"].T,                 # (64, 128)
        "att_b1": params["att_b1"].reshape(1, 128),
        "att_w2": params["att_w2"].T,                 # (128, 1)
        "ind": _batch_indicator(T, BP),
        "ind_t": _batch_indicator(T, BP).T,
        "gru": [],
    }

    zeros_h = jnp.zeros((H,), jnp.float32)
    z_block = jnp.zeros((H, 3 * H), jnp.float32)
    for layer_p in params["gru"]:
        dirs = []
        for d in ("f", "b"):
            w_ih = layer_p[f"{d}_w_ih"]               # (3H, D) torch layout (r,z,n)
            w_hh = layer_p[f"{d}_w_hh"]               # (3H, H)
            b_ih = layer_p[f"{d}_b_ih"]               # (3H,)
            b_hh = layer_p[f"{d}_b_hh"]               # (3H,)
            wih_c = w_ih.T                            # (D, 3H)
            whh_c = w_hh.T                            # (H, 3H)
            # fold b_ih (+ b_hr, b_hz) into the hoisted input projection;
            # only b_hn must stay on the hidden-side n gate.
            bx = b_ih + jnp.concatenate([b_hh[:2 * H], zeros_h])
            bh = jnp.concatenate([zeros_h, zeros_h, b_hh[2 * H:]])
            dirs.append((wih_c, whh_c, bx, bh))
        (wih_f, whh_f, bx_f, bh_f), (wih_b, whh_b, bx_b, bh_b) = dirs
        prep["gru"].append({
            "wih": jnp.concatenate([wih_f, wih_b], axis=1),              # (2H, 6H) f32
            "whh": jnp.concatenate(
                [jnp.concatenate([whh_f, z_block], axis=1),
                 jnp.concatenate([z_block, whh_b], axis=1)], axis=0
            ).astype(jnp.bfloat16),                                       # (2H, 6H) bf16
            "bx": jnp.concatenate([bx_f, bx_b]).reshape(1, 6 * H),
            "bh": jnp.concatenate([bh_f, bh_b]).reshape(1, 6 * H),
        })
    return prep


# ----------------------------------------------------------------------------
# Full forward
# ----------------------------------------------------------------------------
def res_altsm_features(x_ncl, prep):
    # x_ncl: (B, 16, L) PyTorch NCL layout.
    B = x_ncl.shape[0]
    L = x_ncl.shape[2]
    x = jnp.transpose(x_ncl, (0, 2, 1)).astype(jnp.float32)   # (B, L, 16)

    # Conv1 + ReLU + AvgPool (single fused kernel)
    Lo1 = (L + 2 * 2 - 6) // 2 + 1
    Lo2 = (Lo1 + 2 * 1 - 3) // 2 + 1
    patches1 = _im2col_1d(x, 6, 2, 2).reshape(B * Lo1, 6 * 16)
    p1_flat = conv_pool(patches1, prep["w1m"], prep["b1"], prep["pool"], B * Lo2)
    p1 = p1_flat.reshape(B, Lo2, 32)

    # ResidualBlock (single fused kernel); output rows are (time, padded-batch)
    # and feed the GRU stack directly with no further host glue.
    T = (Lo2 + 2 * 2 - 5) // 2 + 1
    patches2 = _to_tbp(_im2col_1d(p1, 3, 2, 2, dilation=2).reshape(B, T, 3 * 32), BP)
    patches4 = _to_tbp(p1[:, ::2, :], BP)
    h = residual_block(patches2, patches4, prep, T * BP)      # (T*BP, 64)

    # 5-layer bidirectional GRU (one fused fwd+bwd kernel per layer, h0 = 0)
    for layer in range(N_LAYERS):
        lw = prep["gru"][layer]
        h = bigru_layer(h, lw["wih"], lw["whh"], lw["bx"], lw["bh"], T, BP, HIDDEN)

    # attention + weighted sum + concat(last-step, sum) -> (B, 128)
    out = attention_head(h, prep["att_w1"], prep["att_b1"], prep["att_w2"],
                         prep["ind"], prep["ind_t"], T, BP)
    return out[:B, :]


# ----------------------------------------------------------------------------
# Deterministic parameter init (synthetic weights; torch-layout shapes)
# ----------------------------------------------------------------------------
def init_params(key):
    keys = iter(jax.random.split(key, 256))

    def rnd(shape, scale=0.1):
        return jax.random.normal(next(keys), shape, dtype=jnp.float32) * scale

    H = HIDDEN
    params = {
        "conv1_w": rnd((32, 16, 6)), "conv1_b": rnd((32,)),
        "conv2_w": rnd((64, 32, 3)), "conv2_b": rnd((64,)),
        "conv3_w": rnd((64, 64, 3)), "conv3_b": rnd((64,)),
        "conv4_w": rnd((64, 32, 1)), "conv4_b": rnd((64,)),
        # att_net: Linear(64,128)+ReLU, Linear(128,1,bias=False), softmax(dim=1)
        "att_w1": rnd((128, 64)), "att_b1": rnd((128,)), "att_w2": rnd((1, 128)),
        "gru": [],
    }
    for _ in range(N_LAYERS):
        layer = {}
        for d in ("f", "b"):
            layer[f"{d}_w_ih"] = rnd((3 * H, 2 * H))   # every layer sees 64 inputs
            layer[f"{d}_w_hh"] = rnd((3 * H, H))
            layer[f"{d}_b_ih"] = rnd((3 * H,))
            layer[f"{d}_b_hh"] = rnd((3 * H,))
        params["gru"].append(layer)
    return params


if __name__ == "__main__":
    key = jax.random.PRNGKey(0)
    k_param, k_input = jax.random.split(key)
    params = init_params(k_param)

    # Small input consistent with the module: Conv1d expects 16 input channels.
    # (B, C=16, L=64) -> Conv1 -> 32 -> AvgPool -> 16 -> ResidualBlock -> T=8.
    B, C, L = 2, 16, 64
    x = jax.random.normal(k_input, (B, C, L), dtype=jnp.float32)

    prep = prepare_params(params, B=B, L=L)
    fwd = jax.jit(res_altsm_features)
    out = fwd(x, prep)
    out = jax.block_until_ready(out)
    assert out.shape == (B, 128), out.shape
    print("KERNEL_OK")
</pallas_src>

<mosaic_0001>
module attributes {stable_mosaic.version = 11 : i64} {
  func.func @_conv_pool_kernel(%arg0: memref<64x96xf32, #tpu.memory_space<vmem>>, %arg1: memref<96x32xf32, #tpu.memory_space<vmem>>, %arg2: memref<1x32xf32, #tpu.memory_space<vmem>>, %arg3: memref<32x64xf32, #tpu.memory_space<vmem>>, %arg4: memref<32x32xf32, #tpu.memory_space<vmem>>) attributes {dimension_semantics = [], scalar_prefetch = 0 : i64, scratch_operands = 0 : i64, tpu.core_type = #tpu.core_type<tc>} {
    %c0 = arith.constant 0 : index
    %c0_0 = arith.constant 0 : index
    %0 = vector.load %arg0[%c0, %c0_0] : memref<64x96xf32, #tpu.memory_space<vmem>>, vector<64x96xf32>
    %c0_1 = arith.constant 0 : index
    %c0_2 = arith.constant 0 : index
    %1 = vector.load %arg1[%c0_1, %c0_2] : memref<96x32xf32, #tpu.memory_space<vmem>>, vector<96x32xf32>
    %cst = arith.constant dense<0.000000e+00> : vector<64x32xf32>
    %2 = tpu.matmul %0, %1, %cst {dimension_numbers = #tpu.dot_dimension_numbers<[1], [0], [0], [1], [0, 0, 1, 1], [], []>} : vector<64x96xf32>, vector<96x32xf32>, vector<64x32xf32> -> vector<64x32xf32>
    %c0_3 = arith.constant 0 : index
    %c0_4 = arith.constant 0 : index
    %3 = vector.load %arg2[%c0_3, %c0_4] : memref<1x32xf32, #tpu.memory_space<vmem>>, vector<1x32xf32>
    %4 = vector.broadcast %3 : vector<1x32xf32> to vector<64x32xf32>
    %5 = arith.addf %2, %4 : vector<64x32xf32>
    %cst_5 = arith.constant 0.000000e+00 : f32
    %6 = vector.broadcast %cst_5 : f32 to vector<64x32xf32>
    %7 = arith.maximumf %5, %6 : vector<64x32xf32>
    %c0_6 = arith.constant 0 : index
    %c0_7 = arith.constant 0 : index
    %8 = vector.load %arg3[%c0_6, %c0_7] : memref<32x64xf32, #tpu.memory_space<vmem>>, vector<32x64xf32>
    %cst_8 = arith.constant dense<0.000000e+00> : vector<32x32xf32>
    %9 = tpu.matmul %8, %7, %cst_8 {dimension_numbers = #tpu.dot_dimension_numbers<[1], [0], [0], [1], [0, 0, 1, 1], [], []>} : vector<32x64xf32>, vector<64x32xf32>, vector<32x32xf32> -> vector<32x32xf32>
    %c0_9 = arith.constant 0 : index
    %c0_10 = arith.constant 0 : index
    %10 = vector.load %arg4[%c0_9, %c0_10] : memref<32x32xf32, #tpu.memory_space<vmem>>, vector<32x32xf32>
    tpu.vector_store %arg4[%c0_9, %c0_10], %9 {strides = array<i32>} : memref<32x32xf32, #tpu.memory_space<vmem>>, vector<32x32xf32>,
    return
  }
}

module attributes {stable_mosaic.version = 11 : i64} {
  func.func @_residual_kernel(%arg0: memref<64x96xf32, #tpu.memory_space<vmem>>, %arg1: memref<64x32xf32, #tpu.memory_space<vmem>>, %arg2: memref<96x64xf32, #tpu.memory_space<vmem>>, %arg3: memref<1x64xf32, #tpu.memory_space<vmem>>, %arg4: memref<32x64xf32, #tpu.memory_space<vmem>>, %arg5: memref<1x64xf32, #tpu.memory_space<vmem>>, %arg6: memref<3x64x64xf32, #tpu.memory_space<vmem>>, %arg7: memref<1x64xf32, #tpu.memory_space<vmem>>, %arg8: memref<3x64x64xf32, #tpu.memory_space<vmem>>, %arg9: memref<64x64xf32, #tpu.memory_space<vmem>>) attributes {dimension_semantics = [], scalar_prefetch = 0 : i64, scratch_operands = 0 : i64, tpu.core_type = #tpu.core_type<tc>} {
    %c0 = arith.constant 0 : index
    %c0_0 = arith.constant 0 : index
    %0 = vector.load %arg0[%c0, %c0_0] : memref<64x96xf32, #tpu.memory_space<vmem>>, vector<64x96xf32>
    %c0_1 = arith.constant 0 : index
    %c0_2 = arith.constant 0 : index
    %1 = vector.load %arg2[%c0_1, %c0_2] : memref<96x64xf32, #tpu.memory_space<vmem>>, vector<96x64xf32>
    %cst = arith.constant dense<0.000000e+00> : vector<64x64xf32>
    %2 = tpu.matmul %0, %1, %cst {dimension_numbers = #tpu.dot_dimension_numbers<[1], [0], [0], [1], [0, 0, 1, 1], [], []>} : vector<64x96xf32>, vector<96x64xf32>, vector<64x64xf32> -> vector<64x64xf32>
    %c0_3 = arith.constant 0 : index
    %c0_4 = arith.constant 0 : index
    %3 = vector.load %arg3[%c0_3, %c0_4] : memref<1x64xf32, #tpu.memory_space<vmem>>, vector<1x64xf32>
    %4 = vector.broadcast %3 : vector<1x64xf32> to vector<64x64xf32>
    %5 = arith.addf %2, %4 : vector<64x64xf32>
    %cst_5 = arith.constant 0.000000e+00 : f32
    %6 = vector.broadcast %cst_5 : f32 to vector<64x64xf32>
    %7 = arith.maximumf %5, %6 : vector<64x64xf32>
    %c0_6 = arith.constant 0 : index
    %c0_7 = arith.constant 0 : index
    %8 = vector.load %arg1[%c0_6, %c0_7] : memref<64x32xf32, #tpu.memory_space<vmem>>, vector<64x32xf32>
    %c0_8 = arith.constant 0 : index
    %c0_9 = arith.constant 0 : index
    %9 = vector.load %arg4[%c0_8, %c0_9] : memref<32x64xf32, #tpu.memory_space<vmem>>, vector<32x64xf32>
    %cst_10 = arith.constant dense<0.000000e+00> : vector<64x64xf32>
    %10 = tpu.matmul %8, %9, %cst_10 {dimension_numbers = #tpu.dot_dimension_numbers<[1], [0], [0], [1], [0, 0, 1, 1], [], []>} : vector<64x32xf32>, vector<32x64xf32>, vector<64x64xf32> -> vector<64x64xf32>
    %c0_11 = arith.constant 0 : index
    %c0_12 = arith.constant 0 : index
    %11 = vector.load %arg5[%c0_11, %c0_12] : memref<1x64xf32, #tpu.memory_space<vmem>>, vector<1x64xf32>
    %12 = vector.broadcast %11 : vector<1x64xf32> to vector<64x64xf32>
    %13 = arith.addf %10, %12 : vector<64x64xf32>
    %cst_13 = arith.constant 0.000000e+00 : f32
    %14 = vector.broadcast %cst_13 : f32 to vector<64x64xf32>
    %15 = arith.maximumf %13, %14 : vector<64x64xf32>
    %c0_14 = arith.constant 0 : index
    %c0_15 = arith.constant 0 : index
    %c0_16 = arith.constant 0 : index
    %16 = vector.load %arg8[%c0_14, %c0_15, %c0_16] : memref<3x64x64xf32, #tpu.memory_space<vmem>>, vector<1x64x64xf32>
    %17 = vector.shape_cast %16 : vector<1x64x64xf32> to vector<64x64xf32>
    %cst_17 = arith.constant dense<0.000000e+00> : vector<64x64xf32>
    %18 = tpu.matmul %17, %7, %cst_17 {dimension_numbers = #tpu.dot_dimension_numbers<[1], [0], [0], [1], [0, 0, 1, 1], [], []>} : vector<64x64xf32>, vector<64x64xf32>, vector<64x64xf32> -> vector<64x64xf32>
    %c0_18 = arith.constant 0 : index
    %c0_19 = arith.constant 0 : index
    %c0_20 = arith.constant 0 : index
    %19 = vector.load %arg6[%c0_18, %c0_19, %c0_20] : memref<3x64x64xf32, #tpu.memory_space<vmem>>, vector<1x64x64xf32>
    %20 = vector.shape_cast %19 : vector<1x64x64xf32> to vector<64x64xf32>
    %cst_21 = arith.constant dense<0.000000e+00> : vector<64x64xf32>
    %21 = tpu.matmul %18, %20, %cst_21 {dimension_numbers = #tpu.dot_dimension_numbers<[1], [0], [0], [1], [0, 0, 1, 1], [], []>} : vector<64x64xf32>, vector<64x64xf32>, vector<64x64xf32> -> vector<64x64xf32>
    %c1 = arith.constant 1 : index
    %c0_22 = arith.constant 0 : index
    %c0_23 = arith.constant 0 : index
    %22 = vector.load %arg8[%c1, %c0_22, %c0_23] : memref<3x64x64xf32, #tpu.memory_space<vmem>>, vector<1x64x64xf32>
    %23 = vector.shape_cast %22 : vector<1x64x64xf32> to vector<64x64xf32>
    %cst_24 = arith.constant dense<0.000000e+00> : vector<64x64xf32>
    %24 = tpu.matmul %23, %7, %cst_24 {dimension_numbers = #tpu.dot_dimension_numbers<[1], [0], [0], [1], [0, 0, 1, 1], [], []>} : vector<64x64xf32>, vector<64x64xf32>, vector<64x64xf32> -> vector<64x64xf32>
    %c1_25 = arith.constant 1 : index
    %c0_26 = arith.constant 0 : index
    %c0_27 = arith.constant 0 : index
    %25 = vector.load %arg6[%c1_25, %c0_26, %c0_27] : memref<3x64x64xf32, #tpu.memory_space<vmem>>, vector<1x64x64xf32>
    %26 = vector.shape_cast %25 : vector<1x64x64xf32> to vector<64x64xf32>
    %cst_28 = arith.constant dense<0.000000e+00> : vector<64x64xf32>
    %27 = tpu.matmul %24, %26, %cst_28 {dimension_numbers = #tpu.dot_dimension_numbers<[1], [0], [0], [1], [0, 0, 1, 1], [], []>} : vector<64x64xf32>, vector<64x64xf32>, vector<64x64xf32> -> vector<64x64xf32>
    %28 = arith.addf %21, %27 : vector<64x64xf32>
    %c2 = arith.constant 2 : index
    %c0_29 = arith.constant 0 : index
    %c0_30 = arith.constant 0 : index
    %29 = vector.load %arg8[%c2, %c0_29, %c0_30] : memref<3x64x64xf32, #tpu.memory_space<vmem>>, vector<1x64x64xf32>
    %30 = vector.shape_cast %29 : vector<1x64x64xf32> to vector<64x64xf32>
    %cst_31 = arith.constant dense<0.000000e+00> : vector<64x64xf32>
    %31 = tpu.matmul %30, %7, %cst_31 {dimension_numbers = #tpu.dot_dimension_numbers<[1], [0], [0], [1], [0, 0, 1, 1], [], []>} : vector<64x64xf32>, vector<64x64xf32>, vector<64x64xf32> -> vector<64x64xf32>
    %c2_32 = arith.constant 2 : index
    %c0_33 = arith.constant 0 : index
    %c0_34 = arith.constant 0 : index
    %32 = vector.load %arg6[%c2_32, %c0_33, %c0_34] : memref<3x64x64xf32, #tpu.memory_space<vmem>>, vector<1x64x64xf32>
    %33 = vector.shape_cast %32 : vector<1x64x64xf32> to vector<64x64xf32>
    %cst_35 = arith.constant dense<0.000000e+00> : vector<64x64xf32>
    %34 = tpu.matmul %31, %33, %cst_35 {dimension_numbers = #tpu.dot_dimension_numbers<[1], [0], [0], [1], [0, 0, 1, 1], [], []>} : vector<64x64xf32>, vector<64x64xf32>, vector<64x64xf32> -> vector<64x64xf32>
    %35 = arith.addf %28, %34 : vector<64x64xf32>
    %c0_36 = arith.constant 0 : index
    %c0_37 = arith.constant 0 : index
    %36 = vector.load %arg7[%c0_36, %c0_37] : memref<1x64xf32, #tpu.memory_space<vmem>>, vector<1x64xf32>
    %37 = vector.broadcast %36 : vector<1x64xf32> to vector<64x64xf32>
    %38 = arith.addf %35, %37 : vector<64x64xf32>
    %cst_38 = arith.constant 0.000000e+00 : f32
    %39 = vector.broadcast %cst_38 : f32 to vector<64x64xf32>
    %40 = arith.maximumf %38, %39 : vector<64x64xf32>
    %41 = arith.addf %40, %15 : vector<64x64xf32>
    %c0_39 = arith.constant 0 : index
    %c0_40 = arith.constant 0 : index
    %42 = vector.load %arg9[%c0_39, %c0_40] : memref<64x64xf32, #tpu.memory_space<vmem>>, vector<64x64xf32>
    tpu.vector_store %arg9[%c0_39, %c0_40], %41 {strides = array<i32>} : memref<64x64xf32, #tpu.memory_space<vmem>>, vector<64x64xf32>,
    return
  }
}

module attributes {stable_mosaic.version = 11 : i64} {
  func.func @_bigru_layer_kernel(%arg0: memref<64x64xf32, #tpu.memory_space<vmem>>, %arg1: memref<64x192xf32, #tpu.memory_space<vmem>>, %arg2: memref<64x192xbf16, #tpu.memory_space<vmem>>, %arg3: memref<1x192xf32, #tpu.memory_space<vmem>>, %arg4: memref<1x192xf32, #tpu.memory_space<vmem>>, %arg5: memref<64x64xf32, #tpu.memory_space<vmem>>, %arg6: memref<64x192xf32, #tpu.memory_space<vmem>>) attributes {dimension_semantics = [], scalar_prefetch = 0 : i64, scratch_operands = 1 : i64, tpu.core_type = #tpu.core_type<tc>} {
    %c0 = arith.constant 0 : index
    %c0_0 = arith.constant 0 : index
    %0 = vector.load %arg0[%c0, %c0_0] : memref<64x64xf32, #tpu.memory_space<vmem>>, vector<64x64xf32>
    %c0_1 = arith.constant 0 : index
    %c0_2 = arith.constant 0 : index
    %1 = vector.load %arg1[%c0_1, %c0_2] : memref<64x192xf32, #tpu.memory_space<vmem>>, vector<64x192xf32>
    %cst = arith.constant dense<0.000000e+00> : vector<64x192xf32>
    %2 = tpu.matmul %0, %1, %cst {dimension_numbers = #tpu.dot_dimension_numbers<[1], [0], [0], [1], [0, 0, 1, 1], [], []>} : vector<64x64xf32>, vector<64x192xf32>, vector<64x192xf32> -> vector<64x192xf32>
    %c0_3 = arith.constant 0 : index
    %c0_4 = arith.constant 0 : index
    %3 = vector.load %arg3[%c0_3, %c0_4] : memref<1x192xf32, #tpu.memory_space<vmem>>, vector<1x192xf32>
    %4 = vector.broadcast %3 : vector<1x192xf32> to vector<64x192xf32>
    %5 = arith.addf %2, %4 : vector<64x192xf32>
    %c0_5 = arith.constant 0 : index
    %c0_6 = arith.constant 0 : index
    %6 = vector.load %arg6[%c0_5, %c0_6] : memref<64x192xf32, #tpu.memory_space<vmem>>, vector<64x192xf32>
    tpu.vector_store %arg6[%c0_5, %c0_6], %5 {strides = array<i32>} : memref<64x192xf32, #tpu.memory_space<vmem>>, vector<64x192xf32>,
    %c0_7 = arith.constant 0 : index
    %c0_8 = arith.constant 0 : index
    %7 = vector.load %arg4[%c0_7, %c0_8] : memref<1x192xf32, #tpu.memory_space<vmem>>, vector<1x192xf32>
    %cst_9 = arith.constant 0.000000e+00 : f32
    %8 = vector.broadcast %cst_9 : f32 to vector<8x32xf32>
    %cst_10 = arith.constant 0.000000e+00 : f32
    %9 = vector.broadcast %cst_10 : f32 to vector<8x32xf32>
    %10 = tpu.concatenate %8, %9 in 1 : vector<8x32xf32>, vector<8x32xf32> -> vector<8x64xf32>
    %11 = arith.truncf %10 : vector<8x64xf32> to vector<8x64xbf16>
    %c0_11 = arith.constant 0 : index
    %c0_12 = arith.constant 0 : index
    %12 = vector.load %arg2[%c0_11, %c0_12] : memref<64x192xbf16, #tpu.memory_space<vmem>>, vector<64x192xbf16>
    %cst_13 = arith.constant dense<0.000000e+00> : vector<8x192xf32>
    %13 = tpu.matmul %11, %12, %cst_13 {dimension_numbers = #tpu.dot_dimension_numbers<[1], [0], [0], [1], [0, 0, 1, 1], [], []>} : vector<8x64xbf16>, vector<64x192xbf16>, vector<8x192xf32> -> vector<8x192xf32>
    %14 = vector.broadcast %7 : vector<1x192xf32> to vector<8x192xf32>
    %15 = arith.addf %13, %14 : vector<8x192xf32>
    %c0_14 = arith.constant 0 : index
    %c0_15 = arith.constant 0 : index
    %16 = vector.load %arg6[%c0_14, %c0_15] : memref<64x192xf32, #tpu.memory_space<vmem>>, vector<8x192xf32>
    %c56 = arith.constant 56 : index
    %c0_16 = arith.constant 0 : index
    %17 = vector.load %arg6[%c56, %c0_16] : memref<64x192xf32, #tpu.memory_space<vmem>>, vector<8x192xf32>
    %18 = vector.extract_strided_slice %16 {offsets = [0, 0], sizes = [8, 32], strides = [1, 1]} : vector<8x192xf32> to vector<8x32xf32>
    %19 = vector.extract_strided_slice %15 {offsets = [0, 0], sizes = [8, 32], strides = [1, 1]} : vector<8x192xf32> to vector<8x32xf32>
    %20 = arith.addf %18, %19 : vector<8x32xf32>
    %21 = arith.negf %20 : vector<8x32xf32>
    %22 = math.exp %21 : vector<8x32xf32>
    %cst_17 = arith.constant 1.000000e+00 : f32
    %23 = vector.broadcast %cst_17 : f32 to vector<8x32xf32>
    %24 = arith.addf %23, %22 : vector<8x32xf32>
    %25 = arith.divf %23, %24 : vector<8x32xf32>
    %26 = vector.extract_strided_slice %16 {offsets = [0, 32], sizes = [8, 32], strides = [1, 1]} : vector<8x192xf32> to vector<8x32xf32>
    %27 = vector.extract_strided_slice %15 {offsets = [0, 32], sizes = [8, 32], strides = [1, 1]} : vector<8x192xf32> to vector<8x32xf32>
    %28 = arith.addf %26, %27 : vector<8x32xf32>
    %29 = arith.negf %28 : vector<8x32xf32>
    %30 = math.exp %29 : vector<8x32xf32>
    %cst_18 = arith.constant 1.000000e+00 : f32
    %31 = vector.broadcast %cst_18 : f32 to vector<8x32xf32>
    %32 = arith.addf %31, %30 : vector<8x32xf32>
    %33 = arith.divf %31, %32 : vector<8x32xf32>
    %34 = vector.extract_strided_slice %16 {offsets = [0, 64], sizes = [8, 32], strides = [1, 1]} : vector<8x192xf32> to vector<8x32xf32>
    %35 = vector.extract_strided_slice %15 {offsets = [0, 64], sizes = [8, 32], strides = [1, 1]} : vector<8x192xf32> to vector<8x32xf32>
    %36 = arith.mulf %25, %35 : vector<8x32xf32>
    %37 = arith.addf %34, %36 : vector<8x32xf32>
    %38 = math.tanh %37 : vector<8x32xf32>
    %cst_19 = arith.constant 1.000000e+00 : f32
    %39 = vector.broadcast %cst_19 : f32 to vector<8x32xf32>
    %40 = arith.subf %39, %33 : vector<8x32xf32>
    %41 = arith.mulf %40, %38 : vector<8x32xf32>
    %42 = arith.mulf %33, %8 : vector<8x32xf32>
    %43 = arith.addf %41, %42 : vector<8x32xf32>
    %44 = vector.extract_strided_slice %17 {offsets = [0, 96], sizes = [8, 32], strides = [1, 1]} : vector<8x192xf32> to vector<8x32xf32>
    %45 = vector.extract_strided_slice %15 {offsets = [0, 96], sizes = [8, 32], strides = [1, 1]} : vector<8x192xf32> to vector<8x32xf32>
    %46 = arith.addf %44, %45 : vector<8x32xf32>
    %47 = arith.negf %46 : vector<8x32xf32>
    %48 = math.exp %47 : vector<8x32xf32>
    %cst_20 = arith.constant 1.000000e+00 : f32
    %49 = vector.broadcast %cst_20 : f32 to vector<8x32xf32>
    %50 = arith.addf %49, %48 : vector<8x32xf32>
    %51 = arith.divf %49, %50 : vector<8x32xf32>
    %52 = vector.extract_strided_slice %17 {offsets = [0, 128], sizes = [8, 32], strides = [1, 1]} : vector<8x192xf32> to vector<8x32xf32>
    %53 = vector.extract_strided_slice %15 {offsets = [0, 128], sizes = [8, 32], strides = [1, 1]} : vector<8x192xf32> to vector<8x32xf32>
    %54 = arith.addf %52, %53 : vector<8x32xf32>
    %55 = arith.negf %54 : vector<8x32xf32>
    %56 = math.exp %55 : vector<8x32xf32>
    %cst_21 = arith.constant 1.000000e+00 : f32
    %57 = vector.broadcast %cst_21 : f32 to vector<8x32xf32>
    %58 = arith.addf %57, %56 : vector<8x32xf32>
    %59 = arith.divf %57, %58 : vector<8x32xf32>
    %60 = vector.extract_strided_slice %17 {offsets = [0, 160], sizes = [8, 32], strides = [1, 1]} : vector<8x192xf32> to vector<8x32xf32>
    %61 = vector.extract_strided_slice %15 {offsets = [0, 160], sizes = [8, 32], strides = [1, 1]} : vector<8x192xf32> to vector<8x32xf32>
    %62 = arith.mulf %51, %61 : vector<8x32xf32>
    %63 = arith.addf %60, %62 : vector<8x32xf32>
    %64 = math.tanh %63 : vector<8x32xf32>
    %cst_22 = arith.constant 1.000000e+00 : f32
    %65 = vector.broadcast %cst_22 : f32 to vector<8x32xf32>
    %66 = arith.subf %65, %59 : vector<8x32xf32>
    %67 = arith.mulf %66, %64 : vector<8x32xf32>
    %68 = arith.mulf %59, %9 : vector<8x32xf32>
    %69 = arith.addf %67, %68 : vector<8x32xf32>
    %c0_23 = arith.constant 0 : index
    %c0_24 = arith.constant 0 : index
    %70 = vector.load %arg5[%c0_23, %c0_24] : memref<64x64xf32, #tpu.memory_space<vmem>>, vector<8x32xf32>
    tpu.vector_store %arg5[%c0_23, %c0_24], %43 {strides = array<i32>} : memref<64x64xf32, #tpu.memory_space<vmem>>, vector<8x32xf32>,
    %c56_25 = arith.constant 56 : index
    %c32 = arith.constant 32 : index
    %71 = vector.load %arg5[%c56_25, %c32] : memref<64x64xf32, #tpu.memory_space<vmem>>, vector<8x32xf32>
    tpu.vector_store %arg5[%c56_25, %c32], %69 {strides = array<i32>} : memref<64x64xf32, #tpu.memory_space<vmem>>, vector<8x32xf32>,
    %72 = tpu.concatenate %43, %69 in 1 : vector<8x32xf32>, vector<8x32xf32> -> vector<8x64xf32>
    %73 = arith.truncf %72 : vector<8x64xf32> to vector<8x64xbf16>
    %c0_26 = arith.constant 0 : index
    %c0_27 = arith.constant 0 : index
    %74 = vector.load %arg2[%c0_26, %c0_27] : memref<64x192xbf16, #tpu.memory_space<vmem>>, vector<64x192xbf16>
    %cst_28 = arith.constant dense<0.000000e+00> : vector<8x192xf32>
    %75 = tpu.matmul %73, %74, %cst_28 {dimension_numbers = #tpu.dot_dimension_numbers<[1], [0], [0], [1], [0, 0, 1, 1], [], []>} : vector<8x64xbf16>, vector<64x192xbf16>, vector<8x192xf32> -> vector<8x192xf32>
    %76 = vector.broadcast %7 : vector<1x192xf32> to vector<8x192xf32>
    %77 = arith.addf %75, %76 : vector<8x192xf32>
    %c8 = arith.constant 8 : index
    %c0_29 = arith.constant 0 : index
    %78 = vector.load %arg6[%c8, %c0_29] : memref<64x192xf32, #tpu.memory_space<vmem>>, vector<8x192xf32>
    %c48 = arith.constant 48 : index
    %c0_30 = arith.constant 0 : index
    %79 = vector.load %arg6[%c48, %c0_30] : memref<64x192xf32, #tpu.memory_space<vmem>>, vector<8x192xf32>
    %80 = vector.extract_strided_slice %78 {offsets = [0, 0], sizes = [8, 32], strides = [1, 1]} : vector<8x192xf32> to vector<8x32xf32>
    %81 = vector.extract_strided_slice %77 {offsets = [0, 0], sizes = [8, 32], strides = [1, 1]} : vector<8x192xf32> to vector<8x32xf32>
    %82 = arith.addf %80, %81 : vector<8x32xf32>
    %83 = arith.negf %82 : vector<8x32xf32>
    %84 = math.exp %83 : vector<8x32xf32>
    %cst_31 = arith.constant 1.000000e+00 : f32
    %85 = vector.broadcast %cst_31 : f32 to vector<8x32xf32>
    %86 = arith.addf %85, %84 : vector<8x32xf32>
    %87 = arith.divf %85, %86 : vector<8x32xf32>
    %88 = vector.extract_strided_slice %78 {offsets = [0, 32], sizes = [8, 32], strides = [1, 1]} : vector<8x192xf32> to vector<8x32xf32>
    %89 = vector.extract_strided_slice %77 {offsets = [0, 32], sizes = [8, 32], strides = [1, 1]} : vector<8x192xf32> to vector<8x32xf32>
    %90 = arith.addf %88, %89 : vector<8x32xf32>
    %91 = arith.negf %90 : vector<8x32xf32>
    %92 = math.exp %91 : vector<8x32xf32>
    %cst_32 = arith.constant 1.000000e+00 : f32
    %93 = vector.broadcast %cst_32 : f32 to vector<8x32xf32>
    %94 = arith.addf %93, %92 : vector<8x32xf32>
    %95 = arith.divf %93, %94 : vector<8x32xf32>
    %96 = vector.extract_strided_slice %78 {offsets = [0, 64], sizes = [8, 32], strides = [1, 1]} : vector<8x192xf32> to vector<8x32xf32>
    %97 = vector.extract_strided_slice %77 {offsets = [0, 64], sizes = [8, 32], strides = [1, 1]} : vector<8x192xf32> to vector<8x32xf32>
    %98 = arith.mulf %87, %97 : vector<8x32xf32>
    %99 = arith.addf %96, %98 : vector<8x32xf32>
    %100 = math.tanh %99 : vector<8x32xf32>
    %cst_33 = arith.constant 1.000000e+00 : f32
    %101 = vector.broadcast %cst_33 : f32 to vector<8x32xf32>
    %102 = arith.subf %101, %95 : vector<8x32xf32>
    %103 = arith.mulf %102, %100 : vector<8x32xf32>
    %104 = arith.mulf %95, %43 : vector<8x32xf32>
    %105 = arith.addf %103, %104 : vector<8x32xf32>
    %106 = vector.extract_strided_slice %79 {offsets = [0, 96], sizes = [8, 32], strides = [1, 1]} : vector<8x192xf32> to vector<8x32xf32>
    %107 = vector.extract_strided_slice %77 {offsets = [0, 96], sizes = [8, 32], strides = [1, 1]} : vector<8x192xf32> to vector<8x32xf32>
    %108 = arith.addf %106, %107 : vector<8x32xf32>
    %109 = arith.negf %108 : vector<8x32xf32>
    %110 = math.exp %109 : vector<8x32xf32>
    %cst_34 = arith.constant 1.000000e+00 : f32
    %111 = vector.broadcast %cst_34 : f32 to vector<8x32xf32>
    %112 = arith.addf %111, %110 : vector<8x32xf32>
    %113 = arith.divf %111, %112 : vector<8x32xf32>
    %114 = vector.extract_strided_slice %79 {offsets = [0, 128], sizes = [8, 32], strides = [1, 1]} : vector<8x192xf32> to vector<8x32xf32>
    %115 = vector.extract_strided_slice %77 {offsets = [0, 128], sizes = [8, 32], strides = [1, 1]} : vector<8x192xf32> to vector<8x32xf32>
    %116 = arith.addf %114, %115 : vector<8x32xf32>
    %117 = arith.negf %116 : vector<8x32xf32>
    %118 = math.exp %117 : vector<8x32xf32>
    %cst_35 = arith.constant 1.000000e+00 : f32
    %119 = vector.broadcast %cst_35 : f32 to vector<8x32xf32>
    %120 = arith.addf %119, %118 : vector<8x32xf32>
    %121 = arith.divf %119, %120 : vector<8x32xf32>
    %122 = vector.extract_strided_slice %79 {offsets = [0, 160], sizes = [8, 32], strides = [1, 1]} : vector<8x192xf32> to vector<8x32xf32>
    %123 = vector.extract_strided_slice %77 {offsets = [0, 160], sizes = [8, 32], strides = [1, 1]} : vector<8x192xf32> to vector<8x32xf32>
    %124 = arith.mulf %113, %123 : vector<8x32xf32>
    %125 = arith.addf %122, %124 : vector<8x32xf32>
    %126 = math.tanh %125 : vector<8x32xf32>
    %cst_36 = arith.constant 1.000000e+00 : f32
    %127 = vector.broadcast %cst_36 : f32 to vector<8x32xf32>
    %128 = arith.subf %127, %121 : vector<8x32xf32>
    %129 = arith.mulf %128, %126 : vector<8x32xf32>
    %130 = arith.mulf %121, %69 : vector<8x32xf32>
    %131 = arith.addf %129, %130 : vector<8x32xf32>
    %c8_37 = arith.constant 8 : index
    %c0_38 = arith.constant 0 : index
    %132 = vector.load %arg5[%c8_37, %c0_38] : memref<64x64xf32, #tpu.memory_space<vmem>>, vector<8x32xf32>
    tpu.vector_store %arg5[%c8_37, %c0_38], %105 {strides = array<i32>} : memref<64x64xf32, #tpu.memory_space<vmem>>, vector<8x32xf32>,
    %c48_39 = arith.constant 48 : index
    %c32_40 = arith.constant 32 : index
    %133 = vector.load %arg5[%c48_39, %c32_40] : memref<64x64xf32, #tpu.memory_space<vmem>>, vector<8x32xf32>
    tpu.vector_store %arg5[%c48_39, %c32_40], %131 {strides = array<i32>} : memref<64x64xf32, #tpu.memory_space<vmem>>, vector<8x32xf32>,
    %134 = tpu.concatenate %105, %131 in 1 : vector<8x32xf32>, vector<8x32xf32> -> vector<8x64xf32>
    %135 = arith.truncf %134 : vector<8x64xf32> to vector<8x64xbf16>
    %c0_41 = arith.constant 0 : index
    %c0_42 = arith.constant 0 : index
    %136 = vector.load %arg2[%c0_41, %c0_42] : memref<64x192xbf16, #tpu.memory_space<vmem>>, vector<64x192xbf16>
    %cst_43 = arith.constant dense<0.000000e+00> : vector<8x192xf32>
    %137 = tpu.matmul %135, %136, %cst_43 {dimension_numbers = #tpu.dot_dimension_numbers<[1], [0], [0], [1], [0, 0, 1, 1], [], []>} : vector<8x64xbf16>, vector<64x192xbf16>, vector<8x192xf32> -> vector<8x192xf32>
    %138 = vector.broadcast %7 : vector<1x192xf32> to vector<8x192xf32>
    %139 = arith.addf %137, %138 : vector<8x192xf32>
    %c16 = arith.constant 16 : index
    %c0_44 = arith.constant 0 : index
    %140 = vector.load %arg6[%c16, %c0_44] : memref<64x192xf32, #tpu.memory_space<vmem>>, vector<8x192xf32>
    %c40 = arith.constant 40 : index
    %c0_45 = arith.constant 0 : index
    %141 = vector.load %arg6[%c40, %c0_45] : memref<64x192xf32, #tpu.memory_space<vmem>>, vector<8x192xf32>
    %142 = vector.extract_strided_slice %140 {offsets = [0, 0], sizes = [8, 32], strides = [1, 1]} : vector<8x192xf32> to vector<8x32xf32>
    %143 = vector.extract_strided_slice %139 {offsets = [0, 0], sizes = [8, 32], strides = [1, 1]} : vector<8x192xf32> to vector<8x32xf32>
    %144 = arith.addf %142, %143 : vector<8x32xf32>
    %145 = arith.negf %144 : vector<8x32xf32>
    %146 = math.exp %145 : vector<8x32xf32>
    %cst_46 = arith.constant 1.000000e+00 : f32
    %147 = vector.broadcast %cst_46 : f32 to vector<8x32xf32>
    %148 = arith.addf %147, %146 : vector<8x32xf32>
    %149 = arith.divf %147, %148 : vector<8x32xf32>
    %150 = vector.extract_strided_slice %140 {offsets = [0, 32], sizes = [8, 32], strides = [1, 1]} : vector<8x192xf32> to vector<8x32xf32>
    %151 = vector.extract_strided_slice %139 {offsets = [0, 32], sizes = [8, 32], strides = [1, 1]} : vector<8x192xf32> to vector<8x32xf32>
    %152 = arith.addf %150, %151 : vector<8x32xf32>
    %153 = arith.negf %152 : vector<8x32xf32>
    %154 = math.exp %153 : vector<8x32xf32>
    %cst_47 = arith.constant 1.000000e+00 : f32
    %155 = vector.broadcast %cst_47 : f32 to vector<8x32xf32>
    %156 = arith.addf %155, %154 : vector<8x32xf32>
    %157 = arith.divf %155, %156 : vector<8x32xf32>
    %158 = vector.extract_strided_slice %140 {offsets = [0, 64], sizes = [8, 32], strides = [1, 1]} : vector<8x192xf32> to vector<8x32xf32>
    %159 = vector.extract_strided_slice %139 {offsets = [0, 64], sizes = [8, 32], strides = [1, 1]} : vector<8x192xf32> to vector<8x32xf32>
    %160 = arith.mulf %149, %159 : vector<8x32xf32>
    %161 = arith.addf %158, %160 : vector<8x32xf32>
    %162 = math.tanh %161 : vector<8x32xf32>
    %cst_48 = arith.constant 1.000000e+00 : f32
    %163 = vector.broadcast %cst_48 : f32 to vector<8x32xf32>
    %164 = arith.subf %163, %157 : vector<8x32xf32>
    %165 = arith.mulf %164, %162 : vector<8x32xf32>
    %166 = arith.mulf %157, %105 : vector<8x32xf32>
    %167 = arith.addf %165, %166 : vector<8x32xf32>
    %168 = vector.extract_strided_slice %141 {offsets = [0, 96], sizes = [8, 32], strides = [1, 1]} : vector<8x192xf32> to vector<8x32xf32>
    %169 = vector.extract_strided_slice %139 {offsets = [0, 96], sizes = [8, 32], strides = [1, 1]} : vector<8x192xf32> to vector<8x32xf32>
    %170 = arith.addf %168, %169 : vector<8x32xf32>
    %171 = arith.negf %170 : vector<8x32xf32>
    %172 = math.exp %171 : vector<8x32xf32>
    %cst_49 = arith.constant 1.000000e+00 : f32
    %173 = vector.broadcast %cst_49 : f32 to vector<8x32xf32>
    %174 = arith.addf %173, %172 : vector<8x32xf32>
    %175 = arith.divf %173, %174 : vector<8x32xf32>
    %176 = vector.extract_strided_slice %141 {offsets = [0, 128], sizes = [8, 32], strides = [1, 1]} : vector<8x192xf32> to vector<8x32xf32>
    %177 = vector.extract_strided_slice %139 {offsets = [0, 128], sizes = [8, 32], strides = [1, 1]} : vector<8x192xf32> to vector<8x32xf32>
    %178 = arith.addf %176, %177 : vector<8x32xf32>
    %179 = arith.negf %178 : vector<8x32xf32>
    %180 = math.exp %179 : vector<8x32xf32>
    %cst_50 = arith.constant 1.000000e+00 : f32
    %181 = vector.broadcast %cst_50 : f32 to vector<8x32xf32>
    %182 = arith.addf %181, %180 : vector<8x32xf32>
    %183 = arith.divf %181, %182 : vector<8x32xf32>
    %184 = vector.extract_strided_slice %141 {offsets = [0, 160], sizes = [8, 32], strides = [1, 1]} : vector<8x192xf32> to vector<8x32xf32>
    %185 = vector.extract_strided_slice %139 {offsets = [0, 160], sizes = [8, 32], strides = [1, 1]} : vector<8x192xf32> to vector<8x32xf32>
    %186 = arith.mulf %175, %185 : vector<8x32xf32>
    %187 = arith.addf %184, %186 : vector<8x32xf32>
    %188 = math.tanh %187 : vector<8x32xf32>
    %cst_51 = arith.constant 1.000000e+00 : f32
    %189 = vector.broadcast %cst_51 : f32 to vector<8x32xf32>
    %190 = arith.subf %189, %183 : vector<8x32xf32>
    %191 = arith.mulf %190, %188 : vector<8x32xf32>
    %192 = arith.mulf %183, %131 : vector<8x32xf32>
    %193 = arith.addf %191, %192 : vector<8x32xf32>
    %c16_52 = arith.constant 16 : index
    %c0_53 = arith.constant 0 : index
    %194 = vector.load %arg5[%c16_52, %c0_53] : memref<64x64xf32, #tpu.memory_space<vmem>>, vector<8x32xf32>
    tpu.vector_store %arg5[%c16_52, %c0_53], %167 {strides = array<i32>} : memref<64x64xf32, #tpu.memory_space<vmem>>, vector<8x32xf32>,
    %c40_54 = arith.constant 40 : index
    %c32_55 = arith.constant 32 : index
    %195 = vector.load %arg5[%c40_54, %c32_55] : memref<64x64xf32, #tpu.memory_space<vmem>>, vector<8x32xf32>
    tpu.vector_store %arg5[%c40_54, %c32_55], %193 {strides = array<i32>} : memref<64x64xf32, #tpu.memory_space<vmem>>, vector<8x32xf32>,
    %196 = tpu.concatenate %167, %193 in 1 : vector<8x32xf32>, vector<8x32xf32> -> vector<8x64xf32>
    %197 = arith.truncf %196 : vector<8x64xf32> to vector<8x64xbf16>
    %c0_56 = arith.constant 0 : index
    %c0_57 = arith.constant 0 : index
    %198 = vector.load %arg2[%c0_56, %c0_57] : memref<64x192xbf16, #tpu.memory_space<vmem>>, vector<64x192xbf16>
    %cst_58 = arith.constant dense<0.000000e+00> : vector<8x192xf32>
    %199 = tpu.matmul %197, %198, %cst_58 {dimension_numbers = #tpu.dot_dimension_numbers<[1], [0], [0], [1], [0, 0, 1, 1], [], []>} : vector<8x64xbf16>, vector<64x192xbf16>, vector<8x192xf32> -> vector<8x192xf32>
    %200 = vector.broadcast %7 : vector<1x192xf32> to vector<8x192xf32>
    %201 = arith.addf %199, %200 : vector<8x192xf32>
    %c24 = arith.constant 24 : index
    %c0_59 = arith.constant 0 : index
    %202 = vector.load %arg6[%c24, %c0_59] : memref<64x192xf32, #tpu.memory_space<vmem>>, vector<8x192xf32>
    %c32_60 = arith.constant 32 : index
    %c0_61 = arith.constant 0 : index
    %203 = vector.load %arg6[%c32_60, %c0_61] : memref<64x192xf32, #tpu.memory_space<vmem>>, vector<8x192xf32>
    %204 = vector.extract_strided_slice %202 {offsets = [0, 0], sizes = [8, 32], strides = [1, 1]} : vector<8x192xf32> to vector<8x32xf32>
    %205 = vector.extract_strided_slice %201 {offsets = [0, 0], sizes = [8, 32], strides = [1, 1]} : vector<8x192xf32> to vector<8x32xf32>
    %206 = arith.addf %204, %205 : vector<8x32xf32>
    %207 = arith.negf %206 : vector<8x32xf32>
    %208 = math.exp %207 : vector<8x32xf32>
    %cst_62 = arith.constant 1.000000e+00 : f32
    %209 = vector.broadcast %cst_62 : f32 to vector<8x32xf32>
    %210 = arith.addf %209, %208 : vector<8x32xf32>
    %211 = arith.divf %209, %210 : vector<8x32xf32>
    %212 = vector.extract_strided_slice %202 {offsets = [0, 32], sizes = [8, 32], strides = [1, 1]} : vector<8x192xf32> to vector<8x32xf32>
    %213 = vector.extract_strided_slice %201 {offsets = [0, 32], sizes = [8, 32], strides = [1, 1]} : vector<8x192xf32> to vector<8x32xf32>
    %214 = arith.addf %212, %213 : vector<8x32xf32>
    %215 = arith.negf %214 : vector<8x32xf32>
    %216 = math.exp %215 : vector<8x32xf32>
    %cst_63 = arith.constant 1.000000e+00 : f32
    %217 = vector.broadcast %cst_63 : f32 to vector<8x32xf32>
    %218 = arith.addf %217, %216 : vector<8x32xf32>
    %219 = arith.divf %217, %218 : vector<8x32xf32>
    %220 = vector.extract_strided_slice %202 {offsets = [0, 64], sizes = [8, 32], strides = [1, 1]} : vector<8x192xf32> to vector<8x32xf32>
    %221 = vector.extract_strided_slice %201 {offsets = [0, 64], sizes = [8, 32], strides = [1, 1]} : vector<8x192xf32> to vector<8x32xf32>
    %222 = arith.mulf %211, %221 : vector<8x32xf32>
    %223 = arith.addf %220, %222 : vector<8x32xf32>
    %224 = math.tanh %223 : vector<8x32xf32>
    %cst_64 = arith.constant 1.000000e+00 : f32
    %225 = vector.broadcast %cst_64 : f32 to vector<8x32xf32>
    %226 = arith.subf %225, %219 : vector<8x32xf32>
    %227 = arith.mulf %226, %224 : vector<8x32xf32>
    %228 = arith.mulf %219, %167 : vector<8x32xf32>
    %229 = arith.addf %227, %228 : vector<8x32xf32>
    %230 = vector.extract_strided_slice %203 {offsets = [0, 96], sizes = [8, 32], strides = [1, 1]} : vector<8x192xf32> to vector<8x32xf32>
    %231 = vector.extract_strided_slice %201 {offsets = [0, 96], sizes = [8, 32], strides = [1, 1]} : vector<8x192xf32> to vector<8x32xf32>
    %232 = arith.addf %230, %231 : vector<8x32xf32>
    %233 = arith.negf %232 : vector<8x32xf32>
    %234 = math.exp %233 : vector<8x32xf32>
    %cst_65 = arith.constant 1.000000e+00 : f32
    %235 = vector.broadcast %cst_65 : f32 to vector<8x32xf32>
    %236 = arith.addf %235, %234 : vector<8x32xf32>
    %237 = arith.divf %235, %236 : vector<8x32xf32>
    %238 = vector.extract_strided_slice %203 {offsets = [0, 128], sizes = [8, 32], strides = [1, 1]} : vector<8x192xf32> to vector<8x32xf32>
    %239 = vector.extract_strided_slice %201 {offsets = [0, 128], sizes = [8, 32], strides = [1, 1]} : vector<8x192xf32> to vector<8x32xf32>
    %240 = arith.addf %238, %239 : vector<8x32xf32>
    %241 = arith.negf %240 : vector<8x32xf32>
    %242 = math.exp %241 : vector<8x32xf32>
    %cst_66 = arith.constant 1.000000e+00 : f32
    %243 = vector.broadcast %cst_66 : f32 to vector<8x32xf32>
    %244 = arith.addf %243, %242 : vector<8x32xf32>
    %245 = arith.divf %243, %244 : vector<8x32xf32>
    %246 = vector.extract_strided_slice %203 {offsets = [0, 160], sizes = [8, 32], strides = [1, 1]} : vector<8x192xf32> to vector<8x32xf32>
    %247 = vector.extract_strided_slice %201 {offsets = [0, 160], sizes = [8, 32], strides = [1, 1]} : vector<8x192xf32> to vector<8x32xf32>
    %248 = arith.mulf %237, %247 : vector<8x32xf32>
    %249 = arith.addf %246, %248 : vector<8x32xf32>
    %250 = math.tanh %249 : vector<8x32xf32>
    %cst_67 = arith.constant 1.000000e+00 : f32
    %251 = vector.broadcast %cst_67 : f32 to vector<8x32xf32>
    %252 = arith.subf %251, %245 : vector<8x32xf32>
    %253 = arith.mulf %252, %250 : vector<8x32xf32>
    %254 = arith.mulf %245, %193 : vector<8x32xf32>
    %255 = arith.addf %253, %254 : vector<8x32xf32>
    %c24_68 = arith.constant 24 : index
    %c0_69 = arith.constant 0 : index
    %256 = vector.load %arg5[%c24_68, %c0_69] : memref<64x64xf32, #tpu.memory_space<vmem>>, vector<8x32xf32>
    tpu.vector_store %arg5[%c24_68, %c0_69], %229 {strides = array<i32>} : memref<64x64xf32, #tpu.memory_space<vmem>>, vector<8x32xf32>,
    %c32_70 = arith.constant 32 : index
    %c32_71 = arith.constant 32 : index
    %257 = vector.load %arg5[%c32_70, %c32_71] : memref<64x64xf32, #tpu.memory_space<vmem>>, vector<8x32xf32>
    tpu.vector_store %arg5[%c32_70, %c32_71], %255 {strides = array<i32>} : memref<64x64xf32, #tpu.memory_space<vmem>>, vector<8x32xf32>,
    %258 = tpu.concatenate %229, %255 in 1 : vector<8x32xf32>, vector<8x32xf32> -> vector<8x64xf32>
    %259 = arith.truncf %258 : vector<8x64xf32> to vector<8x64xbf16>
    %c0_72 = arith.constant 0 : index
    %c0_73 = arith.constant 0 : index
    %260 = vector.load %arg2[%c0_72, %c0_73] : memref<64x192xbf16, #tpu.memory_space<vmem>>, vector<64x192xbf16>
    %cst_74 = arith.constant dense<0.000000e+00> : vector<8x192xf32>
    %261 = tpu.matmul %259, %260, %cst_74 {dimension_numbers = #tpu.dot_dimension_numbers<[1], [0], [0], [1], [0, 0, 1, 1], [], []>} : vector<8x64xbf16>, vector<64x192xbf16>, vector<8x192xf32> -> vector<8x192xf32>
    %262 = vector.broadcast %7 : vector<1x192xf32> to vector<8x192xf32>
    %263 = arith.addf %261, %262 : vector<8x192xf32>
    %c32_75 = arith.constant 32 : index
    %c0_76 = arith.constant 0 : index
    %264 = vector.load %arg6[%c32_75, %c0_76] : memref<64x192xf32, #tpu.memory_space<vmem>>, vector<8x192xf32>
    %c24_77 = arith.constant 24 : index
    %c0_78 = arith.constant 0 : index
    %265 = vector.load %arg6[%c24_77, %c0_78] : memref<64x192xf32, #tpu.memory_space<vmem>>, vector<8x192xf32>
    %266 = vector.extract_strided_slice %264 {offsets = [0, 0], sizes = [8, 32], strides = [1, 1]} : vector<8x192xf32> to vector<8x32xf32>
    %267 = vector.extract_strided_slice %263 {offsets = [0, 0], sizes = [8, 32], strides = [1, 1]} : vector<8x192xf32> to vector<8x32xf32>
    %268 = arith.addf %266, %267 : vector<8x32xf32>
    %269 = arith.negf %268 : vector<8x32xf32>
    %270 = math.exp %269 : vector<8x32xf32>
    %cst_79 = arith.constant 1.000000e+00 : f32
    %271 = vector.broadcast %cst_79 : f32 to vector<8x32xf32>
    %272 = arith.addf %271, %270 : vector<8x32xf32>
    %273 = arith.divf %271, %272 : vector<8x32xf32>
    %274 = vector.extract_strided_slice %264 {offsets = [0, 32], sizes = [8, 32], strides = [1, 1]} : vector<8x192xf32> to vector<8x32xf32>
    %275 = vector.extract_strided_slice %263 {offsets = [0, 32], sizes = [8, 32], strides = [1, 1]} : vector<8x192xf32> to vector<8x32xf32>
    %276 = arith.addf %274, %275 : vector<8x32xf32>
    %277 = arith.negf %276 : vector<8x32xf32>
    %278 = math.exp %277 : vector<8x32xf32>
    %cst_80 = arith.constant 1.000000e+00 : f32
    %279 = vector.broadcast %cst_80 : f32 to vector<8x32xf32>
    %280 = arith.addf %279, %278 : vector<8x32xf32>
    %281 = arith.divf %279, %280 : vector<8x32xf32>
    %282 = vector.extract_strided_slice %264 {offsets = [0, 64], sizes = [8, 32], strides = [1, 1]} : vector<8x192xf32> to vector<8x32xf32>
    %283 = vector.extract_strided_slice %263 {offsets = [0, 64], sizes = [8, 32], strides = [1, 1]} : vector<8x192xf32> to vector<8x32xf32>
    %284 = arith.mulf %273, %283 : vector<8x32xf32>
    %285 = arith.addf %282, %284 : vector<8x32xf32>
    %286 = math.tanh %285 : vector<8x32xf32>
    %cst_81 = arith.constant 1.000000e+00 : f32
    %287 = vector.broadcast %cst_81 : f32 to vector<8x32xf32>
    %288 = arith.subf %287, %281 : vector<8x32xf32>
    %289 = arith.mulf %288, %286 : vector<8x32xf32>
    %290 = arith.mulf %281, %229 : vector<8x32xf32>
    %291 = arith.addf %289, %290 : vector<8x32xf32>
    %292 = vector.extract_strided_slice %265 {offsets = [0, 96], sizes = [8, 32], strides = [1, 1]} : vector<8x192xf32> to vector<8x32xf32>
    %293 = vector.extract_strided_slice %263 {offsets = [0, 96], sizes = [8, 32], strides = [1, 1]} : vector<8x192xf32> to vector<8x32xf32>
    %294 = arith.addf %292, %293 : vector<8x32xf32>
    %295 = arith.negf %294 : vector<8x32xf32>
    %296 = math.exp %295 : vector<8x32xf32>
    %cst_82 = arith.constant 1.000000e+00 : f32
    %297 = vector.broadcast %cst_82 : f32 to vector<8x32xf32>
    %298 = arith.addf %297, %296 : vector<8x32xf32>
    %299 = arith.divf %297, %298 : vector<8x32xf32>
    %300 = vector.extract_strided_slice %265 {offsets = [0, 128], sizes = [8, 32], strides = [1, 1]} : vector<8x192xf32> to vector<8x32xf32>
    %301 = vector.extract_strided_slice %263 {offsets = [0, 128], sizes = [8, 32], strides = [1, 1]} : vector<8x192xf32> to vector<8x32xf32>
    %302 = arith.addf %300, %301 : vector<8x32xf32>
    %303 = arith.negf %302 : vector<8x32xf32>
    %304 = math.exp %303 : vector<8x32xf32>
    %cst_83 = arith.constant 1.000000e+00 : f32
    %305 = vector.broadcast %cst_83 : f32 to vector<8x32xf32>
    %306 = arith.addf %305, %304 : vector<8x32xf32>
    %307 = arith.divf %305, %306 : vector<8x32xf32>
    %308 = vector.extract_strided_slice %265 {offsets = [0, 160], sizes = [8, 32], strides = [1, 1]} : vector<8x192xf32> to vector<8x32xf32>
    %309 = vector.extract_strided_slice %263 {offsets = [0, 160], sizes = [8, 32], strides = [1, 1]} : vector<8x192xf32> to vector<8x32xf32>
    %310 = arith.mulf %299, %309 : vector<8x32xf32>
    %311 = arith.addf %308, %310 : vector<8x32xf32>
    %312 = math.tanh %311 : vector<8x32xf32>
    %cst_84 = arith.constant 1.000000e+00 : f32
    %313 = vector.broadcast %cst_84 : f32 to vector<8x32xf32>
    %314 = arith.subf %313, %307 : vector<8x32xf32>
    %315 = arith.mulf %314, %312 : vector<8x32xf32>
    %316 = arith.mulf %307, %255 : vector<8x32xf32>
    %317 = arith.addf %315, %316 : vector<8x32xf32>
    %c32_85 = arith.constant 32 : index
    %c0_86 = arith.constant 0 : index
    %318 = vector.load %arg5[%c32_85, %c0_86] : memref<64x64xf32, #tpu.memory_space<vmem>>, vector<8x32xf32>
    tpu.vector_store %arg5[%c32_85, %c0_86], %291 {strides = array<i32>} : memref<64x64xf32, #tpu.memory_space<vmem>>, vector<8x32xf32>,
    %c24_87 = arith.constant 24 : index
    %c32_88 = arith.constant 32 : index
    %319 = vector.load %arg5[%c24_87, %c32_88] : memref<64x64xf32, #tpu.memory_space<vmem>>, vector<8x32xf32>
    tpu.vector_store %arg5[%c24_87, %c32_88], %317 {strides = array<i32>} : memref<64x64xf32, #tpu.memory_space<vmem>>, vector<8x32xf32>,
    %320 = tpu.concatenate %291, %317 in 1 : vector<8x32xf32>, vector<8x32xf32> -> vector<8x64xf32>
    %321 = arith.truncf %320 : vector<8x64xf32> to vector<8x64xbf16>
    %c0_89 = arith.constant 0 : index
    %c0_90 = arith.constant 0 : index
    %322 = vector.load %arg2[%c0_89, %c0_90] : memref<64x192xbf16, #tpu.memory_space<vmem>>, vector<64x192xbf16>
    %cst_91 = arith.constant dense<0.000000e+00> : vector<8x192xf32>
    %323 = tpu.matmul %321, %322, %cst_91 {dimension_numbers = #tpu.dot_dimension_numbers<[1], [0], [0], [1], [0, 0, 1, 1], [], []>} : vector<8x64xbf16>, vector<64x192xbf16>, vector<8x192xf32> -> vector<8x192xf32>
    %324 = vector.broadcast %7 : vector<1x192xf32> to vector<8x192xf32>
    %325 = arith.addf %323, %324 : vector<8x192xf32>
    %c40_92 = arith.constant 40 : index
    %c0_93 = arith.constant 0 : index
    %326 = vector.load %arg6[%c40_92, %c0_93] : memref<64x192xf32, #tpu.memory_space<vmem>>, vector<8x192xf32>
    %c16_94 = arith.constant 16 : index
    %c0_95 = arith.constant 0 : index
    %327 = vector.load %arg6[%c16_94, %c0_95] : memref<64x192xf32, #tpu.memory_space<vmem>>, vector<8x192xf32>
    %328 = vector.extract_strided_slice %326 {offsets = [0, 0], sizes = [8, 32], strides = [1, 1]} : vector<8x192xf32> to vector<8x32xf32>
    %329 = vector.extract_strided_slice %325 {offsets = [0, 0], sizes = [8, 32], strides = [1, 1]} : vector<8x192xf32> to vector<8x32xf32>
    %330 = arith.addf %328, %329 : vector<8x32xf32>
    %331 = arith.negf %330 : vector<8x32xf32>
    %332 = math.exp %331 : vector<8x32xf32>
    %cst_96 = arith.constant 1.000000e+00 : f32
    %333 = vector.broadcast %cst_96 : f32 to vector<8x32xf32>
    %334 = arith.addf %333, %332 : vector<8x32xf32>
    %335 = arith.divf %333, %334 : vector<8x32xf32>
    %336 = vector.extract_strided_slice %326 {offsets = [0, 32], sizes = [8, 32], strides = [1, 1]} : vector<8x192xf32> to vector<8x32xf32>
    %337 = vector.extract_strided_slice %325 {offsets = [0, 32], sizes = [8, 32], strides = [1, 1]} : vector<8x192xf32> to vector<8x32xf32>
    %338 = arith.addf %336, %337 : vector<8x32xf32>
    %339 = arith.negf %338 : vector<8x32xf32>
    %340 = math.exp %339 : vector<8x32xf32>
    %cst_97 = arith.constant 1.000000e+00 : f32
    %341 = vector.broadcast %cst_97 : f32 to vector<8x32xf32>
    %342 = arith.addf %341, %340 : vector<8x32xf32>
    %343 = arith.divf %341, %342 : vector<8x32xf32>
    %344 = vector.extract_strided_slice %326 {offsets = [0, 64], sizes = [8, 32], strides = [1, 1]} : vector<8x192xf32> to vector<8x32xf32>
    %345 = vector.extract_strided_slice %325 {offsets = [0, 64], sizes = [8, 32], strides = [1, 1]} : vector<8x192xf32> to vector<8x32xf32>
    %346 = arith.mulf %335, %345 : vector<8x32xf32>
    %347 = arith.addf %344, %346 : vector<8x32xf32>
    %348 = math.tanh %347 : vector<8x32xf32>
    %cst_98 = arith.constant 1.000000e+00 : f32
    %349 = vector.broadcast %cst_98 : f32 to vector<8x32xf32>
    %350 = arith.subf %349, %343 : vector<8x32xf32>
    %351 = arith.mulf %350, %348 : vector<8x32xf32>
    %352 = arith.mulf %343, %291 : vector<8x32xf32>
    %353 = arith.addf %351, %352 : vector<8x32xf32>
    %354 = vector.extract_strided_slice %327 {offsets = [0, 96], sizes = [8, 32], strides = [1, 1]} : vector<8x192xf32> to vector<8x32xf32>
    %355 = vector.extract_strided_slice %325 {offsets = [0, 96], sizes = [8, 32], strides = [1, 1]} : vector<8x192xf32> to vector<8x32xf32>
    %356 = arith.addf %354, %355 : vector<8x32xf32>
    %357 = arith.negf %356 : vector<8x32xf32>
    %358 = math.exp %357 : vector<8x32xf32>
    %cst_99 = arith.constant 1.000000e+00 : f32
    %359 = vector.broadcast %cst_99 : f32 to vector<8x32xf32>
    %360 = arith.addf %359, %358 : vector<8x32xf32>
    %361 = arith.divf %359, %360 : vector<8x32xf32>
    %362 = vector.extract_strided_slice %327 {offsets = [0, 128], sizes = [8, 32], strides = [1, 1]} : vector<8x192xf32> to vector<8x32xf32>
    %363 = vector.extract_strided_slice %325 {offsets = [0, 128], sizes = [8, 32], strides = [1, 1]} : vector<8x192xf32> to vector<8x32xf32>
    %364 = arith.addf %362, %363 : vector<8x32xf32>
    %365 = arith.negf %364 : vector<8x32xf32>
    %366 = math.exp %365 : vector<8x32xf32>
    %cst_100 = arith.constant 1.000000e+00 : f32
    %367 = vector.broadcast %cst_100 : f32 to vector<8x32xf32>
    %368 = arith.addf %367, %366 : vector<8x32xf32>
    %369 = arith.divf %367, %368 : vector<8x32xf32>
    %370 = vector.extract_strided_slice %327 {offsets = [0, 160], sizes = [8, 32], strides = [1, 1]} : vector<8x192xf32> to vector<8x32xf32>
    %371 = vector.extract_strided_slice %325 {offsets = [0, 160], sizes = [8, 32], strides = [1, 1]} : vector<8x192xf32> to vector<8x32xf32>
    %372 = arith.mulf %361, %371 : vector<8x32xf32>
    %373 = arith.addf %370, %372 : vector<8x32xf32>
    %374 = math.tanh %373 : vector<8x32xf32>
    %cst_101 = arith.constant 1.000000e+00 : f32
    %375 = vector.broadcast %cst_101 : f32 to vector<8x32xf32>
    %376 = arith.subf %375, %369 : vector<8x32xf32>
    %377 = arith.mulf %376, %374 : vector<8x32xf32>
    %378 = arith.mulf %369, %317 : vector<8x32xf32>
    %379 = arith.addf %377, %378 : vector<8x32xf32>
    %c40_102 = arith.constant 40 : index
    %c0_103 = arith.constant 0 : index
    %380 = vector.load %arg5[%c40_102, %c0_103] : memref<64x64xf32, #tpu.memory_space<vmem>>, vector<8x32xf32>
    tpu.vector_store %arg5[%c40_102, %c0_103], %353 {strides = array<i32>} : memref<64x64xf32, #tpu.memory_space<vmem>>, vector<8x32xf32>,
    %c16_104 = arith.constant 16 : index
    %c32_105 = arith.constant 32 : index
    %381 = vector.load %arg5[%c16_104, %c32_105] : memref<64x64xf32, #tpu.memory_space<vmem>>, vector<8x32xf32>
    tpu.vector_store %arg5[%c16_104, %c32_105], %379 {strides = array<i32>} : memref<64x64xf32, #tpu.memory_space<vmem>>, vector<8x32xf32>,
    %382 = tpu.concatenate %353, %379 in 1 : vector<8x32xf32>, vector<8x32xf32> -> vector<8x64xf32>
    %383 = arith.truncf %382 : vector<8x64xf32> to vector<8x64xbf16>
    %c0_106 = arith.constant 0 : index
    %c0_107 = arith.constant 0 : index
    %384 = vector.load %arg2[%c0_106, %c0_107] : memref<64x192xbf16, #tpu.memory_space<vmem>>, vector<64x192xbf16>
    %cst_108 = arith.constant dense<0.000000e+00> : vector<8x192xf32>
    %385 = tpu.matmul %383, %384, %cst_108 {dimension_numbers = #tpu.dot_dimension_numbers<[1], [0], [0], [1], [0, 0, 1, 1], [], []>} : vector<8x64xbf16>, vector<64x192xbf16>, vector<8x192xf32> -> vector<8x192xf32>
    %386 = vector.broadcast %7 : vector<1x192xf32> to vector<8x192xf32>
    %387 = arith.addf %385, %386 : vector<8x192xf32>
    %c48_109 = arith.constant 48 : index
    %c0_110 = arith.constant 0 : index
    %388 = vector.load %arg6[%c48_109, %c0_110] : memref<64x192xf32, #tpu.memory_space<vmem>>, vector<8x192xf32>
    %c8_111 = arith.constant 8 : index
    %c0_112 = arith.constant 0 : index
    %389 = vector.load %arg6[%c8_111, %c0_112] : memref<64x192xf32, #tpu.memory_space<vmem>>, vector<8x192xf32>
    %390 = vector.extract_strided_slice %388 {offsets = [0, 0], sizes = [8, 32], strides = [1, 1]} : vector<8x192xf32> to vector<8x32xf32>
    %391 = vector.extract_strided_slice %387 {offsets = [0, 0], sizes = [8, 32], strides = [1, 1]} : vector<8x192xf32> to vector<8x32xf32>
    %392 = arith.addf %390, %391 : vector<8x32xf32>
    %393 = arith.negf %392 : vector<8x32xf32>
    %394 = math.exp %393 : vector<8x32xf32>
    %cst_113 = arith.constant 1.000000e+00 : f32
    %395 = vector.broadcast %cst_113 : f32 to vector<8x32xf32>
    %396 = arith.addf %395, %394 : vector<8x32xf32>
    %397 = arith.divf %395, %396 : vector<8x32xf32>
    %398 = vector.extract_strided_slice %388 {offsets = [0, 32], sizes = [8, 32], strides = [1, 1]} : vector<8x192xf32> to vector<8x32xf32>
    %399 = vector.extract_strided_slice %387 {offsets = [0, 32], sizes = [8, 32], strides = [1, 1]} : vector<8x192xf32> to vector<8x32xf32>
    %400 = arith.addf %398, %399 : vector<8x32xf32>
    %401 = arith.negf %400 : vector<8x32xf32>
    %402 = math.exp %401 : vector<8x32xf32>
    %cst_114 = arith.constant 1.000000e+00 : f32
    %403 = vector.broadcast %cst_114 : f32 to vector<8x32xf32>
    %404 = arith.addf %403, %402 : vector<8x32xf32>
    %405 = arith.divf %403, %404 : vector<8x32xf32>
    %406 = vector.extract_strided_slice %388 {offsets = [0, 64], sizes = [8, 32], strides = [1, 1]} : vector<8x192xf32> to vector<8x32xf32>
    %407 = vector.extract_strided_slice %387 {offsets = [0, 64], sizes = [8, 32], strides = [1, 1]} : vector<8x192xf32> to vector<8x32xf32>
    %408 = arith.mulf %397, %407 : vector<8x32xf32>
    %409 = arith.addf %406, %408 : vector<8x32xf32>
    %410 = math.tanh %409 : vector<8x32xf32>
    %cst_115 = arith.constant 1.000000e+00 : f32
    %411 = vector.broadcast %cst_115 : f32 to vector<8x32xf32>
    %412 = arith.subf %411, %405 : vector<8x32xf32>
    %413 = arith.mulf %412, %410 : vector<8x32xf32>
    %414 = arith.mulf %405, %353 : vector<8x32xf32>
    %415 = arith.addf %413, %414 : vector<8x32xf32>
    %416 = vector.extract_strided_slice %389 {offsets = [0, 96], sizes = [8, 32], strides = [1, 1]} : vector<8x192xf32> to vector<8x32xf32>
    %417 = vector.extract_strided_slice %387 {offsets = [0, 96], sizes = [8, 32], strides = [1, 1]} : vector<8x192xf32> to vector<8x32xf32>
    %418 = arith.addf %416, %417 : vector<8x32xf32>
    %419 = arith.negf %418 : vector<8x32xf32>
    %420 = math.exp %419 : vector<8x32xf32>
    %cst_116 = arith.constant 1.000000e+00 : f32
    %421 = vector.broadcast %cst_116 : f32 to vector<8x32xf32>
    %422 = arith.addf %421, %420 : vector<8x32xf32>
    %423 = arith.divf %421, %422 : vector<8x32xf32>
    %424 = vector.extract_strided_slice %389 {offsets = [0, 128], sizes = [8, 32], strides = [1, 1]} : vector<8x192xf32> to vector<8x32xf32>
    %425 = vector.extract_strided_slice %387 {offsets = [0, 128], sizes = [8, 32], strides = [1, 1]} : vector<8x192xf32> to vector<8x32xf32>
    %426 = arith.addf %424, %425 : vector<8x32xf32>
    %427 = arith.negf %426 : vector<8x32xf32>
    %428 = math.exp %427 : vector<8x32xf32>
    %cst_117 = arith.constant 1.000000e+00 : f32
    %429 = vector.broadcast %cst_117 : f32 to vector<8x32xf32>
    %430 = arith.addf %429, %428 : vector<8x32xf32>
    %431 = arith.divf %429, %430 : vector<8x32xf32>
    %432 = vector.extract_strided_slice %389 {offsets = [0, 160], sizes = [8, 32], strides = [1, 1]} : vector<8x192xf32> to vector<8x32xf32>
    %433 = vector.extract_strided_slice %387 {offsets = [0, 160], sizes = [8, 32], strides = [1, 1]} : vector<8x192xf32> to vector<8x32xf32>
    %434 = arith.mulf %423, %433 : vector<8x32xf32>
    %435 = arith.addf %432, %434 : vector<8x32xf32>
    %436 = math.tanh %435 : vector<8x32xf32>
    %cst_118 = arith.constant 1.000000e+00 : f32
    %437 = vector.broadcast %cst_118 : f32 to vector<8x32xf32>
    %438 = arith.subf %437, %431 : vector<8x32xf32>
    %439 = arith.mulf %438, %436 : vector<8x32xf32>
    %440 = arith.mulf %431, %379 : vector<8x32xf32>
    %441 = arith.addf %439, %440 : vector<8x32xf32>
    %c48_119 = arith.constant 48 : index
    %c0_120 = arith.constant 0 : index
    %442 = vector.load %arg5[%c48_119, %c0_120] : memref<64x64xf32, #tpu.memory_space<vmem>>, vector<8x32xf32>
    tpu.vector_store %arg5[%c48_119, %c0_120], %415 {strides = array<i32>} : memref<64x64xf32, #tpu.memory_space<vmem>>, vector<8x32xf32>,
    %c8_121 = arith.constant 8 : index
    %c32_122 = arith.constant 32 : index
    %443 = vector.load %arg5[%c8_121, %c32_122] : memref<64x64xf32, #tpu.memory_space<vmem>>, vector<8x32xf32>
    tpu.vector_store %arg5[%c8_121, %c32_122], %441 {strides = array<i32>} : memref<64x64xf32, #tpu.memory_space<vmem>>, vector<8x32xf32>,
    %444 = tpu.concatenate %415, %441 in 1 : vector<8x32xf32>, vector<8x32xf32> -> vector<8x64xf32>
    %445 = arith.truncf %444 : vector<8x64xf32> to vector<8x64xbf16>
    %c0_123 = arith.constant 0 : index
    %c0_124 = arith.constant 0 : index
    %446 = vector.load %arg2[%c0_123, %c0_124] : memref<64x192xbf16, #tpu.memory_space<vmem>>, vector<64x192xbf16>
    %cst_125 = arith.constant dense<0.000000e+00> : vector<8x192xf32>
    %447 = tpu.matmul %445, %446, %cst_125 {dimension_numbers = #tpu.dot_dimension_numbers<[1], [0], [0], [1], [0, 0, 1, 1], [], []>} : vector<8x64xbf16>, vector<64x192xbf16>, vector<8x192xf32> -> vector<8x192xf32>
    %448 = vector.broadcast %7 : vector<1x192xf32> to vector<8x192xf32>
    %449 = arith.addf %447, %448 : vector<8x192xf32>
    %c56_126 = arith.constant 56 : index
    %c0_127 = arith.constant 0 : index
    %450 = vector.load %arg6[%c56_126, %c0_127] : memref<64x192xf32, #tpu.memory_space<vmem>>, vector<8x192xf32>
    %c0_128 = arith.constant 0 : index
    %c0_129 = arith.constant 0 : index
    %451 = vector.load %arg6[%c0_128, %c0_129] : memref<64x192xf32, #tpu.memory_space<vmem>>, vector<8x192xf32>
    %452 = vector.extract_strided_slice %450 {offsets = [0, 0], sizes = [8, 32], strides = [1, 1]} : vector<8x192xf32> to vector<8x32xf32>
    %453 = vector.extract_strided_slice %449 {offsets = [0, 0], sizes = [8, 32], strides = [1, 1]} : vector<8x192xf32> to vector<8x32xf32>
    %454 = arith.addf %452, %453 : vector<8x32xf32>
    %455 = arith.negf %454 : vector<8x32xf32>
    %456 = math.exp %455 : vector<8x32xf32>
    %cst_130 = arith.constant 1.000000e+00 : f32
    %457 = vector.broadcast %cst_130 : f32 to vector<8x32xf32>
    %458 = arith.addf %457, %456 : vector<8x32xf32>
    %459 = arith.divf %457, %458 : vector<8x32xf32>
    %460 = vector.extract_strided_slice %450 {offsets = [0, 32], sizes = [8, 32], strides = [1, 1]} : vector<8x192xf32> to vector<8x32xf32>
    %461 = vector.extract_strided_slice %449 {offsets = [0, 32], sizes = [8, 32], strides = [1, 1]} : vector<8x192xf32> to vector<8x32xf32>
    %462 = arith.addf %460, %461 : vector<8x32xf32>
    %463 = arith.negf %462 : vector<8x32xf32>
    %464 = math.exp %463 : vector<8x32xf32>
    %cst_131 = arith.constant 1.000000e+00 : f32
    %465 = vector.broadcast %cst_131 : f32 to vector<8x32xf32>
    %466 = arith.addf %465, %464 : vector<8x32xf32>
    %467 = arith.divf %465, %466 : vector<8x32xf32>
    %468 = vector.extract_strided_slice %450 {offsets = [0, 64], sizes = [8, 32], strides = [1, 1]} : vector<8x192xf32> to vector<8x32xf32>
    %469 = vector.extract_strided_slice %449 {offsets = [0, 64], sizes = [8, 32], strides = [1, 1]} : vector<8x192xf32> to vector<8x32xf32>
    %470 = arith.mulf %459, %469 : vector<8x32xf32>
    %471 = arith.addf %468, %470 : vector<8x32xf32>
    %472 = math.tanh %471 : vector<8x32xf32>
    %cst_132 = arith.constant 1.000000e+00 : f32
    %473 = vector.broadcast %cst_132 : f32 to vector<8x32xf32>
    %474 = arith.subf %473, %467 : vector<8x32xf32>
    %475 = arith.mulf %474, %472 : vector<8x32xf32>
    %476 = arith.mulf %467, %415 : vector<8x32xf32>
    %477 = arith.addf %475, %476 : vector<8x32xf32>
    %478 = vector.extract_strided_slice %451 {offsets = [0, 96], sizes = [8, 32], strides = [1, 1]} : vector<8x192xf32> to vector<8x32xf32>
    %479 = vector.extract_strided_slice %449 {offsets = [0, 96], sizes = [8, 32], strides = [1, 1]} : vector<8x192xf32> to vector<8x32xf32>
    %480 = arith.addf %478, %479 : vector<8x32xf32>
    %481 = arith.negf %480 : vector<8x32xf32>
    %482 = math.exp %481 : vector<8x32xf32>
    %cst_133 = arith.constant 1.000000e+00 : f32
    %483 = vector.broadcast %cst_133 : f32 to vector<8x32xf32>
    %484 = arith.addf %483, %482 : vector<8x32xf32>
    %485 = arith.divf %483, %484 : vector<8x32xf32>
    %486 = vector.extract_strided_slice %451 {offsets = [0, 128], sizes = [8, 32], strides = [1, 1]} : vector<8x192xf32> to vector<8x32xf32>
    %487 = vector.extract_strided_slice %449 {offsets = [0, 128], sizes = [8, 32], strides = [1, 1]} : vector<8x192xf32> to vector<8x32xf32>
    %488 = arith.addf %486, %487 : vector<8x32xf32>
    %489 = arith.negf %488 : vector<8x32xf32>
    %490 = math.exp %489 : vector<8x32xf32>
    %cst_134 = arith.constant 1.000000e+00 : f32
    %491 = vector.broadcast %cst_134 : f32 to vector<8x32xf32>
    %492 = arith.addf %491, %490 : vector<8x32xf32>
    %493 = arith.divf %491, %492 : vector<8x32xf32>
    %494 = vector.extract_strided_slice %451 {offsets = [0, 160], sizes = [8, 32], strides = [1, 1]} : vector<8x192xf32> to vector<8x32xf32>
    %495 = vector.extract_strided_slice %449 {offsets = [0, 160], sizes = [8, 32], strides = [1, 1]} : vector<8x192xf32> to vector<8x32xf32>
    %496 = arith.mulf %485, %495 : vector<8x32xf32>
    %497 = arith.addf %494, %496 : vector<8x32xf32>
    %498 = math.tanh %497 : vector<8x32xf32>
    %cst_135 = arith.constant 1.000000e+00 : f32
    %499 = vector.broadcast %cst_135 : f32 to vector<8x32xf32>
    %500 = arith.subf %499, %493 : vector<8x32xf32>
    %501 = arith.mulf %500, %498 : vector<8x32xf32>
    %502 = arith.mulf %493, %441 : vector<8x32xf32>
    %503 = arith.addf %501, %502 : vector<8x32xf32>
    %c56_136 = arith.constant 56 : index
    %c0_137 = arith.constant 0 : index
    %504 = vector.load %arg5[%c56_136, %c0_137] : memref<64x64xf32, #tpu.memory_space<vmem>>, vector<8x32xf32>
    tpu.vector_store %arg5[%c56_136, %c0_137], %477 {strides = array<i32>} : memref<64x64xf32, #tpu.memory_space<vmem>>, vector<8x32xf32>,
    %c0_138 = arith.constant 0 : index
    %c32_139 = arith.constant 32 : index
    %505 = vector.load %arg5[%c0_138, %c32_139] : memref<64x64xf32, #tpu.memory_space<vmem>>, vector<8x32xf32>
    tpu.vector_store %arg5[%c0_138, %c32_139], %503 {strides = array<i32>} : memref<64x64xf32, #tpu.memory_space<vmem>>, vector<8x32xf32>,
    return
  }
}

module attributes {stable_mosaic.version = 11 : i64} {
  func.func @_attention_kernel(%arg0: memref<64x64xf32, #tpu.memory_space<vmem>>, %arg1: memref<64x128xf32, #tpu.memory_space<vmem>>, %arg2: memref<1x128xf32, #tpu.memory_space<vmem>>, %arg3: memref<128x1xf32, #tpu.memory_space<vmem>>, %arg4: memref<8x64xf32, #tpu.memory_space<vmem>>, %arg5: memref<64x8xf32, #tpu.memory_space<vmem>>, %arg6: memref<8x128xf32, #tpu.memory_space<vmem>>) attributes {dimension_semantics = [], scalar_prefetch = 0 : i64, scratch_operands = 0 : i64, tpu.core_type = #tpu.core_type<tc>} {
    %c0 = arith.constant 0 : index
    %c0_0 = arith.constant 0 : index
    %0 = vector.load %arg0[%c0, %c0_0] : memref<64x64xf32, #tpu.memory_space<vmem>>, vector<64x64xf32>
    %c0_1 = arith.constant 0 : index
    %c0_2 = arith.constant 0 : index
    %1 = vector.load %arg1[%c0_1, %c0_2] : memref<64x128xf32, #tpu.memory_space<vmem>>, vector<64x128xf32>
    %cst = arith.constant dense<0.000000e+00> : vector<64x128xf32>
    %2 = tpu.matmul %0, %1, %cst {dimension_numbers = #tpu.dot_dimension_numbers<[1], [0], [0], [1], [0, 0, 1, 1], [], []>} : vector<64x64xf32>, vector<64x128xf32>, vector<64x128xf32> -> vector<64x128xf32>
    %c0_3 = arith.constant 0 : index
    %c0_4 = arith.constant 0 : index
    %3 = vector.load %arg2[%c0_3, %c0_4] : memref<1x128xf32, #tpu.memory_space<vmem>>, vector<1x128xf32>
    %4 = vector.broadcast %3 : vector<1x128xf32> to vector<64x128xf32>
    %5 = arith.addf %2, %4 : vector<64x128xf32>
    %cst_5 = arith.constant 0.000000e+00 : f32
    %6 = vector.broadcast %cst_5 : f32 to vector<64x128xf32>
    %7 = arith.maximumf %5, %6 : vector<64x128xf32>
    %c0_6 = arith.constant 0 : index
    %c0_7 = arith.constant 0 : index
    %8 = vector.load %arg3[%c0_6, %c0_7] : memref<128x1xf32, #tpu.memory_space<vmem>>, vector<128x1xf32>
    %cst_8 = arith.constant dense<0.000000e+00> : vector<64x1xf32>
    %9 = tpu.matmul %7, %8, %cst_8 {dimension_numbers = #tpu.dot_dimension_numbers<[1], [0], [0], [1], [0, 0, 1, 1], [], []>} : vector<64x128xf32>, vector<128x1xf32>, vector<64x1xf32> -> vector<64x1xf32>
    %10 = vector.shape_cast %9 : vector<64x1xf32> to vector<1x64x1xf32>
    %cst_9 = arith.constant dense<0xFF800000> : vector<1xf32>
    %11 = vector.multi_reduction <maximumf>, %10, %cst_9 [1, 2] : vector<1x64x1xf32> to vector<1xf32>
    %12 = vector.shape_cast %11 : vector<1xf32> to vector<1x1x1xf32>
    %13 = vector.extract %12[0, 0, 0] : f32 from vector<1x1x1xf32>
    %14 = vector.broadcast %13 : f32 to vector<64x1xf32>
    %15 = arith.subf %9, %14 : vector<64x1xf32>
    %16 = math.exp %15 : vector<64x1xf32>
    %c0_10 = arith.constant 0 : index
    %c0_11 = arith.constant 0 : index
    %17 = vector.load %arg4[%c0_10, %c0_11] : memref<8x64xf32, #tpu.memory_space<vmem>>, vector<8x64xf32>
    %cst_12 = arith.constant dense<0.000000e+00> : vector<8x1xf32>
    %18 = tpu.matmul %17, %16, %cst_12 {dimension_numbers = #tpu.dot_dimension_numbers<[1], [0], [0], [1], [0, 0, 1, 1], [], []>} : vector<8x64xf32>, vector<64x1xf32>, vector<8x1xf32> -> vector<8x1xf32>
    %c0_13 = arith.constant 0 : index
    %c0_14 = arith.constant 0 : index
    %19 = vector.load %arg5[%c0_13, %c0_14] : memref<64x8xf32, #tpu.memory_space<vmem>>, vector<64x8xf32>
    %cst_15 = arith.constant dense<0.000000e+00> : vector<64x1xf32>
    %20 = tpu.matmul %19, %18, %cst_15 {dimension_numbers = #tpu.dot_dimension_numbers<[1], [0], [0], [1], [0, 0, 1, 1], [], []>} : vector<64x8xf32>, vector<8x1xf32>, vector<64x1xf32> -> vector<64x1xf32>
    %21 = arith.divf %16, %20 : vector<64x1xf32>
    %c0_16 = arith.constant 0 : index
    %c0_17 = arith.constant 0 : index
    %22 = vector.load %arg4[%c0_16, %c0_17] : memref<8x64xf32, #tpu.memory_space<vmem>>, vector<8x64xf32>
    %23 = vector.broadcast %21 : vector<64x1xf32> to vector<64x64xf32>
    %24 = arith.mulf %23, %0 : vector<64x64xf32>
    %cst_18 = arith.constant dense<0.000000e+00> : vector<8x64xf32>
    %25 = tpu.matmul %22, %24, %cst_18 {dimension_numbers = #tpu.dot_dimension_numbers<[1], [0], [0], [1], [0, 0, 1, 1], [], []>} : vector<8x64xf32>, vector<64x64xf32>, vector<8x64xf32> -> vector<8x64xf32>
    %26 = vector.extract_strided_slice %0 {offsets = [56, 0], sizes = [8, 64], strides = [1, 1]} : vector<64x64xf32> to vector<8x64xf32>
    %27 = tpu.concatenate %26, %25 in 1 : vector<8x64xf32>, vector<8x64xf32> -> vector<8x128xf32>
    %c0_19 = arith.constant 0 : index
    %c0_20 = arith.constant 0 : index
    %28 = vector.load %arg6[%c0_19, %c0_20] : memref<8x128xf32, #tpu.memory_space<vmem>>, vector<8x128xf32>
    tpu.vector_store %arg6[%c0_19, %c0_20], %27 {strides = array<i32>} : memref<8x128xf32, #tpu.memory_space<vmem>>, vector<8x128xf32>,
    return
  }
}

</mosaic_0001>

<llo_original>
// kernel: res_altsm_features.8
$region0: #{res_altsm_features.8}
  #allocation0 [shape = 'u32[]', space=smem, size = 0x4, offset = 0x4, fixed_abs, tag = 'smem constant byte address 0x4 - core index']
  #allocation1 [shape = 'u32[144,128]{1,0:T(1,128)}', space=vmem, size = 0x12000, scoped, tag = 'internal scratch']
  %s0 = inlined_call_operand.vmem [shape: f32[64,96], index: 0, kind: input, shape index: {}]
  %s1 = inlined_call_operand.vmem [shape: f32[96,32], index: 1, kind: input, shape index: {}]
  %s2 = inlined_call_operand.vmem [shape: f32[1,32], index: 2, kind: input, shape index: {}]
  %s3 = inlined_call_operand.vmem [shape: f32[32,64], index: 3, kind: input, shape index: {}]
  %s4 = inlined_call_operand.vmem [shape: f32[32,32], index: 4, kind: output, shape index: {}]
  %s5 = sld [smem:[#allocation0]]
  $region26: #{res_altsm_features.8} parent=0
    _
  %s7 = ssub.s32 1, %s5
  %s8 = scalar_select 0, %s7, %s5
  // Predicated region
  $region2: #{res_altsm_features.8} parent=0 // pred_check
    _
  $region3: #{res_altsm_features.8} parent=0 // pred_check_branch
    %10 = sbr.rel (0) target = $region5
  $region4: #{res_altsm_features.8} parent=0 // pred_region
    _
  $region5: #{res_altsm_features.8} parent=0 // pred_fallthru
    _
  // Predicated region
  $region6: #{res_altsm_features.8} parent=0 // pred_check
    _
  $region7: #{res_altsm_features.8} parent=0 // pred_check_branch
    %12 = sbr.rel (0) target = $region9
  $region8: #{res_altsm_features.8} parent=0 // pred_region
    _
  $region9: #{res_altsm_features.8} parent=0 // pred_fallthru
    _
  // Predicated region
  $region10: #{res_altsm_features.8} parent=0 // pred_check
    _
  $region11: #{res_altsm_features.8} parent=0 // pred_check_branch
    %14 = sbr.rel (0) target = $region13
  $region12: #{res_altsm_features.8} parent=0 // pred_region
    _
  $region13: #{res_altsm_features.8} parent=0 // pred_fallthru
    _
  // Predicated region
  $region14: #{res_altsm_features.8} parent=0 // pred_check
    _
  $region15: #{res_altsm_features.8} parent=0 // pred_check_branch
    %16 = sbr.rel (0) target = $region17
  $region16: #{res_altsm_features.8} parent=0 // pred_region
    _
  $region17: #{res_altsm_features.8} parent=0 // pred_fallthru
    _
  %v17 = vld [vmem:[%s0] sm:$0xff]
  %v18 = vld [vmem:[%s0 + $0x8] sm:$0xff]
  %v19 = vld [vmem:[%s0 + $0x10] sm:$0xff]
  %v20 = vld [vmem:[%s0 + $0x18] sm:$0xff]
  %v21 = vld [vmem:[%s0 + $0x20] sm:$0xff]
  %v22 = vld [vmem:[%s0 + $0x28] sm:$0xff]
  %v23 = vld [vmem:[%s0 + $0x30] sm:$0xff]
  %v24 = vld [vmem:[%s0 + $0x38] sm:$0xff]
  %v25 = vld [vmem:[%s1] sm:$0xff]
  %v26 = vld [vmem:[%s1 + $0x8] sm:$0xff]
  %v27 = vld [vmem:[%s1 + $0x10] sm:$0xff]
  %v28 = vld [vmem:[%s1 + $0x18] sm:$0xff]
  %v29 = vld [vmem:[%s1 + $0x20] sm:$0xff]
  %v30 = vld [vmem:[%s1 + $0x28] sm:$0xff]
  %v31 = vld [vmem:[%s1 + $0x30] sm:$0xff]
  %v32 = vld [vmem:[%s1 + $0x38] sm:$0xff]
  %v33 = vld [vmem:[%s1 + $0x40] sm:$0xff]
  %v34 = vld [vmem:[%s1 + $0x48] sm:$0xff]
  %v35 = vld [vmem:[%s1 + $0x50] sm:$0xff]
  %v36 = vld [vmem:[%s1 + $0x58] sm:$0xff]
  %v37 = vld [vmem:[%s2] sm:$0x1]
  %v39 = vlaneseq
  %v40 = vshrl.u32 %v39, 7
  %v41 = vsub.s32 0, %v40
  %v42 = vrot.slane %v37, %v41
  %vm44 = vcmask 785408
  %v46 = vsel %vm44, %v17, 0
  %v49 = vsel %vm44, %v18, 0
  %v52 = vsel %vm44, %v19, 0
  %v55 = vsel %vm44, %v20, 0
  %v58 = vsel %vm44, %v21, 0
  %v61 = vsel %vm44, %v22, 0
  %v64 = vsel %vm44, %v23, 0
  %v67 = vsel %vm44, %v24, 0
  %69 = vmatprep.subr.mxu0 0.0
  %70 = vmatpush1.msra.mxu0 %v25
  %71 = vmatprep.subr.mxu0 0.0
  %72 = vmatpush1.msra.mxu0 %v26
  %73 = vmatprep.subr.mxu0 0.0
  %74 = vmatpush1.msra.mxu0 %v27
  %75 = vmatprep.subr.mxu0 0.0
  %76 = vmatpush1.msra.mxu0 %v28
  %77 = vmatprep.subr.mxu0 0.0
  %78 = vmatpush1.msra.mxu0 %v29
  %79 = vmatprep.subr.mxu0 0.0
  %80 = vmatpush1.msra.mxu0 %v30
  %81 = vmatprep.subr.mxu0 0.0
  %82 = vmatpush1.msra.mxu0 %v31
  %83 = vmatprep.subr.mxu0 0.0
  %84 = vmatpush1.msra.mxu0 %v32
  %85 = vmatprep.subr.mxu0 0.0
  %86 = vmatpush1.msra.mxu0 %v33
  %87 = vmatprep.subr.mxu0 0.0
  %88 = vmatpush1.msra.mxu0 %v34
  %89 = vmatprep.subr.mxu0 0.0
  %90 = vmatpush1.msra.mxu0 %v35
  %91 = vmatprep.subr.mxu0 0.0
  %92 = vmatpush1.msra.mxu0 %v36
  %93 = vmatprep.subr.mxu0 0.0
  %94 = vmatpush1.msra.mxu0 0.0
  %95 = vmatprep.subr.mxu0 0.0
  %96 = vmatpush1.msra.mxu0 0.0
  %97 = vmatprep.subr.mxu0 0.0
  %98 = vmatpush1.msra.mxu0 0.0
  %99 = vmatprep.subr.mxu0 0.0
  %100 = vmatpush1.msra.mxu0 0.0
  %101 = vmatprep.subr.mxu0 0.0
  %102 = vmatpush1.msra.mxu0 0.0
  %103 = vmatprep.subr.mxu0 0.0
  %104 = vmatpush1.msra.mxu0 0.0
  %105 = vmatprep.subr.mxu0 0.0
  %106 = vmatpush1.msra.mxu0 0.0
  %107 = vmatprep.subr.mxu0 0.0
  %108 = vmatpush1.msra.mxu0 0.0
  %109 = vmatprep.subr.mxu0 0.0
  %110 = vmatpush1.msra.mxu0 0.0
  %111 = vmatprep.subr.mxu0 0.0
  %112 = vmatpush1.msra.mxu0 0.0
  %113 = vmatprep.subr.mxu0 0.0
  %114 = vmatpush1.msra.mxu0 0.0
  %115 = vmatprep.subr.mxu0 0.0
  %116 = vmatpush1.msra.mxu0 0.0
  %117 = vmatprep.subr.mxu0 0.0
  %118 = vmatpush1.msra.mxu0 0.0
  %119 = vmatprep.subr.mxu0 0.0
  %120 = vmatpush1.msra.mxu0 0.0
  %121 = vmatprep.subr.mxu0 0.0
  %122 = vmatpush1.msra.mxu0 0.0
  %123 = vmatprep.subr.mxu0 0.0
  %124 = vmatpush1.msra.mxu0 0.0
  %125 = vmatprep.subr.mxu0 0.0
  %126 = vmatpush1.msra.mxu0 0.0
  %127 = vmatprep.subr.mxu0 0.0
  %128 = vmatpush1.msra.mxu0 0.0
  %129 = vmatprep.subr.mxu0 0.0
  %130 = vmatpush1.msra.mxu0 0.0
  %131 = vmatprep.subr.mxu0 0.0
  %132 = vmatpush1.msra.mxu0 0.0
  %133 = vmatprep.mubr.f32.mxu0 0.0
  %134 = vmatmul.mubr.f32.gmra.mrb[0].mxu0 %v46
  %v135 = vpop.f32.mrb[0].mxu0
  %v136 = vadd.f32 %v42, %v135
  %v137 = vpop.f32.mrb[0].mxu0
  %138 = vmatprep.mubr.f32.mxu0 0.0
  %139 = vmatmul.mubr.f32.gmra.mrb[0].mxu0 %v49
  %v140 = vpop.f32.mrb[0].mxu0
  %v141 = vadd.f32 %v42, %v140
  %v142 = vpop.f32.mrb[0].mxu0
  %143 = vmatprep.mubr.f32.mxu0 0.0
  %144 = vmatmul.mubr.f32.gmra.mrb[0].mxu0 %v52
  %v145 = vpop.f32.mrb[0].mxu0
  %v146 = vadd.f32 %v42, %v145
  %v147 = vpop.f32.mrb[0].mxu0
  %148 = vmatprep.mubr.f32.mxu0 0.0
  %149 = vmatmul.mubr.f32.gmra.mrb[0].mxu0 %v55
  %v150 = vpop.f32.mrb[0].mxu0
  %v151 = vadd.f32 %v42, %v150
  %v152 = vpop.f32.mrb[0].mxu0
  %153 = vmatprep.mubr.f32.mxu0 0.0
  %154 = vmatmul.mubr.f32.gmra.mrb[0].mxu0 %v58
  %v155 = vpop.f32.mrb[0].mxu0
  %v156 = vadd.f32 %v42, %v155
  %v157 = vpop.f32.mrb[0].mxu0
  %158 = vmatprep.mubr.f32.mxu0 0.0
  %159 = vmatmul.mubr.f32.gmra.mrb[0].mxu0 %v61
  %v160 = vpop.f32.mrb[0].mxu0
  %v161 = vadd.f32 %v42, %v160
  %v162 = vpop.f32.mrb[0].mxu0
  %163 = vmatprep.mubr.f32.mxu0 0.0
  %164 = vmatmul.mubr.f32.gmra.mrb[0].mxu0 %v64
  %v165 = vpop.f32.mrb[0].mxu0
  %v166 = vadd.f32 %v42, %v165
  %v167 = vpop.f32.mrb[0].mxu0
  %168 = vmatprep.mubr.f32.mxu0 0.0
  %169 = vmatmul.mubr.f32.gmra.mrb[0].mxu0 %v67
  %v170 = vpop.f32.mrb[0].mxu0
  %v171 = vadd.f32 %v42, %v170
  %v172 = vpop.f32.mrb[0].mxu0
  %173 = vdwg.mxu0
  %v174 = vmax.f32 %v136, 0.0
  %v175 = vmax.f32 %v141, 0.0
  %v176 = vmax.f32 %v146, 0.0
  %v177 = vmax.f32 %v151, 0.0
  %v178 = vmax.f32 %v156, 0.0
  %v179 = vmax.f32 %v161, 0.0
  %v180 = vmax.f32 %v166, 0.0
  %v181 = vmax.f32 %v171, 0.0
  %v182 = vld [vmem:[%s3] sm:$0xff]
  %v183 = vld [vmem:[%s3 + $0x8] sm:$0xff]
  %v184 = vld [vmem:[%s3 + $0x10] sm:$0xff]
  %v185 = vld [vmem:[%s3 + $0x18] sm:$0xff]
  %vm186 = vcmask 523264
  %v188 = vsel %vm186, %v182, 0
  %v191 = vsel %vm186, %v183, 0
  %v194 = vsel %vm186, %v184, 0
  %v197 = vsel %vm186, %v185, 0
  %199 = vmatprep.subr.mxu0 0.0
  %200 = vmatpush1.msra.mxu0 %v174
  %201 = vmatprep.subr.mxu0 0.0
  %202 = vmatpush1.msra.mxu0 %v175
  %203 = vmatprep.subr.mxu0 0.0
  %204 = vmatpush1.msra.mxu0 %v176
  %205 = vmatprep.subr.mxu0 0.0
  %206 = vmatpush1.msra.mxu0 %v177
  %207 = vmatprep.subr.mxu0 0.0
  %208 = vmatpush1.msra.mxu0 %v178
  %209 = vmatprep.subr.mxu0 0.0
  %210 = vmatpush1.msra.mxu0 %v179
  %211 = vmatprep.subr.mxu0 0.0
  %212 = vmatpush1.msra.mxu0 %v180
  %213 = vmatprep.subr.mxu0 0.0
  %214 = vmatpush1.msra.mxu0 %v181
  %215 = vmatprep.subr.mxu0 0.0
  %216 = vmatpush1.msra.mxu0 0.0
  %217 = vmatprep.subr.mxu0 0.0
  %218 = vmatpush1.msra.mxu0 0.0
  %219 = vmatprep.subr.mxu0 0.0
  %220 = vmatpush1.msra.mxu0 0.0
  %221 = vmatprep.subr.mxu0 0.0
  %222 = vmatpush1.msra.mxu0 0.0
  %223 = vmatprep.subr.mxu0 0.0
  %224 = vmatpush1.msra.mxu0 0.0
  %225 = vmatprep.subr.mxu0 0.0
  %226 = vmatpush1.msra.mxu0 0.0
  %227 = vmatprep.subr.mxu0 0.0
  %228 = vmatpush1.msra.mxu0 0.0
  %229 = vmatprep.subr.mxu0 0.0
  %230 = vmatpush1.msra.mxu0 0.0
  %231 = vmatprep.subr.mxu0 0.0
  %232 = vmatpush1.msra.mxu0 0.0
  %233 = vmatprep.subr.mxu0 0.0
  %234 = vmatpush1.msra.mxu0 0.0
  %235 = vmatprep.subr.mxu0 0.0
  %236 = vmatpush1.msra.mxu0 0.0
  %237 = vmatprep.subr.mxu0 0.0
  %238 = vmatpush1.msra.mxu0 0.0
  %239 = vmatprep.subr.mxu0 0.0
  %240 = vmatpush1.msra.mxu0 0.0
  %241 = vmatprep.subr.mxu0 0.0
  %242 = vmatpush1.msra.mxu0 0.0
  %243 = vmatprep.subr.mxu0 0.0
  %244 = vmatpush1.msra.mxu0 0.0
  %245 = vmatprep.subr.mxu0 0.0
  %246 = vmatpush1.msra.mxu0 0.0
  %247 = vmatprep.subr.mxu0 0.0
  %248 = vmatpush1.msra.mxu0 0.0
  %249 = vmatprep.subr.mxu0 0.0
  %250 = vmatpush1.msra.mxu0 0.0
  %251 = vmatprep.subr.mxu0 0.0
  %252 = vmatpush1.msra.mxu0 0.0
  %253 = vmatprep.subr.mxu0 0.0
  %254 = vmatpush1.msra.mxu0 0.0
  %255 = vmatprep.subr.mxu0 0.0
  %256 = vmatpush1.msra.mxu0 0.0
  %257 = vmatprep.subr.mxu0 0.0
  %258 = vmatpush1.msra.mxu0 0.0
  %259 = vmatprep.subr.mxu0 0.0
  %260 = vmatpush1.msra.mxu0 0.0
  %261 = vmatprep.subr.mxu0 0.0
  %262 = vmatpush1.msra.mxu0 0.0
  %263 = vmatprep.mubr.f32.mxu0 0.0
  %264 = vmatmul.mubr.f32.gmra.mrb[0].mxu0 %v188
  %v265 = vpop.f32.mrb[0].mxu0
  %v266 = vadd.f32 0.0, %v265
  %v267 = vpop.f32.mrb[0].mxu0
  %268 = vmatprep.mubr.f32.mxu0 0.0
  %269 = vmatmul.mubr.f32.gmra.mrb[0].mxu0 %v191
  %v270 = vpop.f32.mrb[0].mxu0
  %v271 = vadd.f32 0.0, %v270
  %v272 = vpop.f32.mrb[0].mxu0
  %273 = vmatprep.mubr.f32.mxu0 0.0
  %274 = vmatmul.mubr.f32.gmra.mrb[0].mxu0 %v194
  %v275 = vpop.f32.mrb[0].mxu0
  %v276 = vadd.f32 0.0, %v275
  %v277 = vpop.f32.mrb[0].mxu0
  %278 = vmatprep.mubr.f32.mxu0 0.0
  %279 = vmatmul.mubr.f32.gmra.mrb[0].mxu0 %v197
  %v280 = vpop.f32.mrb[0].mxu0
  %v281 = vadd.f32 0.0, %v280
  %v282 = vpop.f32.mrb[0].mxu0
  %283 = vdwg.mxu0
  %vm284 = vcmask 261120
  %285 = vst.msk [vmem:[%s4] sm:$0xff] %vm284, %v266
  %286 = vst.msk [vmem:[%s4 + $0x8] sm:$0xff] %vm284, %v271
  %287 = vst.msk [vmem:[%s4 + $0x10] sm:$0xff] %vm284, %v276
  %288 = vst.msk [vmem:[%s4 + $0x18] sm:$0xff] %vm284, %v281
  // Predicated region
  $region18: #{res_altsm_features.8} parent=0 // pred_check
    _
  $region19: #{res_altsm_features.8} parent=0 // pred_check_branch
    %290 = sbr.rel (0) target = $region21
  $region20: #{res_altsm_features.8} parent=0 // pred_region
    _
  $region21: #{res_altsm_features.8} parent=0 // pred_fallthru
    _
  // Predicated region
  $region22: #{res_altsm_features.8} parent=0 // pred_check
    _
  $region23: #{res_altsm_features.8} parent=0 // pred_check_branch
    %292 = sbr.rel (0) target = $region25
  $region24: #{res_altsm_features.8} parent=0 // pred_region
    _
  $region25: #{res_altsm_features.8} parent=0 // pred_fallthru
    _

// kernel: res_altsm_features.9
$region0: #{res_altsm_features.9}
  #allocation0 [shape = 'u32[]', space=smem, size = 0x4, offset = 0x4, fixed_abs, tag = 'smem constant byte address 0x4 - core index']
  #allocation1 [shape = 'u32[144,128]{1,0:T(1,128)}', space=vmem, size = 0x12000, scoped, tag = 'internal scratch']
  %s0 = inlined_call_operand.vmem [shape: f32[64,96], index: 0, kind: input, shape index: {}]
  %s1 = inlined_call_operand.vmem [shape: f32[64,32], index: 1, kind: input, shape index: {}]
  %s2 = inlined_call_operand.vmem [shape: f32[96,64], index: 2, kind: input, shape index: {}]
  %s3 = inlined_call_operand.vmem [shape: f32[1,64], index: 3, kind: input, shape index: {}]
  %s4 = inlined_call_operand.vmem [shape: f32[32,64], index: 4, kind: input, shape index: {}]
  %s5 = inlined_call_operand.vmem [shape: f32[1,64], index: 5, kind: input, shape index: {}]
  %s6 = inlined_call_operand.vmem [shape: f32[3,64,64], index: 6, kind: input, shape index: {}]
  %s7 = inlined_call_operand.vmem [shape: f32[1,64], index: 7, kind: input, shape index: {}]
  %s8 = inlined_call_operand.vmem [shape: f32[3,64,64], index: 8, kind: input, shape index: {}]
  %s9 = inlined_call_operand.vmem [shape: f32[64,64], index: 9, kind: output, shape index: {}]
  %s10 = sld [smem:[#allocation0]]
  $region46: #{res_altsm_features.9} parent=0
    _
  %s12 = ssub.s32 1, %s10
  %s13 = scalar_select 0, %s12, %s10
  // Predicated region
  $region2: #{res_altsm_features.9} parent=0 // pred_check
    _
  $region3: #{res_altsm_features.9} parent=0 // pred_check_branch
    %15 = sbr.rel (0) target = $region5
  $region4: #{res_altsm_features.9} parent=0 // pred_region
    _
  $region5: #{res_altsm_features.9} parent=0 // pred_fallthru
    _
  // Predicated region
  $region6: #{res_altsm_features.9} parent=0 // pred_check
    _
  $region7: #{res_altsm_features.9} parent=0 // pred_check_branch
    %17 = sbr.rel (0) target = $region9
  $region8: #{res_altsm_features.9} parent=0 // pred_region
    _
  $region9: #{res_altsm_features.9} parent=0 // pred_fallthru
    _
  // Predicated region
  $region10: #{res_altsm_features.9} parent=0 // pred_check
    _
  $region11: #{res_altsm_features.9} parent=0 // pred_check_branch
    %19 = sbr.rel (0) target = $region13
  $region12: #{res_altsm_features.9} parent=0 // pred_region
    _
  $region13: #{res_altsm_features.9} parent=0 // pred_fallthru
    _
  // Predicated region
  $region14: #{res_altsm_features.9} parent=0 // pred_check
    _
  $region15: #{res_altsm_features.9} parent=0 // pred_check_branch
    %21 = sbr.rel (0) target = $region17
  $region16: #{res_altsm_features.9} parent=0 // pred_region
    _
  $region17: #{res_altsm_features.9} parent=0 // pred_fallthru
    _
  // Predicated region
  $region18: #{res_altsm_features.9} parent=0 // pred_check
    _
  $region19: #{res_altsm_features.9} parent=0 // pred_check_branch
    %23 = sbr.rel (0) target = $region21
  $region20: #{res_altsm_features.9} parent=0 // pred_region
    _
  $region21: #{res_altsm_features.9} parent=0 // pred_fallthru
    _
  // Predicated region
  $region22: #{res_altsm_features.9} parent=0 // pred_check
    _
  $region23: #{res_altsm_features.9} parent=0 // pred_check_branch
    %25 = sbr.rel (0) target = $region25
  $region24: #{res_altsm_features.9} parent=0 // pred_region
    _
  $region25: #{res_altsm_features.9} parent=0 // pred_fallthru
    _
  // Predicated region
  $region26: #{res_altsm_features.9} parent=0 // pred_check
    _
  $region27: #{res_altsm_features.9} parent=0 // pred_check_branch
    %27 = sbr.rel (0) target = $region29
  $region28: #{res_altsm_features.9} parent=0 // pred_region
    _
  $region29: #{res_altsm_features.9} parent=0 // pred_fallthru
    _
  // Predicated region
  $region30: #{res_altsm_features.9} parent=0 // pred_check
    _
  $region31: #{res_altsm_features.9} parent=0 // pred_check_branch
    %29 = sbr.rel (0) target = $region33
  $region32: #{res_altsm_features.9} parent=0 // pred_region
    _
  $region33: #{res_altsm_features.9} parent=0 // pred_fallthru
    _
  // Predicated region
  $region34: #{res_altsm_features.9} parent=0 // pred_check
    _
  $region35: #{res_altsm_features.9} parent=0 // pred_check_branch
    %31 = sbr.rel (0) target = $region37
  $region36: #{res_altsm_features.9} parent=0 // pred_region
    _
  $region37: #{res_altsm_features.9} parent=0 // pred_fallthru
    _
  %v32 = vld [vmem:[%s0] sm:$0xff]
  %v33 = vld [vmem:[%s0 + $0x8] sm:$0xff]
  %v34 = vld [vmem:[%s0 + $0x10] sm:$0xff]
  %v35 = vld [vmem:[%s0 + $0x18] sm:$0xff]
  %v36 = vld [vmem:[%s0 + $0x20] sm:$0xff]
  %v37 = vld [vmem:[%s0 + $0x28] sm:$0xff]
  %v38 = vld [vmem:[%s0 + $0x30] sm:$0xff]
  %v39 = vld [vmem:[%s0 + $0x38] sm:$0xff]
  %v40 = vld [vmem:[%s2] sm:$0xff]
  %v41 = vld [vmem:[%s2 + $0x8] sm:$0xff]
  %v42 = vld [vmem:[%s2 + $0x10] sm:$0xff]
  %v43 = vld [vmem:[%s2 + $0x18] sm:$0xff]
  %v44 = vld [vmem:[%s2 + $0x20] sm:$0xff]
  %v45 = vld [vmem:[%s2 + $0x28] sm:$0xff]
  %v46 = vld [vmem:[%s2 + $0x30] sm:$0xff]
  %v47 = vld [vmem:[%s2 + $0x38] sm:$0xff]
  %v48 = vld [vmem:[%s2 + $0x40] sm:$0xff]
  %v49 = vld [vmem:[%s2 + $0x48] sm:$0xff]
  %v50 = vld [vmem:[%s2 + $0x50] sm:$0xff]
  %v51 = vld [vmem:[%s2 + $0x58] sm:$0xff]
  %v52 = vld [vmem:[%s3] sm:$0x1]
  %v54 = vlaneseq
  %v55 = vshrl.u32 %v54, 7
  %v56 = vsub.s32 0, %v55
  %v57 = vrot.slane %v52, %v56
  %vm59 = vcmask 785408
  %v61 = vsel %vm59, %v32, 0
  %v64 = vsel %vm59, %v33, 0
  %v67 = vsel %vm59, %v34, 0
  %v70 = vsel %vm59, %v35, 0
  %v73 = vsel %vm59, %v36, 0
  %v76 = vsel %vm59, %v37, 0
  %v79 = vsel %vm59, %v38, 0
  %v82 = vsel %vm59, %v39, 0
  %84 = vmatprep.subr.mxu0 0.0
  %85 = vmatpush1.msra.mxu0 %v40
  %86 = vmatprep.subr.mxu0 0.0
  %87 = vmatpush1.msra.mxu0 %v41
  %88 = vmatprep.subr.mxu0 0.0
  %89 = vmatpush1.msra.mxu0 %v42
  %90 = vmatprep.subr.mxu0 0.0
  %91 = vmatpush1.msra.mxu0 %v43
  %92 = vmatprep.subr.mxu0 0.0
  %93 = vmatpush1.msra.mxu0 %v44
  %94 = vmatprep.subr.mxu0 0.0
  %95 = vmatpush1.msra.mxu0 %v45
  %96 = vmatprep.subr.mxu0 0.0
  %97 = vmatpush1.msra.mxu0 %v46
  %98 = vmatprep.subr.mxu0 0.0
  %99 = vmatpush1.msra.mxu0 %v47
  %100 = vmatprep.subr.mxu0 0.0
  %101 = vmatpush1.msra.mxu0 %v48
  %102 = vmatprep.subr.mxu0 0.0
  %103 = vmatpush1.msra.mxu0 %v49
  %104 = vmatprep.subr.mxu0 0.0
  %105 = vmatpush1.msra.mxu0 %v50
  %106 = vmatprep.subr.mxu0 0.0
  %107 = vmatpush1.msra.mxu0 %v51
  %108 = vmatprep.subr.mxu0 0.0
  %109 = vmatpush1.msra.mxu0 0.0
  %110 = vmatprep.subr.mxu0 0.0
  %111 = vmatpush1.msra.mxu0 0.0
  %112 = vmatprep.subr.mxu0 0.0
  %113 = vmatpush1.msra.mxu0 0.0
  %114 = vmatprep.subr.mxu0 0.0
  %115 = vmatpush1.msra.mxu0 0.0
  %116 = vmatprep.subr.mxu0 0.0
  %117 = vmatpush1.msra.mxu0 0.0
  %118 = vmatprep.subr.mxu0 0.0
  %119 = vmatpush1.msra.mxu0 0.0
  %120 = vmatprep.subr.mxu0 0.0
  %121 = vmatpush1.msra.mxu0 0.0
  %122 = vmatprep.subr.mxu0 0.0
  %123 = vmatpush1.msra.mxu0 0.0
  %124 = vmatprep.subr.mxu0 0.0
  %125 = vmatpush1.msra.mxu0 0.0
  %126 = vmatprep.subr.mxu0 0.0
  %127 = vmatpush1.msra.mxu0 0.0
  %128 = vmatprep.subr.mxu0 0.0
  %129 = vmatpush1.msra.mxu0 0.0
  %130 = vmatprep.subr.mxu0 0.0
  %131 = vmatpush1.msra.mxu0 0.0
  %132 = vmatprep.subr.mxu0 0.0
  %133 = vmatpush1.msra.mxu0 0.0
  %134 = vmatprep.subr.mxu0 0.0
  %135 = vmatpush1.msra.mxu0 0.0
  %136 = vmatprep.subr.mxu0 0.0
  %137 = vmatpush1.msra.mxu0 0.0
  %138 = vmatprep.subr.mxu0 0.0
  %139 = vmatpush1.msra.mxu0 0.0
  %140 = vmatprep.subr.mxu0 0.0
  %141 = vmatpush1.msra.mxu0 0.0
  %142 = vmatprep.subr.mxu0 0.0
  %143 = vmatpush1.msra.mxu0 0.0
  %144 = vmatprep.subr.mxu0 0.0
  %145 = vmatpush1.msra.mxu0 0.0
  %146 = vmatprep.subr.mxu0 0.0
  %147 = vmatpush1.msra.mxu0 0.0
  %148 = vmatprep.mubr.f32.mxu0 0.0
  %149 = vmatmul.mubr.f32.gmra.mrb[0].mxu0 %v61
  %v150 = vpop.f32.mrb[0].mxu0
  %v151 = vadd.f32 %v57, %v150
  %v152 = vpop.f32.mrb[0].mxu0
  %153 = vmatprep.mubr.f32.mxu0 0.0
  %154 = vmatmul.mubr.f32.gmra.mrb[0].mxu0 %v64
  %v155 = vpop.f32.mrb[0].mxu0
  %v156 = vadd.f32 %v57, %v155
  %v157 = vpop.f32.mrb[0].mxu0
  %158 = vmatprep.mubr.f32.mxu0 0.0
  %159 = vmatmul.mubr.f32.gmra.mrb[0].mxu0 %v67
  %v160 = vpop.f32.mrb[0].mxu0
  %v161 = vadd.f32 %v57, %v160
  %v162 = vpop.f32.mrb[0].mxu0
  %163 = vmatprep.mubr.f32.mxu0 0.0
  %164 = vmatmul.mubr.f32.gmra.mrb[0].mxu0 %v70
  %v165 = vpop.f32.mrb[0].mxu0
  %v166 = vadd.f32 %v57, %v165
  %v167 = vpop.f32.mrb[0].mxu0
  %168 = vmatprep.mubr.f32.mxu0 0.0
  %169 = vmatmul.mubr.f32.gmra.mrb[0].mxu0 %v73
  %v170 = vpop.f32.mrb[0].mxu0
  %v171 = vadd.f32 %v57, %v170
  %v172 = vpop.f32.mrb[0].mxu0
  %173 = vmatprep.mubr.f32.mxu0 0.0
  %174 = vmatmul.mubr.f32.gmra.mrb[0].mxu0 %v76
  %v175 = vpop.f32.mrb[0].mxu0
  %v176 = vadd.f32 %v57, %v175
  %v177 = vpop.f32.mrb[0].mxu0
  %178 = vmatprep.mubr.f32.mxu0 0.0
  %179 = vmatmul.mubr.f32.gmra.mrb[0].mxu0 %v79
  %v180 = vpop.f32.mrb[0].mxu0
  %v181 = vadd.f32 %v57, %v180
  %v182 = vpop.f32.mrb[0].mxu0
  %183 = vmatprep.mubr.f32.mxu0 0.0
  %184 = vmatmul.mubr.f32.gmra.mrb[0].mxu0 %v82
  %v185 = vpop.f32.mrb[0].mxu0
  %v186 = vadd.f32 %v57, %v185
  %v187 = vpop.f32.mrb[0].mxu0
  %188 = vdwg.mxu0
  %v189 = vmax.f32 %v151, 0.0
  %v190 = vmax.f32 %v156, 0.0
  %v191 = vmax.f32 %v161, 0.0
  %v192 = vmax.f32 %v166, 0.0
  %v193 = vmax.f32 %v171, 0.0
  %v194 = vmax.f32 %v176, 0.0
  %v195 = vmax.f32 %v181, 0.0
  %v196 = vmax.f32 %v186, 0.0
  %v197 = vld [vmem:[%s1] sm:$0xff]
  %v198 = vld [vmem:[%s1 + $0x8] sm:$0xff]
  %v199 = vld [vmem:[%s1 + $0x10] sm:$0xff]
  %v200 = vld [vmem:[%s1 + $0x18] sm:$0xff]
  %v201 = vld [vmem:[%s1 + $0x20] sm:$0xff]
  %v202 = vld [vmem:[%s1 + $0x28] sm:$0xff]
  %v203 = vld [vmem:[%s1 + $0x30] sm:$0xff]
  %v204 = vld [vmem:[%s1 + $0x38] sm:$0xff]
  %v205 = vld [vmem:[%s4] sm:$0xff]
  %v206 = vld [vmem:[%s4 + $0x8] sm:$0xff]
  %v207 = vld [vmem:[%s4 + $0x10] sm:$0xff]
  %v208 = vld [vmem:[%s4 + $0x18] sm:$0xff]
  %v209 = vld [vmem:[%s5] sm:$0x1]
  %v211 = vlaneseq
  %v212 = vshrl.u32 %v211, 7
  %v213 = vsub.s32 0, %v212
  %v214 = vrot.slane %v209, %v213
  %vm216 = vcmask 261120
  %v218 = vsel %vm216, %v197, 0
  %v221 = vsel %vm216, %v198, 0
  %v224 = vsel %vm216, %v199, 0
  %v227 = vsel %vm216, %v200, 0
  %v230 = vsel %vm216, %v201, 0
  %v233 = vsel %vm216, %v202, 0
  %v236 = vsel %vm216, %v203, 0
  %v239 = vsel %vm216, %v204, 0
  %241 = vmatprep.subr.mxu0 0.0
  %242 = vmatpush1.msra.mxu0 %v205
  %243 = vmatprep.subr.mxu0 0.0
  %244 = vmatpush1.msra.mxu0 %v206
  %245 = vmatprep.subr.mxu0 0.0
  %246 = vmatpush1.msra.mxu0 %v207
  %247 = vmatprep.subr.mxu0 0.0
  %248 = vmatpush1.msra.mxu0 %v208
  %249 = vmatprep.subr.mxu0 0.0
  %250 = vmatpush1.msra.mxu0 0.0
  %251 = vmatprep.subr.mxu0 0.0
  %252 = vmatpush1.msra.mxu0 0.0
  %253 = vmatprep.subr.mxu0 0.0
  %254 = vmatpush1.msra.mxu0 0.0
  %255 = vmatprep.subr.mxu0 0.0
  %256 = vmatpush1.msra.mxu0 0.0
  %257 = vmatprep.subr.mxu0 0.0
  %258 = vmatpush1.msra.mxu0 0.0
  %259 = vmatprep.subr.mxu0 0.0
  %260 = vmatpush1.msra.mxu0 0.0
  %261 = vmatprep.subr.mxu0 0.0
  %262 = vmatpush1.msra.mxu0 0.0
  %263 = vmatprep.subr.mxu0 0.0
  %264 = vmatpush1.msra.mxu0 0.0
  %265 = vmatprep.subr.mxu0 0.0
  %266 = vmatpush1.msra.mxu0 0.0
  %267 = vmatprep.subr.mxu0 0.0
  %268 = vmatpush1.msra.mxu0 0.0
  %269 = vmatprep.subr.mxu0 0.0
  %270 = vmatpush1.msra.mxu0 0.0
  %271 = vmatprep.subr.mxu0 0.0
  %272 = vmatpush1.msra.mxu0 0.0
  %273 = vmatprep.subr.mxu0 0.0
  %274 = vmatpush1.msra.mxu0 0.0
  %275 = vmatprep.subr.mxu0 0.0
  %276 = vmatpush1.msra.mxu0 0.0
  %277 = vmatprep.subr.mxu0 0.0
  %278 = vmatpush1.msra.mxu0 0.0
  %279 = vmatprep.subr.mxu0 0.0
  %280 = vmatpush1.msra.mxu0 0.0
  %281 = vmatprep.subr.mxu0 0.0
  %282 = vmatpush1.msra.mxu0 0.0
  %283 = vmatprep.subr.mxu0 0.0
  %284 = vmatpush1.msra.mxu0 0.0
  %285 = vmatprep.subr.mxu0 0.0
  %286 = vmatpush1.msra.mxu0 0.0
  %287 = vmatprep.subr.mxu0 0.0
  %288 = vmatpush1.msra.mxu0 0.0
  %289 = vmatprep.subr.mxu0 0.0
  %290 = vmatpush1.msra.mxu0 0.0
  %291 = vmatprep.subr.mxu0 0.0
  %292 = vmatpush1.msra.mxu0 0.0
  %293 = vmatprep.subr.mxu0 0.0
  %294 = vmatpush1.msra.mxu0 0.0
  %295 = vmatprep.subr.mxu0 0.0
  %296 = vmatpush1.msra.mxu0 0.0
  %297 = vmatprep.subr.mxu0 0.0
  %298 = vmatpush1.msra.mxu0 0.0
  %299 = vmatprep.subr.mxu0 0.0
  %300 = vmatpush1.msra.mxu0 0.0
  %301 = vmatprep.subr.mxu0 0.0
  %302 = vmatpush1.msra.mxu0 0.0
  %303 = vmatprep.subr.mxu0 0.0
  %304 = vmatpush1.msra.mxu0 0.0
  %305 = vmatprep.mubr.f32.mxu0 0.0
  %306 = vmatmul.mubr.f32.gmra.mrb[0].mxu0 %v218
  %v307 = vpop.f32.mrb[0].mxu0
  %v308 = vadd.f32 %v214, %v307
  %v309 = vpop.f32.mrb[0].mxu0
  %310 = vmatprep.mubr.f32.mxu0 0.0
  %311 = vmatmul.mubr.f32.gmra.mrb[0].mxu0 %v221
  %v312 = vpop.f32.mrb[0].mxu0
  %v313 = vadd.f32 %v214, %v312
  %v314 = vpop.f32.mrb[0].mxu0
  %315 = vmatprep.mubr.f32.mxu0 0.0
  %316 = vmatmul.mubr.f32.gmra.mrb[0].mxu0 %v224
  %v317 = vpop.f32.mrb[0].mxu0
  %v318 = vadd.f32 %v214, %v317
  %v319 = vpop.f32.mrb[0].mxu0
  %320 = vmatprep.mubr.f32.mxu0 0.0
  %321 = vmatmul.mubr.f32.gmra.mrb[0].mxu0 %v227
  %v322 = vpop.f32.mrb[0].mxu0
  %v323 = vadd.f32 %v214, %v322
  %v324 = vpop.f32.mrb[0].mxu0
  %325 = vmatprep.mubr.f32.mxu0 0.0
  %326 = vmatmul.mubr.f32.gmra.mrb[0].mxu0 %v230
  %v327 = vpop.f32.mrb[0].mxu0
  %v328 = vadd.f32 %v214, %v327
  %v329 = vpop.f32.mrb[0].mxu0
  %330 = vmatprep.mubr.f32.mxu0 0.0
  %331 = vmatmul.mubr.f32.gmra.mrb[0].mxu0 %v233
  %v332 = vpop.f32.mrb[0].mxu0
  %v333 = vadd.f32 %v214, %v332
  %v334 = vpop.f32.mrb[0].mxu0
  %335 = vmatprep.mubr.f32.mxu0 0.0
  %336 = vmatmul.mubr.f32.gmra.mrb[0].mxu0 %v236
  %v337 = vpop.f32.mrb[0].mxu0
  %v338 = vadd.f32 %v214, %v337
  %v339 = vpop.f32.mrb[0].mxu0
  %340 = vmatprep.mubr.f32.mxu0 0.0
  %341 = vmatmul.mubr.f32.gmra.mrb[0].mxu0 %v239
  %v342 = vpop.f32.mrb[0].mxu0
  %v343 = vadd.f32 %v214, %v342
  %v344 = vpop.f32.mrb[0].mxu0
  %345 = vdwg.mxu0
  %v346 = vmax.f32 %v308, 0.0
  %v347 = vmax.f32 %v313, 0.0
  %v348 = vmax.f32 %v318, 0.0
  %v349 = vmax.f32 %v323, 0.0
  %v350 = vmax.f32 %v328, 0.0
  %v351 = vmax.f32 %v333, 0.0
  %v352 = vmax.f32 %v338, 0.0
  %v353 = vmax.f32 %v343, 0.0
  %v354 = vld [vmem:[%s8] sm:$0xff]
  %v355 = vld [vmem:[%s8 + $0x8] sm:$0xff]
  %v356 = vld [vmem:[%s8 + $0x10] sm:$0xff]
  %v357 = vld [vmem:[%s8 + $0x18] sm:$0xff]
  %v358 = vld [vmem:[%s8 + $0x20] sm:$0xff]
  %v359 = vld [vmem:[%s8 + $0x28] sm:$0xff]
  %v360 = vld [vmem:[%s8 + $0x30] sm:$0xff]
  %v361 = vld [vmem:[%s8 + $0x38] sm:$0xff]
  %vm362 = vcmask 523264
  %v364 = vsel %vm362, %v354, 0
  %v367 = vsel %vm362, %v355, 0
  %v370 = vsel %vm362, %v356, 0
  %v373 = vsel %vm362, %v357, 0
  %v376 = vsel %vm362, %v358, 0
  %v379 = vsel %vm362, %v359, 0
  %v382 = vsel %vm362, %v360, 0
  %v385 = vsel %vm362, %v361, 0
  %387 = vmatprep.subr.mxu0 0.0
  %388 = vmatpush1.msra.mxu0 %v189
  %389 = vmatprep.subr.mxu0 0.0
  %390 = vmatpush1.msra.mxu0 %v190
  %391 = vmatprep.subr.mxu0 0.0
  %392 = vmatpush1.msra.mxu0 %v191
  %393 = vmatprep.subr.mxu0 0.0
  %394 = vmatpush1.msra.mxu0 %v192
  %395 = vmatprep.subr.mxu0 0.0
  %396 = vmatpush1.msra.mxu0 %v193
  %397 = vmatprep.subr.mxu0 0.0
  %398 = vmatpush1.msra.mxu0 %v194
  %399 = vmatprep.subr.mxu0 0.0
  %400 = vmatpush1.msra.mxu0 %v195
  %401 = vmatprep.subr.mxu0 0.0
  %402 = vmatpush1.msra.mxu0 %v196
  %403 = vmatprep.subr.mxu0 0.0
  %404 = vmatpush1.msra.mxu0 0.0
  %405 = vmatprep.subr.mxu0 0.0
  %406 = vmatpush1.msra.mxu0 0.0
  %407 = vmatprep.subr.mxu0 0.0
  %408 = vmatpush1.msra.mxu0 0.0
  %409 = vmatprep.subr.mxu0 0.0
  %410 = vmatpush1.msra.mxu0 0.0
  %411 = vmatprep.subr.mxu0 0.0
  %412 = vmatpush1.msra.mxu0 0.0
  %413 = vmatprep.subr.mxu0 0.0
  %414 = vmatpush1.msra.mxu0 0.0
  %415 = vmatprep.subr.mxu0 0.0
  %416 = vmatpush1.msra.mxu0 0.0
  %417 = vmatprep.subr.mxu0 0.0
  %418 = vmatpush1.msra.mxu0 0.0
  %419 = vmatprep.subr.mxu0 0.0
  %420 = vmatpush1.msra.mxu0 0.0
  %421 = vmatprep.subr.mxu0 0.0
  %422 = vmatpush1.msra.mxu0 0.0
  %423 = vmatprep.subr.mxu0 0.0
  %424 = vmatpush1.msra.mxu0 0.0
  %425 = vmatprep.subr.mxu0 0.0
  %426 = vmatpush1.msra.mxu0 0.0
  %427 = vmatprep.subr.mxu0 0.0
  %428 = vmatpush1.msra.mxu0 0.0
  %429 = vmatprep.subr.mxu0 0.0
  %430 = vmatpush1.msra.mxu0 0.0
  %431 = vmatprep.subr.mxu0 0.0
  %432 = vmatpush1.msra.mxu0 0.0
  %433 = vmatprep.subr.mxu0 0.0
  %434 = vmatpush1.msra.mxu0 0.0
  %435 = vmatprep.subr.mxu0 0.0
  %436 = vmatpush1.msra.mxu0 0.0
  %437 = vmatprep.subr.mxu0 0.0
  %438 = vmatpush1.msra.mxu0 0.0
  %439 = vmatprep.subr.mxu0 0.0
  %440 = vmatpush1.msra.mxu0 0.0
  %441 = vmatprep.subr.mxu0 0.0
  %442 = vmatpush1.msra.mxu0 0.0
  %443 = vmatprep.subr.mxu0 0.0
  %444 = vmatpush1.msra.mxu0 0.0
  %445 = vmatprep.subr.mxu0 0.0
  %446 = vmatpush1.msra.mxu0 0.0
  %447 = vmatprep.subr.mxu0 0.0
  %448 = vmatpush1.msra.mxu0 0.0
  %449 = vmatprep.subr.mxu0 0.0
  %450 = vmatpush1.msra.mxu0 0.0
  %451 = vmatprep.mubr.f32.mxu0 0.0
  %452 = vmatmul.mubr.f32.gmra.mrb[0].mxu0 %v364
  %v453 = vpop.f32.mrb[0].mxu0
  %v454 = vadd.f32 0.0, %v453
  %v455 = vpop.f32.mrb[0].mxu0
  %456 = vmatprep.mubr.f32.mxu0 0.0
  %457 = vmatmul.mubr.f32.gmra.mrb[0].mxu0 %v367
  %v458 = vpop.f32.mrb[0].mxu0
  %v459 = vadd.f32 0.0, %v458
  %v460 = vpop.f32.mrb[0].mxu0
  %461 = vmatprep.mubr.f32.mxu0 0.0
  %462 = vmatmul.mubr.f32.gmra.mrb[0].mxu0 %v370
  %v463 = vpop.f32.mrb[0].mxu0
  %v464 = vadd.f32 0.0, %v463
  %v465 = vpop.f32.mrb[0].mxu0
  %466 = vmatprep.mubr.f32.mxu0 0.0
  %467 = vmatmul.mubr.f32.gmra.mrb[0].mxu0 %v373
  %v468 = vpop.f32.mrb[0].mxu0
  %v469 = vadd.f32 0.0, %v468
  %v470 = vpop.f32.mrb[0].mxu0
  %471 = vmatprep.mubr.f32.mxu0 0.0
  %472 = vmatmul.mubr.f32.gmra.mrb[0].mxu0 %v376
  %v473 = vpop.f32.mrb[0].mxu0
  %v474 = vadd.f32 0.0, %v473
  %v475 = vpop.f32.mrb[0].mxu0
  %476 = vmatprep.mubr.f32.mxu0 0.0
  %477 = vmatmul.mubr.f32.gmra.mrb[0].mxu0 %v379
  %v478 = vpop.f32.mrb[0].mxu0
  %v479 = vadd.f32 0.0, %v478
  %v480 = vpop.f32.mrb[0].mxu0
  %481 = vmatprep.mubr.f32.mxu0 0.0
  %482 = vmatmul.mubr.f32.gmra.mrb[0].mxu0 %v382
  %v483 = vpop.f32.mrb[0].mxu0
  %v484 = vadd.f32 0.0, %v483
  %v485 = vpop.f32.mrb[0].mxu0
  %486 = vmatprep.mubr.f32.mxu0 0.0
  %487 = vmatmul.mubr.f32.gmra.mrb[0].mxu0 %v385
  %v488 = vpop.f32.mrb[0].mxu0
  %v489 = vadd.f32 0.0, %v488
  %v490 = vpop.f32.mrb[0].mxu0
  %491 = vdwg.mxu0
  %v492 = vld [vmem:[%s6] sm:$0xff]
  %v493 = vld [vmem:[%s6 + $0x8] sm:$0xff]
  %v494 = vld [vmem:[%s6 + $0x10] sm:$0xff]
  %v495 = vld [vmem:[%s6 + $0x18] sm:$0xff]
  %v496 = vld [vmem:[%s6 + $0x20] sm:$0xff]
  %v497 = vld [vmem:[%s6 + $0x28] sm:$0xff]
  %v498 = vld [vmem:[%s6 + $0x30] sm:$0xff]
  %v499 = vld [vmem:[%s6 + $0x38] sm:$0xff]
  %s500 = scalar_lea.vmem %s8, 64
  %v501 = vld [vmem:[%s500] sm:$0xff]
  %v502 = vld [vmem:[%s500 + $0x8] sm:$0xff]
  %v503 = vld [vmem:[%s500 + $0x10] sm:$0xff]
  %v504 = vld [vmem:[%s500 + $0x18] sm:$0xff]
  %v505 = vld [vmem:[%s500 + $0x20] sm:$0xff]
  %v506 = vld [vmem:[%s500 + $0x28] sm:$0xff]
  %v507 = vld [vmem:[%s500 + $0x30] sm:$0xff]
  %v508 = vld [vmem:[%s500 + $0x38] sm:$0xff]
  %v510 = vsel %vm362, %v501, 0
  %v513 = vsel %vm362, %v502, 0
  %v516 = vsel %vm362, %v503, 0
  %v519 = vsel %vm362, %v504, 0
  %v522 = vsel %vm362, %v505, 0
  %v525 = vsel %vm362, %v506, 0
  %v528 = vsel %vm362, %v507, 0
  %v531 = vsel %vm362, %v508, 0
  %533 = vmatprep.subr.mxu0 0.0
  %534 = vmatpush1.msra.mxu0 %v189
  %535 = vmatprep.subr.mxu0 0.0
  %536 = vmatpush1.msra.mxu0 %v190
  %537 = vmatprep.subr.mxu0 0.0
  %538 = vmatpush1.msra.mxu0 %v191
  %539 = vmatprep.subr.mxu0 0.0
  %540 = vmatpush1.msra.mxu0 %v192
  %541 = vmatprep.subr.mxu0 0.0
  %542 = vmatpush1.msra.mxu0 %v193
  %543 = vmatprep.subr.mxu0 0.0
  %544 = vmatpush1.msra.mxu0 %v194
  %545 = vmatprep.subr.mxu0 0.0
  %546 = vmatpush1.msra.mxu0 %v195
  %547 = vmatprep.subr.mxu0 0.0
  %548 = vmatpush1.msra.mxu0 %v196
  %549 = vmatprep.subr.mxu0 0.0
  %550 = vmatpush1.msra.mxu0 0.0
  %551 = vmatprep.subr.mxu0 0.0
  %552 = vmatpush1.msra.mxu0 0.0
  %553 = vmatprep.subr.mxu0 0.0
  %554 = vmatpush1.msra.mxu0 0.0
  %555 = vmatprep.subr.mxu0 0.0
  %556 = vmatpush1.msra.mxu0 0.0
  %557 = vmatprep.subr.mxu0 0.0
  %558 = vmatpush1.msra.mxu0 0.0
  %559 = vmatprep.subr.mxu0 0.0
  %560 = vmatpush1.msra.mxu0 0.0
  %561 = vmatprep.subr.mxu0 0.0
  %562 = vmatpush1.msra.mxu0 0.0
  %563 = vmatprep.subr.mxu0 0.0
  %564 = vmatpush1.msra.mxu0 0.0
  %565 = vmatprep.subr.mxu0 0.0
  %566 = vmatpush1.msra.mxu0 0.0
  %567 = vmatprep.subr.mxu0 0.0
  %568 = vmatpush1.msra.mxu0 0.0
  %569 = vmatprep.subr.mxu0 0.0
  %570 = vmatpush1.msra.mxu0 0.0
  %571 = vmatprep.subr.mxu0 0.0
  %572 = vmatpush1.msra.mxu0 0.0
  %573 = vmatprep.subr.mxu0 0.0
  %574 = vmatpush1.msra.mxu0 0.0
  %575 = vmatprep.subr.mxu0 0.0
  %576 = vmatpush1.msra.mxu0 0.0
  %577 = vmatprep.subr.mxu0 0.0
  %578 = vmatpush1.msra.mxu0 0.0
  %579 = vmatprep.subr.mxu0 0.0
  %580 = vmatpush1.msra.mxu0 0.0
  %581 = vmatprep.subr.mxu0 0.0
  %582 = vmatpush1.msra.mxu0 0.0
  %583 = vmatprep.subr.mxu0 0.0
  %584 = vmatpush1.msra.mxu0 0.0
  %585 = vmatprep.subr.mxu0 0.0
  %586 = vmatpush1.msra.mxu0 0.0
  %587 = vmatprep.subr.mxu0 0.0
  %588 = vmatpush1.msra.mxu0 0.0
  %589 = vmatprep.subr.mxu0 0.0
  %590 = vmatpush1.msra.mxu0 0.0
  %591 = vmatprep.subr.mxu0 0.0
  %592 = vmatpush1.msra.mxu0 0.0
  %593 = vmatprep.subr.mxu0 0.0
  %594 = vmatpush1.msra.mxu0 0.0
  %595 = vmatprep.subr.mxu0 0.0
  %596 = vmatpush1.msra.mxu0 0.0
  %597 = vmatprep.mubr.f32.mxu0 0.0
  %598 = vmatmul.mubr.f32.gmra.mrb[0].mxu0 %v510
  %v599 = vpop.f32.mrb[0].mxu0
  %v600 = vadd.f32 0.0, %v599
  %v601 = vpop.f32.mrb[0].mxu0
  %602 = vmatprep.mubr.f32.mxu0 0.0
  %603 = vmatmul.mubr.f32.gmra.mrb[0].mxu0 %v513
  %v604 = vpop.f32.mrb[0].mxu0
  %v605 = vadd.f32 0.0, %v604
  %v606 = vpop.f32.mrb[0].mxu0
  %607 = vmatprep.mubr.f32.mxu0 0.0
  %608 = vmatmul.mubr.f32.gmra.mrb[0].mxu0 %v516
  %v609 = vpop.f32.mrb[0].mxu0
  %v610 = vadd.f32 0.0, %v609
  %v611 = vpop.f32.mrb[0].mxu0
  %612 = vmatprep.mubr.f32.mxu0 0.0
  %613 = vmatmul.mubr.f32.gmra.mrb[0].mxu0 %v519
  %v614 = vpop.f32.mrb[0].mxu0
  %v615 = vadd.f32 0.0, %v614
  %v616 = vpop.f32.mrb[0].mxu0
  %617 = vmatprep.mubr.f32.mxu0 0.0
  %618 = vmatmul.mubr.f32.gmra.mrb[0].mxu0 %v522
  %v619 = vpop.f32.mrb[0].mxu0
  %v620 = vadd.f32 0.0, %v619
  %v621 = vpop.f32.mrb[0].mxu0
  %622 = vmatprep.mubr.f32.mxu0 0.0
  %623 = vmatmul.mubr.f32.gmra.mrb[0].mxu0 %v525
  %v624 = vpop.f32.mrb[0].mxu0
  %v625 = vadd.f32 0.0, %v624
  %v626 = vpop.f32.mrb[0].mxu0
  %627 = vmatprep.mubr.f32.mxu0 0.0
  %628 = vmatmul.mubr.f32.gmra.mrb[0].mxu0 %v528
  %v629 = vpop.f32.mrb[0].mxu0
  %v630 = vadd.f32 0.0, %v629
  %v631 = vpop.f32.mrb[0].mxu0
  %632 = vmatprep.mubr.f32.mxu0 0.0
  %633 = vmatmul.mubr.f32.gmra.mrb[0].mxu0 %v531
  %v634 = vpop.f32.mrb[0].mxu0
  %v635 = vadd.f32 0.0, %v634
  %v636 = vpop.f32.mrb[0].mxu0
  %637 = vdwg.mxu0
  %s638 = scalar_lea.vmem %s6, 64
  %v639 = vld [vmem:[%s638] sm:$0xff]
  %v640 = vld [vmem:[%s638 + $0x8] sm:$0xff]
  %v641 = vld [vmem:[%s638 + $0x10] sm:$0xff]
  %v642 = vld [vmem:[%s638 + $0x18] sm:$0xff]
  %v643 = vld [vmem:[%s638 + $0x20] sm:$0xff]
  %v644 = vld [vmem:[%s638 + $0x28] sm:$0xff]
  %v645 = vld [vmem:[%s638 + $0x30] sm:$0xff]
  %v646 = vld [vmem:[%s638 + $0x38] sm:$0xff]
  %v648 = vsel %vm362, %v600, 0
  %v651 = vsel %vm362, %v605, 0
  %v654 = vsel %vm362, %v610, 0
  %v657 = vsel %vm362, %v615, 0
  %v660 = vsel %vm362, %v620, 0
  %v663 = vsel %vm362, %v625, 0
  %v666 = vsel %vm362, %v630, 0
  %v669 = vsel %vm362, %v635, 0
  %671 = vmatprep.subr.mxu0 0.0
  %672 = vmatpush1.msra.mxu0 %v639
  %673 = vmatprep.subr.mxu0 0.0
  %674 = vmatpush1.msra.mxu0 %v640
  %675 = vmatprep.subr.mxu0 0.0
  %676 = vmatpush1.msra.mxu0 %v641
  %677 = vmatprep.subr.mxu0 0.0
  %678 = vmatpush1.msra.mxu0 %v642
  %679 = vmatprep.subr.mxu0 0.0
  %680 = vmatpush1.msra.mxu0 %v643
  %681 = vmatprep.subr.mxu0 0.0
  %682 = vmatpush1.msra.mxu0 %v644
  %683 = vmatprep.subr.mxu0 0.0
  %684 = vmatpush1.msra.mxu0 %v645
  %685 = vmatprep.subr.mxu0 0.0
  %686 = vmatpush1.msra.mxu0 %v646
  %687 = vmatprep.subr.mxu0 0.0
  %688 = vmatpush1.msra.mxu0 0.0
  %689 = vmatprep.subr.mxu0 0.0
  %690 = vmatpush1.msra.mxu0 0.0
  %691 = vmatprep.subr.mxu0 0.0
  %692 = vmatpush1.msra.mxu0 0.0
  %693 = vmatprep.subr.mxu0 0.0
  %694 = vmatpush1.msra.mxu0 0.0
  %695 = vmatprep.subr.mxu0 0.0
  %696 = vmatpush1.msra.mxu0 0.0
  %697 = vmatprep.subr.mxu0 0.0
  %698 = vmatpush1.msra.mxu0 0.0
  %699 = vmatprep.subr.mxu0 0.0
  %700 = vmatpush1.msra.mxu0 0.0
  %701 = vmatprep.subr.mxu0 0.0
  %702 = vmatpush1.msra.mxu0 0.0
  %703 = vmatprep.subr.mxu0 0.0
  %704 = vmatpush1.msra.mxu0 0.0
  %705 = vmatprep.subr.mxu0 0.0
  %706 = vmatpush1.msra.mxu0 0.0
  %707 = vmatprep.subr.mxu0 0.0
  %708 = vmatpush1.msra.mxu0 0.0
  %709 = vmatprep.subr.mxu0 0.0
  %710 = vmatpush1.msra.mxu0 0.0
  %711 = vmatprep.subr.mxu0 0.0
  %712 = vmatpush1.msra.mxu0 0.0
  %713 = vmatprep.subr.mxu0 0.0
  %714 = vmatpush1.msra.mxu0 0.0
  %715 = vmatprep.subr.mxu0 0.0
  %716 = vmatpush1.msra.mxu0 0.0
  %717 = vmatprep.subr.mxu0 0.0
  %718 = vmatpush1.msra.mxu0 0.0
  %719 = vmatprep.subr.mxu0 0.0
  %720 = vmatpush1.msra.mxu0 0.0
  %721 = vmatprep.subr.mxu0 0.0
  %722 = vmatpush1.msra.mxu0 0.0
  %723 = vmatprep.subr.mxu0 0.0
  %724 = vmatpush1.msra.mxu0 0.0
  %725 = vmatprep.subr.mxu0 0.0
  %726 = vmatpush1.msra.mxu0 0.0
  %727 = vmatprep.subr.mxu0 0.0
  %728 = vmatpush1.msra.mxu0 0.0
  %729 = vmatprep.subr.mxu0 0.0
  %730 = vmatpush1.msra.mxu0 0.0
  %731 = vmatprep.subr.mxu0 0.0
  %732 = vmatpush1.msra.mxu0 0.0
  %733 = vmatprep.subr.mxu0 0.0
  %734 = vmatpush1.msra.mxu0 0.0
  %735 = vmatprep.mubr.f32.mxu0 0.0
  %736 = vmatmul.mubr.f32.gmra.mrb[0].mxu0 %v648
  %v737 = vpop.f32.mrb[0].mxu0
  %v738 = vadd.f32 0.0, %v737
  %v739 = vpop.f32.mrb[0].mxu0
  %740 = vmatprep.mubr.f32.mxu0 0.0
  %741 = vmatmul.mubr.f32.gmra.mrb[0].mxu0 %v651
  %v742 = vpop.f32.mrb[0].mxu0
  %v743 = vadd.f32 0.0, %v742
  %v744 = vpop.f32.mrb[0].mxu0
  %745 = vmatprep.mubr.f32.mxu0 0.0
  %746 = vmatmul.mubr.f32.gmra.mrb[0].mxu0 %v654
  %v747 = vpop.f32.mrb[0].mxu0
  %v748 = vadd.f32 0.0, %v747
  %v749 = vpop.f32.mrb[0].mxu0
  %750 = vmatprep.mubr.f32.mxu0 0.0
  %751 = vmatmul.mubr.f32.gmra.mrb[0].mxu0 %v657
  %v752 = vpop.f32.mrb[0].mxu0
  %v753 = vadd.f32 0.0, %v752
  %v754 = vpop.f32.mrb[0].mxu0
  %755 = vmatprep.mubr.f32.mxu0 0.0
  %756 = vmatmul.mubr.f32.gmra.mrb[0].mxu0 %v660
  %v757 = vpop.f32.mrb[0].mxu0
  %v758 = vadd.f32 0.0, %v757
  %v759 = vpop.f32.mrb[0].mxu0
  %760 = vmatprep.mubr.f32.mxu0 0.0
  %761 = vmatmul.mubr.f32.gmra.mrb[0].mxu0 %v663
  %v762 = vpop.f32.mrb[0].mxu0
  %v763 = vadd.f32 0.0, %v762
  %v764 = vpop.f32.mrb[0].mxu0
  %765 = vmatprep.mubr.f32.mxu0 0.0
  %766 = vmatmul.mubr.f32.gmra.mrb[0].mxu0 %v666
  %v767 = vpop.f32.mrb[0].mxu0
  %v768 = vadd.f32 0.0, %v767
  %v769 = vpop.f32.mrb[0].mxu0
  %770 = vmatprep.mubr.f32.mxu0 0.0
  %771 = vmatmul.mubr.f32.gmra.mrb[0].mxu0 %v669
  %v772 = vpop.f32.mrb[0].mxu0
  %v773 = vadd.f32 0.0, %v772
  %v774 = vpop.f32.mrb[0].mxu0
  %775 = vdwg.mxu0
  %v777 = vsel %vm362, %v454, 0
  %v780 = vsel %vm362, %v459, 0
  %v783 = vsel %vm362, %v464, 0
  %v786 = vsel %vm362, %v469, 0
  %v789 = vsel %vm362, %v474, 0
  %v792 = vsel %vm362, %v479, 0
  %v795 = vsel %vm362, %v484, 0
  %v798 = vsel %vm362, %v489, 0
  %800 = vmatprep.subr.mxu0 0.0
  %801 = vmatpush1.msra.mxu0 %v492
  %802 = vmatprep.subr.mxu0 0.0
  %803 = vmatpush1.msra.mxu0 %v493
  %804 = vmatprep.subr.mxu0 0.0
  %805 = vmatpush1.msra.mxu0 %v494
  %806 = vmatprep.subr.mxu0 0.0
  %807 = vmatpush1.msra.mxu0 %v495
  %808 = vmatprep.subr.mxu0 0.0
  %809 = vmatpush1.msra.mxu0 %v496
  %810 = vmatprep.subr.mxu0 0.0
  %811 = vmatpush1.msra.mxu0 %v497
  %812 = vmatprep.subr.mxu0 0.0
  %813 = vmatpush1.msra.mxu0 %v498
  %814 = vmatprep.subr.mxu0 0.0
  %815 = vmatpush1.msra.mxu0 %v499
  %816 = vmatprep.subr.mxu0 0.0
  %817 = vmatpush1.msra.mxu0 0.0
  %818 = vmatprep.subr.mxu0 0.0
  %819 = vmatpush1.msra.mxu0 0.0
  %820 = vmatprep.subr.mxu0 0.0
  %821 = vmatpush1.msra.mxu0 0.0
  %822 = vmatprep.subr.mxu0 0.0
  %823 = vmatpush1.msra.mxu0 0.0
  %824 = vmatprep.subr.mxu0 0.0
  %825 = vmatpush1.msra.mxu0 0.0
  %826 = vmatprep.subr.mxu0 0.0
  %827 = vmatpush1.msra.mxu0 0.0
  %828 = vmatprep.subr.mxu0 0.0
  %829 = vmatpush1.msra.mxu0 0.0
  %830 = vmatprep.subr.mxu0 0.0
  %831 = vmatpush1.msra.mxu0 0.0
  %832 = vmatprep.subr.mxu0 0.0
  %833 = vmatpush1.msra.mxu0 0.0
  %834 = vmatprep.subr.mxu0 0.0
  %835 = vmatpush1.msra.mxu0 0.0
  %836 = vmatprep.subr.mxu0 0.0
  %837 = vmatpush1.msra.mxu0 0.0
  %838 = vmatprep.subr.mxu0 0.0
  %839 = vmatpush1.msra.mxu0 0.0
  %840 = vmatprep.subr.mxu0 0.0
  %841 = vmatpush1.msra.mxu0 0.0
  %842 = vmatprep.subr.mxu0 0.0
  %843 = vmatpush1.msra.mxu0 0.0
  %844 = vmatprep.subr.mxu0 0.0
  %845 = vmatpush1.msra.mxu0 0.0
  %846 = vmatprep.subr.mxu0 0.0
  %847 = vmatpush1.msra.mxu0 0.0
  %848 = vmatprep.subr.mxu0 0.0
  %849 = vmatpush1.msra.mxu0 0.0
  %850 = vmatprep.subr.mxu0 0.0
  %851 = vmatpush1.msra.mxu0 0.0
  %852 = vmatprep.subr.mxu0 0.0
  %853 = vmatpush1.msra.mxu0 0.0
  %854 = vmatprep.subr.mxu0 0.0
  %855 = vmatpush1.msra.mxu0 0.0
  %856 = vmatprep.subr.mxu0 0.0
  %857 = vmatpush1.msra.mxu0 0.0
  %858 = vmatprep.subr.mxu0 0.0
  %859 = vmatpush1.msra.mxu0 0.0
  %860 = vmatprep.subr.mxu0 0.0
  %861 = vmatpush1.msra.mxu0 0.0
  %862 = vmatprep.subr.mxu0 0.0
  %863 = vmatpush1.msra.mxu0 0.0
  %864 = vmatprep.mubr.f32.mxu0 0.0
  %865 = vmatmul.mubr.f32.gmra.mrb[0].mxu0 %v777
  %v866 = vpop.f32.mrb[0].mxu0
  %v867 = vadd.f32 %v738, %v866
  %v868 = vpop.f32.mrb[0].mxu0
  %869 = vmatprep.mubr.f32.mxu0 0.0
  %870 = vmatmul.mubr.f32.gmra.mrb[0].mxu0 %v780
  %v871 = vpop.f32.mrb[0].mxu0
  %v872 = vadd.f32 %v743, %v871
  %v873 = vpop.f32.mrb[0].mxu0
  %874 = vmatprep.mubr.f32.mxu0 0.0
  %875 = vmatmul.mubr.f32.gmra.mrb[0].mxu0 %v783
  %v876 = vpop.f32.mrb[0].mxu0
  %v877 = vadd.f32 %v748, %v876
  %v878 = vpop.f32.mrb[0].mxu0
  %879 = vmatprep.mubr.f32.mxu0 0.0
  %880 = vmatmul.mubr.f32.gmra.mrb[0].mxu0 %v786
  %v881 = vpop.f32.mrb[0].mxu0
  %v882 = vadd.f32 %v753, %v881
  %v883 = vpop.f32.mrb[0].mxu0
  %884 = vmatprep.mubr.f32.mxu0 0.0
  %885 = vmatmul.mubr.f32.gmra.mrb[0].mxu0 %v789
  %v886 = vpop.f32.mrb[0].mxu0
  %v887 = vadd.f32 %v758, %v886
  %v888 = vpop.f32.mrb[0].mxu0
  %889 = vmatprep.mubr.f32.mxu0 0.0
  %890 = vmatmul.mubr.f32.gmra.mrb[0].mxu0 %v792
  %v891 = vpop.f32.mrb[0].mxu0
  %v892 = vadd.f32 %v763, %v891
  %v893 = vpop.f32.mrb[0].mxu0
  %894 = vmatprep.mubr.f32.mxu0 0.0
  %895 = vmatmul.mubr.f32.gmra.mrb[0].mxu0 %v795
  %v896 = vpop.f32.mrb[0].mxu0
  %v897 = vadd.f32 %v768, %v896
  %v898 = vpop.f32.mrb[0].mxu0
  %899 = vmatprep.mubr.f32.mxu0 0.0
  %900 = vmatmul.mubr.f32.gmra.mrb[0].mxu0 %v798
  %v901 = vpop.f32.mrb[0].mxu0
  %v902 = vadd.f32 %v773, %v901
  %v903 = vpop.f32.mrb[0].mxu0
  %904 = vdwg.mxu0
  %s905 = scalar_lea.vmem %s8, 128
  %v906 = vld [vmem:[%s905] sm:$0xff]
  %v907 = vld [vmem:[%s905 + $0x8] sm:$0xff]
  %v908 = vld [vmem:[%s905 + $0x10] sm:$0xff]
  %v909 = vld [vmem:[%s905 + $0x18] sm:$0xff]
  %v910 = vld [vmem:[%s905 + $0x20] sm:$0xff]
  %v911 = vld [vmem:[%s905 + $0x28] sm:$0xff]
  %v912 = vld [vmem:[%s905 + $0x30] sm:$0xff]
  %v913 = vld [vmem:[%s905 + $0x38] sm:$0xff]
  %v915 = vsel %vm362, %v906, 0
  %v918 = vsel %vm362, %v907, 0
  %v921 = vsel %vm362, %v908, 0
  %v924 = vsel %vm362, %v909, 0
  %v927 = vsel %vm362, %v910, 0
  %v930 = vsel %vm362, %v911, 0
  %v933 = vsel %vm362, %v912, 0
  %v936 = vsel %vm362, %v913, 0
  %938 = vmatprep.subr.mxu0 0.0
  %939 = vmatpush1.msra.mxu0 %v189
  %940 = vmatprep.subr.mxu0 0.0
  %941 = vmatpush1.msra.mxu0 %v190
  %942 = vmatprep.subr.mxu0 0.0
  %943 = vmatpush1.msra.mxu0 %v191
  %944 = vmatprep.subr.mxu0 0.0
  %945 = vmatpush1.msra.mxu0 %v192
  %946 = vmatprep.subr.mxu0 0.0
  %947 = vmatpush1.msra.mxu0 %v193
  %948 = vmatprep.subr.mxu0 0.0
  %949 = vmatpush1.msra.mxu0 %v194
  %950 = vmatprep.subr.mxu0 0.0
  %951 = vmatpush1.msra.mxu0 %v195
  %952 = vmatprep.subr.mxu0 0.0
  %953 = vmatpush1.msra.mxu0 %v196
  %954 = vmatprep.subr.mxu0 0.0
  %955 = vmatpush1.msra.mxu0 0.0
  %956 = vmatprep.subr.mxu0 0.0
  %957 = vmatpush1.msra.mxu0 0.0
  %958 = vmatprep.subr.mxu0 0.0
  %959 = vmatpush1.msra.mxu0 0.0
  %960 = vmatprep.subr.mxu0 0.0
  %961 = vmatpush1.msra.mxu0 0.0
  %962 = vmatprep.subr.mxu0 0.0
  %963 = vmatpush1.msra.mxu0 0.0
  %964 = vmatprep.subr.mxu0 0.0
  %965 = vmatpush1.msra.mxu0 0.0
  %966 = vmatprep.subr.mxu0 0.0
  %967 = vmatpush1.msra.mxu0 0.0
  %968 = vmatprep.subr.mxu0 0.0
  %969 = vmatpush1.msra.mxu0 0.0
  %970 = vmatprep.subr.mxu0 0.0
  %971 = vmatpush1.msra.mxu0 0.0
  %972 = vmatprep.subr.mxu0 0.0
  %973 = vmatpush1.msra.mxu0 0.0
  %974 = vmatprep.subr.mxu0 0.0
  %975 = vmatpush1.msra.mxu0 0.0
  %976 = vmatprep.subr.mxu0 0.0
  %977 = vmatpush1.msra.mxu0 0.0
  %978 = vmatprep.subr.mxu0 0.0
  %979 = vmatpush1.msra.mxu0 0.0
  %980 = vmatprep.subr.mxu0 0.0
  %981 = vmatpush1.msra.mxu0 0.0
  %982 = vmatprep.subr.mxu0 0.0
  %983 = vmatpush1.msra.mxu0 0.0
  %984 = vmatprep.subr.mxu0 0.0
  %985 = vmatpush1.msra.mxu0 0.0
  %986 = vmatprep.subr.mxu0 0.0
  %987 = vmatpush1.msra.mxu0 0.0
  %988 = vmatprep.subr.mxu0 0.0
  %989 = vmatpush1.msra.mxu0 0.0
  %990 = vmatprep.subr.mxu0 0.0
  %991 = vmatpush1.msra.mxu0 0.0
  %992 = vmatprep.subr.mxu0 0.0
  %993 = vmatpush1.msra.mxu0 0.0
  %994 = vmatprep.subr.mxu0 0.0
  %995 = vmatpush1.msra.mxu0 0.0
  %996 = vmatprep.subr.mxu0 0.0
  %997 = vmatpush1.msra.mxu0 0.0
  %998 = vmatprep.subr.mxu0 0.0
  %999 = vmatpush1.msra.mxu0 0.0
  %1000 = vmatprep.subr.mxu0 0.0
  %1001 = vmatpush1.msra.mxu0 0.0
  %1002 = vmatprep.mubr.f32.mxu0 0.0
  %1003 = vmatmul.mubr.f32.gmra.mrb[0].mxu0 %v915
  %v1004 = vpop.f32.mrb[0].mxu0
  %v1005 = vadd.f32 0.0, %v1004
  %v1006 = vpop.f32.mrb[0].mxu0
  %1007 = vmatprep.mubr.f32.mxu0 0.0
  %1008 = vmatmul.mubr.f32.gmra.mrb[0].mxu0 %v918
  %v1009 = vpop.f32.mrb[0].mxu0
  %v1010 = vadd.f32 0.0, %v1009
  %v1011 = vpop.f32.mrb[0].mxu0
  %1012 = vmatprep.mubr.f32.mxu0 0.0
  %1013 = vmatmul.mubr.f32.gmra.mrb[0].mxu0 %v921
  %v1014 = vpop.f32.mrb[0].mxu0
  %v1015 = vadd.f32 0.0, %v1014
  %v1016 = vpop.f32.mrb[0].mxu0
  %1017 = vmatprep.mubr.f32.mxu0 0.0
  %1018 = vmatmul.mubr.f32.gmra.mrb[0].mxu0 %v924
  %v1019 = vpop.f32.mrb[0].mxu0
  %v1020 = vadd.f32 0.0, %v1019
  %v1021 = vpop.f32.mrb[0].mxu0
  %1022 = vmatprep.mubr.f32.mxu0 0.0
  %1023 = vmatmul.mubr.f32.gmra.mrb[0].mxu0 %v927
  %v1024 = vpop.f32.mrb[0].mxu0
  %v1025 = vadd.f32 0.0, %v1024
  %v1026 = vpop.f32.mrb[0].mxu0
  %1027 = vmatprep.mubr.f32.mxu0 0.0
  %1028 = vmatmul.mubr.f32.gmra.mrb[0].mxu0 %v930
  %v1029 = vpop.f32.mrb[0].mxu0
  %v1030 = vadd.f32 0.0, %v1029
  %v1031 = vpop.f32.mrb[0].mxu0
  %1032 = vmatprep.mubr.f32.mxu0 0.0
  %1033 = vmatmul.mubr.f32.gmra.mrb[0].mxu0 %v933
  %v1034 = vpop.f32.mrb[0].mxu0
  %v1035 = vadd.f32 0.0, %v1034
  %v1036 = vpop.f32.mrb[0].mxu0
  %1037 = vmatprep.mubr.f32.mxu0 0.0
  %1038 = vmatmul.mubr.f32.gmra.mrb[0].mxu0 %v936
  %v1039 = vpop.f32.mrb[0].mxu0
  %v1040 = vadd.f32 0.0, %v1039
  %v1041 = vpop.f32.mrb[0].mxu0
  %1042 = vdwg.mxu0
  %s1043 = scalar_lea.vmem %s6, 128
  %v1044 = vld [vmem:[%s1043] sm:$0xff]
  %v1045 = vld [vmem:[%s1043 + $0x8] sm:$0xff]
  %v1046 = vld [vmem:[%s1043 + $0x10] sm:$0xff]
  %v1047 = vld [vmem:[%s1043 + $0x18] sm:$0xff]
  %v1048 = vld [vmem:[%s1043 + $0x20] sm:$0xff]
  %v1049 = vld [vmem:[%s1043 + $0x28] sm:$0xff]
  %v1050 = vld [vmem:[%s1043 + $0x30] sm:$0xff]
  %v1051 = vld [vmem:[%s1043 + $0x38] sm:$0xff]
  %v1053 = vsel %vm362, %v1005, 0
  %v1056 = vsel %vm362, %v1010, 0
  %v1059 = vsel %vm362, %v1015, 0
  %v1062 = vsel %vm362, %v1020, 0
  %v1065 = vsel %vm362, %v1025, 0
  %v1068 = vsel %vm362, %v1030, 0
  %v1071 = vsel %vm362, %v1035, 0
  %v1074 = vsel %vm362, %v1040, 0
  %1076 = vmatprep.subr.mxu0 0.0
  %1077 = vmatpush1.msra.mxu0 %v1044
  %1078 = vmatprep.subr.mxu0 0.0
  %1079 = vmatpush1.msra.mxu0 %v1045
  %1080 = vmatprep.subr.mxu0 0.0
  %1081 = vmatpush1.msra.mxu0 %v1046
  %1082 = vmatprep.subr.mxu0 0.0
  %1083 = vmatpush1.msra.mxu0 %v1047
  %1084 = vmatprep.subr.mxu0 0.0
  %1085 = vmatpush1.msra.mxu0 %v1048
  %1086 = vmatprep.subr.mxu0 0.0
  %1087 = vmatpush1.msra.mxu0 %v1049
  %1088 = vmatprep.subr.mxu0 0.0
  %1089 = vmatpush1.msra.mxu0 %v1050
  %1090 = vmatprep.subr.mxu0 0.0
  %1091 = vmatpush1.msra.mxu0 %v1051
  %1092 = vmatprep.subr.mxu0 0.0
  %1093 = vmatpush1.msra.mxu0 0.0
  %1094 = vmatprep.subr.mxu0 0.0
  %1095 = vmatpush1.msra.mxu0 0.0
  %1096 = vmatprep.subr.mxu0 0.0
  %1097 = vmatpush1.msra.mxu0 0.0
  %1098 = vmatprep.subr.mxu0 0.0
  %1099 = vmatpush1.msra.mxu0 0.0
  %1100 = vmatprep.subr.mxu0 0.0
  %1101 = vmatpush1.msra.mxu0 0.0
  %1102 = vmatprep.subr.mxu0 0.0
  %1103 = vmatpush1.msra.mxu0 0.0
  %1104 = vmatprep.subr.mxu0 0.0
  %1105 = vmatpush1.msra.mxu0 0.0
  %1106 = vmatprep.subr.mxu0 0.0
  %1107 = vmatpush1.msra.mxu0 0.0
  %1108 = vmatprep.subr.mxu0 0.0
  %1109 = vmatpush1.msra.mxu0 0.0
  %1110 = vmatprep.subr.mxu0 0.0
  %1111 = vmatpush1.msra.mxu0 0.0
  %1112 = vmatprep.subr.mxu0 0.0
  %1113 = vmatpush1.msra.mxu0 0.0
  %1114 = vmatprep.subr.mxu0 0.0
  %1115 = vmatpush1.msra.mxu0 0.0
  %1116 = vmatprep.subr.mxu0 0.0
  %1117 = vmatpush1.msra.mxu0 0.0
  %1118 = vmatprep.subr.mxu0 0.0
  %1119 = vmatpush1.msra.mxu0 0.0
  %1120 = vmatprep.subr.mxu0 0.0
  %1121 = vmatpush1.msra.mxu0 0.0
  %1122 = vmatprep.subr.mxu0 0.0
  %1123 = vmatpush1.msra.mxu0 0.0
  %1124 = vmatprep.subr.mxu0 0.0
  %1125 = vmatpush1.msra.mxu0 0.0
  %1126 = vmatprep.subr.mxu0 0.0
  %1127 = vmatpush1.msra.mxu0 0.0
  %1128 = vmatprep.subr.mxu0 0.0
  %1129 = vmatpush1.msra.mxu0 0.0
  %1130 = vmatprep.subr.mxu0 0.0
  %1131 = vmatpush1.msra.mxu0 0.0
  %1132 = vmatprep.subr.mxu0 0.0
  %1133 = vmatpush1.msra.mxu0 0.0
  %1134 = vmatprep.subr.mxu0 0.0
  %1135 = vmatpush1.msra.mxu0 0.0
  %1136 = vmatprep.subr.mxu0 0.0
  %1137 = vmatpush1.msra.mxu0 0.0
  %1138 = vmatprep.subr.mxu0 0.0
  %1139 = vmatpush1.msra.mxu0 0.0
  %1140 = vmatprep.mubr.f32.mxu0 0.0
  %1141 = vmatmul.mubr.f32.gmra.mrb[0].mxu0 %v1053
  %v1142 = vpop.f32.mrb[0].mxu0
  %v1143 = vadd.f32 0.0, %v1142
  %v1144 = vpop.f32.mrb[0].mxu0
  %1145 = vmatprep.mubr.f32.mxu0 0.0
  %1146 = vmatmul.mubr.f32.gmra.mrb[0].mxu0 %v1056
  %v1147 = vpop.f32.mrb[0].mxu0
  %v1148 = vadd.f32 0.0, %v1147
  %v1149 = vpop.f32.mrb[0].mxu0
  %1150 = vmatprep.mubr.f32.mxu0 0.0
  %1151 = vmatmul.mubr.f32.gmra.mrb[0].mxu0 %v1059
  %v1152 = vpop.f32.mrb[0].mxu0
  %v1153 = vadd.f32 0.0, %v1152
  %v1154 = vpop.f32.mrb[0].mxu0
  %1155 = vmatprep.mubr.f32.mxu0 0.0
  %1156 = vmatmul.mubr.f32.gmra.mrb[0].mxu0 %v1062
  %v1157 = vpop.f32.mrb[0].mxu0
  %v1158 = vadd.f32 0.0, %v1157
  %v1159 = vpop.f32.mrb[0].mxu0
  %1160 = vmatprep.mubr.f32.mxu0 0.0
  %1161 = vmatmul.mubr.f32.gmra.mrb[0].mxu0 %v1065
  %v1162 = vpop.f32.mrb[0].mxu0
  %v1163 = vadd.f32 0.0, %v1162
  %v1164 = vpop.f32.mrb[0].mxu0
  %1165 = vmatprep.mubr.f32.mxu0 0.0
  %1166 = vmatmul.mubr.f32.gmra.mrb[0].mxu0 %v1068
  %v1167 = vpop.f32.mrb[0].mxu0
  %v1168 = vadd.f32 0.0, %v1167
  %v1169 = vpop.f32.mrb[0].mxu0
  %1170 = vmatprep.mubr.f32.mxu0 0.0
  %1171 = vmatmul.mubr.f32.gmra.mrb[0].mxu0 %v1071
  %v1172 = vpop.f32.mrb[0].mxu0
  %v1173 = vadd.f32 0.0, %v1172
  %v1174 = vpop.f32.mrb[0].mxu0
  %1175 = vmatprep.mubr.f32.mxu0 0.0
  %1176 = vmatmul.mubr.f32.gmra.mrb[0].mxu0 %v1074
  %v1177 = vpop.f32.mrb[0].mxu0
  %v1178 = vadd.f32 0.0, %v1177
  %v1179 = vpop.f32.mrb[0].mxu0
  %1180 = vdwg.mxu0
  %v1181 = vadd.f32 %v867, %v1143
  %v1182 = vadd.f32 %v872, %v1148
  %v1183 = vadd.f32 %v877, %v1153
  %v1184 = vadd.f32 %v882, %v1158
  %v1185 = vadd.f32 %v887, %v1163
  %v1186 = vadd.f32 %v892, %v1168
  %v1187 = vadd.f32 %v897, %v1173
  %v1188 = vadd.f32 %v902, %v1178
  %v1189 = vld [vmem:[%s7] sm:$0x1]
  %v1191 = vlaneseq
  %v1192 = vshrl.u32 %v1191, 7
  %v1193 = vsub.s32 0, %v1192
  %v1194 = vrot.slane %v1189, %v1193
  %v1196 = vadd.f32 %v1181, %v1194
  %v1197 = vadd.f32 %v1182, %v1194
  %v1198 = vadd.f32 %v1183, %v1194
  %v1199 = vadd.f32 %v1184, %v1194
  %v1200 = vadd.f32 %v1185, %v1194
  %v1201 = vadd.f32 %v1186, %v1194
  %v1202 = vadd.f32 %v1187, %v1194
  %v1203 = vadd.f32 %v1188, %v1194
  %v1204 = vmax.f32 %v1196, 0.0
  %v1205 = vmax.f32 %v1197, 0.0
  %v1206 = vmax.f32 %v1198, 0.0
  %v1207 = vmax.f32 %v1199, 0.0
  %v1208 = vmax.f32 %v1200, 0.0
  %v1209 = vmax.f32 %v1201, 0.0
  %v1210 = vmax.f32 %v1202, 0.0
  %v1211 = vmax.f32 %v1203, 0.0
  %v1212 = vadd.f32 %v1204, %v346
  %v1213 = vadd.f32 %v1205, %v347
  %v1214 = vadd.f32 %v1206, %v348
  %v1215 = vadd.f32 %v1207, %v349
  %v1216 = vadd.f32 %v1208, %v350
  %v1217 = vadd.f32 %v1209, %v351
  %v1218 = vadd.f32 %v1210, %v352
  %v1219 = vadd.f32 %v1211, %v353
  %1220 = vst.msk [vmem:[%s9] sm:$0xff] %vm362, %v1212
  %1221 = vst.msk [vmem:[%s9 + $0x8] sm:$0xff] %vm362, %v1213
  %1222 = vst.msk [vmem:[%s9 + $0x10] sm:$0xff] %vm362, %v1214
  %1223 = vst.msk [vmem:[%s9 + $0x18] sm:$0xff] %vm362, %v1215
  %1224 = vst.msk [vmem:[%s9 + $0x20] sm:$0xff] %vm362, %v1216
  %1225 = vst.msk [vmem:[%s9 + $0x28] sm:$0xff] %vm362, %v1217
  %1226 = vst.msk [vmem:[%s9 + $0x30] sm:$0xff] %vm362, %v1218
  %1227 = vst.msk [vmem:[%s9 + $0x38] sm:$0xff] %vm362, %v1219
  // Predicated region
  $region38: #{res_altsm_features.9} parent=0 // pred_check
    _
  $region39: #{res_altsm_features.9} parent=0 // pred_check_branch
    %1229 = sbr.rel (0) target = $region41
  $region40: #{res_altsm_features.9} parent=0 // pred_region
    _
  $region41: #{res_altsm_features.9} parent=0 // pred_fallthru
    _
  // Predicated region
  $region42: #{res_altsm_features.9} parent=0 // pred_check
    _
  $region43: #{res_altsm_features.9} parent=0 // pred_check_branch
    %1231 = sbr.rel (0) target = $region45
  $region44: #{res_altsm_features.9} parent=0 // pred_region
    _
  $region45: #{res_altsm_features.9} parent=0 // pred_fallthru
    _

// kernel: res_altsm_features.15
$region0: #{res_altsm_features.15}
  #allocation0 [shape = 'u32[]', space=smem, size = 0x4, offset = 0x4, fixed_abs, tag = 'smem constant byte address 0x4 - core index']
  #allocation1 [shape = 'u32[144,128]{1,0:T(1,128)}', space=vmem, size = 0x12000, scoped, tag = 'internal scratch']
  %s0 = inlined_call_operand.vmem [shape: f32[64,64], index: 0, kind: input, shape index: {}]
  %s1 = inlined_call_operand.vmem [shape: f32[64,128], index: 1, kind: input, shape index: {}]
  %s2 = inlined_call_operand.vmem [shape: f32[1,128], index: 2, kind: input, shape index: {}]
  %s3 = inlined_call_operand.vmem [shape: f32[128,1], index: 3, kind: input, shape index: {}]
  %s4 = inlined_call_operand.vmem [shape: f32[8,64], index: 4, kind: input, shape index: {}]
  %s5 = inlined_call_operand.vmem [shape: f32[64,8], index: 5, kind: input, shape index: {}]
  %s6 = inlined_call_operand.vmem [shape: f32[8,128], index: 6, kind: output, shape index: {}]
  %s7 = sld [smem:[#allocation0]]
  $region34: #{res_altsm_features.15} parent=0
    _
  %s9 = ssub.s32 1, %s7
  %s10 = scalar_select 0, %s9, %s7
  // Predicated region
  $region2: #{res_altsm_features.15} parent=0 // pred_check
    _
  $region3: #{res_altsm_features.15} parent=0 // pred_check_branch
    %12 = sbr.rel (0) target = $region5
  $region4: #{res_altsm_features.15} parent=0 // pred_region
    _
  $region5: #{res_altsm_features.15} parent=0 // pred_fallthru
    _
  // Predicated region
  $region6: #{res_altsm_features.15} parent=0 // pred_check
    _
  $region7: #{res_altsm_features.15} parent=0 // pred_check_branch
    %14 = sbr.rel (0) target = $region9
  $region8: #{res_altsm_features.15} parent=0 // pred_region
    _
  $region9: #{res_altsm_features.15} parent=0 // pred_fallthru
    _
  // Predicated region
  $region10: #{res_altsm_features.15} parent=0 // pred_check
    _
  $region11: #{res_altsm_features.15} parent=0 // pred_check_branch
    %16 = sbr.rel (0) target = $region13
  $region12: #{res_altsm_features.15} parent=0 // pred_region
    _
  $region13: #{res_altsm_features.15} parent=0 // pred_fallthru
    _
  // Predicated region
  $region14: #{res_altsm_features.15} parent=0 // pred_check
    _
  $region15: #{res_altsm_features.15} parent=0 // pred_check_branch
    %18 = sbr.rel (0) target = $region17
  $region16: #{res_altsm_features.15} parent=0 // pred_region
    _
  $region17: #{res_altsm_features.15} parent=0 // pred_fallthru
    _
  // Predicated region
  $region18: #{res_altsm_features.15} parent=0 // pred_check
    _
  $region19: #{res_altsm_features.15} parent=0 // pred_check_branch
    %20 = sbr.rel (0) target = $region21
  $region20: #{res_altsm_features.15} parent=0 // pred_region
    _
  $region21: #{res_altsm_features.15} parent=0 // pred_fallthru
    _
  // Predicated region
  $region22: #{res_altsm_features.15} parent=0 // pred_check
    _
  $region23: #{res_altsm_features.15} parent=0 // pred_check_branch
    %22 = sbr.rel (0) target = $region25
  $region24: #{res_altsm_features.15} parent=0 // pred_region
    _
  $region25: #{res_altsm_features.15} parent=0 // pred_fallthru
    _
  %v23 = vld [vmem:[%s0] sm:$0xff]
  %v24 = vld [vmem:[%s0 + $0x8] sm:$0xff]
  %v25 = vld [vmem:[%s0 + $0x10] sm:$0xff]
  %v26 = vld [vmem:[%s0 + $0x18] sm:$0xff]
  %v27 = vld [vmem:[%s0 + $0x20] sm:$0xff]
  %v28 = vld [vmem:[%s0 + $0x28] sm:$0xff]
  %v29 = vld [vmem:[%s0 + $0x30] sm:$0xff]
  %v30 = vld [vmem:[%s0 + $0x38] sm:$0xff]
  %v31 = vld [vmem:[%s1] sm:$0xff]
  %v32 = vld [vmem:[%s1 + $0x8] sm:$0xff]
  %v33 = vld [vmem:[%s1 + $0x10] sm:$0xff]
  %v34 = vld [vmem:[%s1 + $0x18] sm:$0xff]
  %v35 = vld [vmem:[%s1 + $0x20] sm:$0xff]
  %v36 = vld [vmem:[%s1 + $0x28] sm:$0xff]
  %v37 = vld [vmem:[%s1 + $0x30] sm:$0xff]
  %v38 = vld [vmem:[%s1 + $0x38] sm:$0xff]
  %v39 = vld [vmem:[%s2] sm:$0x1]
  %v41 = vlaneseq
  %v42 = vshrl.u32 %v41, 7
  %v43 = vsub.s32 0, %v42
  %v44 = vrot.slane %v39, %v43
  %vm46 = vcmask 523264
  %v48 = vsel %vm46, %v23, 0
  %v51 = vsel %vm46, %v24, 0
  %v54 = vsel %vm46, %v25, 0
  %v57 = vsel %vm46, %v26, 0
  %v60 = vsel %vm46, %v27, 0
  %v63 = vsel %vm46, %v28, 0
  %v66 = vsel %vm46, %v29, 0
  %v69 = vsel %vm46, %v30, 0
  %71 = vmatprep.subr.mxu0 0.0
  %72 = vmatpush1.msra.mxu0 %v31
  %73 = vmatprep.subr.mxu0 0.0
  %74 = vmatpush1.msra.mxu0 %v32
  %75 = vmatprep.subr.mxu0 0.0
  %76 = vmatpush1.msra.mxu0 %v33
  %77 = vmatprep.subr.mxu0 0.0
  %78 = vmatpush1.msra.mxu0 %v34
  %79 = vmatprep.subr.mxu0 0.0
  %80 = vmatpush1.msra.mxu0 %v35
  %81 = vmatprep.subr.mxu0 0.0
  %82 = vmatpush1.msra.mxu0 %v36
  %83 = vmatprep.subr.mxu0 0.0
  %84 = vmatpush1.msra.mxu0 %v37
  %85 = vmatprep.subr.mxu0 0.0
  %86 = vmatpush1.msra.mxu0 %v38
  %87 = vmatprep.subr.mxu0 0.0
  %88 = vmatpush1.msra.mxu0 0.0
  %89 = vmatprep.subr.mxu0 0.0
  %90 = vmatpush1.msra.mxu0 0.0
  %91 = vmatprep.subr.mxu0 0.0
  %92 = vmatpush1.msra.mxu0 0.0
  %93 = vmatprep.subr.mxu0 0.0
  %94 = vmatpush1.msra.mxu0 0.0
  %95 = vmatprep.subr.mxu0 0.0
  %96 = vmatpush1.msra.mxu0 0.0
  %97 = vmatprep.subr.mxu0 0.0
  %98 = vmatpush1.msra.mxu0 0.0
  %99 = vmatprep.subr.mxu0 0.0
  %100 = vmatpush1.msra.mxu0 0.0
  %101 = vmatprep.subr.mxu0 0.0
  %102 = vmatpush1.msra.mxu0 0.0
  %103 = vmatprep.subr.mxu0 0.0
  %104 = vmatpush1.msra.mxu0 0.0
  %105 = vmatprep.subr.mxu0 0.0
  %106 = vmatpush1.msra.mxu0 0.0
  %107 = vmatprep.subr.mxu0 0.0
  %108 = vmatpush1.msra.mxu0 0.0
  %109 = vmatprep.subr.mxu0 0.0
  %110 = vmatpush1.msra.mxu0 0.0
  %111 = vmatprep.subr.mxu0 0.0
  %112 = vmatpush1.msra.mxu0 0.0
  %113 = vmatprep.subr.mxu0 0.0
  %114 = vmatpush1.msra.mxu0 0.0
  %115 = vmatprep.subr.mxu0 0.0
  %116 = vmatpush1.msra.mxu0 0.0
  %117 = vmatprep.subr.mxu0 0.0
  %118 = vmatpush1.msra.mxu0 0.0
  %119 = vmatprep.subr.mxu0 0.0
  %120 = vmatpush1.msra.mxu0 0.0
  %121 = vmatprep.subr.mxu0 0.0
  %122 = vmatpush1.msra.mxu0 0.0
  %123 = vmatprep.subr.mxu0 0.0
  %124 = vmatpush1.msra.mxu0 0.0
  %125 = vmatprep.subr.mxu0 0.0
  %126 = vmatpush1.msra.mxu0 0.0
  %127 = vmatprep.subr.mxu0 0.0
  %128 = vmatpush1.msra.mxu0 0.0
  %129 = vmatprep.subr.mxu0 0.0
  %130 = vmatpush1.msra.mxu0 0.0
  %131 = vmatprep.subr.mxu0 0.0
  %132 = vmatpush1.msra.mxu0 0.0
  %133 = vmatprep.subr.mxu0 0.0
  %134 = vmatpush1.msra.mxu0 0.0
  %135 = vmatprep.mubr.f32.mxu0 0.0
  %136 = vmatmul.mubr.f32.gmra.mrb[0].mxu0 %v48
  %v137 = vpop.f32.mrb[0].mxu0
  %v138 = vadd.f32 %v44, %v137
  %v139 = vpop.f32.mrb[0].mxu0
  %140 = vmatprep.mubr.f32.mxu0 0.0
  %141 = vmatmul.mubr.f32.gmra.mrb[0].mxu0 %v51
  %v142 = vpop.f32.mrb[0].mxu0
  %v143 = vadd.f32 %v44, %v142
  %v144 = vpop.f32.mrb[0].mxu0
  %145 = vmatprep.mubr.f32.mxu0 0.0
  %146 = vmatmul.mubr.f32.gmra.mrb[0].mxu0 %v54
  %v147 = vpop.f32.mrb[0].mxu0
  %v148 = vadd.f32 %v44, %v147
  %v149 = vpop.f32.mrb[0].mxu0
  %150 = vmatprep.mubr.f32.mxu0 0.0
  %151 = vmatmul.mubr.f32.gmra.mrb[0].mxu0 %v57
  %v152 = vpop.f32.mrb[0].mxu0
  %v153 = vadd.f32 %v44, %v152
  %v154 = vpop.f32.mrb[0].mxu0
  %155 = vmatprep.mubr.f32.mxu0 0.0
  %156 = vmatmul.mubr.f32.gmra.mrb[0].mxu0 %v60
  %v157 = vpop.f32.mrb[0].mxu0
  %v158 = vadd.f32 %v44, %v157
  %v159 = vpop.f32.mrb[0].mxu0
  %160 = vmatprep.mubr.f32.mxu0 0.0
  %161 = vmatmul.mubr.f32.gmra.mrb[0].mxu0 %v63
  %v162 = vpop.f32.mrb[0].mxu0
  %v163 = vadd.f32 %v44, %v162
  %v164 = vpop.f32.mrb[0].mxu0
  %165 = vmatprep.mubr.f32.mxu0 0.0
  %166 = vmatmul.mubr.f32.gmra.mrb[0].mxu0 %v66
  %v167 = vpop.f32.mrb[0].mxu0
  %v168 = vadd.f32 %v44, %v167
  %v169 = vpop.f32.mrb[0].mxu0
  %170 = vmatprep.mubr.f32.mxu0 0.0
  %171 = vmatmul.mubr.f32.gmra.mrb[0].mxu0 %v69
  %v172 = vpop.f32.mrb[0].mxu0
  %v173 = vadd.f32 %v44, %v172
  %v174 = vpop.f32.mrb[0].mxu0
  %175 = vdwg.mxu0
  %v176 = vmax.f32 %v138, 0.0
  %v177 = vmax.f32 %v143, 0.0
  %v178 = vmax.f32 %v148, 0.0
  %v179 = vmax.f32 %v153, 0.0
  %v180 = vmax.f32 %v158, 0.0
  %v181 = vmax.f32 %v163, 0.0
  %v182 = vmax.f32 %v168, 0.0
  %v183 = vmax.f32 %v173, 0.0
  %v184 = vld [vmem:[%s3] sm:$0xff]
  %v185 = vld [vmem:[%s3 + $0x8] sm:$0xff]
  %v186 = vld [vmem:[%s3 + $0x10] sm:$0xff]
  %v187 = vld [vmem:[%s3 + $0x18] sm:$0xff]
  %v188 = vld [vmem:[%s3 + $0x20] sm:$0xff]
  %v189 = vld [vmem:[%s3 + $0x28] sm:$0xff]
  %v190 = vld [vmem:[%s3 + $0x30] sm:$0xff]
  %v191 = vld [vmem:[%s3 + $0x38] sm:$0xff]
  %v192 = vld [vmem:[%s3 + $0x40] sm:$0xff]
  %v193 = vld [vmem:[%s3 + $0x48] sm:$0xff]
  %v194 = vld [vmem:[%s3 + $0x50] sm:$0xff]
  %v195 = vld [vmem:[%s3 + $0x58] sm:$0xff]
  %v196 = vld [vmem:[%s3 + $0x60] sm:$0xff]
  %v197 = vld [vmem:[%s3 + $0x68] sm:$0xff]
  %v198 = vld [vmem:[%s3 + $0x70] sm:$0xff]
  %v199 = vld [vmem:[%s3 + $0x78] sm:$0xff]
  %200 = vmatprep.subr.mxu0 0.0
  %201 = vmatpush1.msra.mxu0 %v184
  %202 = vmatprep.subr.mxu0 0.0
  %203 = vmatpush1.msra.mxu0 %v185
  %204 = vmatprep.subr.mxu0 0.0
  %205 = vmatpush1.msra.mxu0 %v186
  %206 = vmatprep.subr.mxu0 0.0
  %207 = vmatpush1.msra.mxu0 %v187
  %208 = vmatprep.subr.mxu0 0.0
  %209 = vmatpush1.msra.mxu0 %v188
  %210 = vmatprep.subr.mxu0 0.0
  %211 = vmatpush1.msra.mxu0 %v189
  %212 = vmatprep.subr.mxu0 0.0
  %213 = vmatpush1.msra.mxu0 %v190
  %214 = vmatprep.subr.mxu0 0.0
  %215 = vmatpush1.msra.mxu0 %v191
  %216 = vmatprep.subr.mxu0 0.0
  %217 = vmatpush1.msra.mxu0 %v192
  %218 = vmatprep.subr.mxu0 0.0
  %219 = vmatpush1.msra.mxu0 %v193
  %220 = vmatprep.subr.mxu0 0.0
  %221 = vmatpush1.msra.mxu0 %v194
  %222 = vmatprep.subr.mxu0 0.0
  %223 = vmatpush1.msra.mxu0 %v195
  %224 = vmatprep.subr.mxu0 0.0
  %225 = vmatpush1.msra.mxu0 %v196
  %226 = vmatprep.subr.mxu0 0.0
  %227 = vmatpush1.msra.mxu0 %v197
  %228 = vmatprep.subr.mxu0 0.0
  %229 = vmatpush1.msra.mxu0 %v198
  %230 = vmatprep.subr.mxu0 0.0
  %231 = vmatpush1.msra.mxu0 %v199
  %232 = vmatprep.subr.mxu0 0.0
  %233 = vmatpush1.msra.mxu0 0.0
  %234 = vmatprep.subr.mxu0 0.0
  %235 = vmatpush1.msra.mxu0 0.0
  %236 = vmatprep.subr.mxu0 0.0
  %237 = vmatpush1.msra.mxu0 0.0
  %238 = vmatprep.subr.mxu0 0.0
  %239 = vmatpush1.msra.mxu0 0.0
  %240 = vmatprep.subr.mxu0 0.0
  %241 = vmatpush1.msra.mxu0 0.0
  %242 = vmatprep.subr.mxu0 0.0
  %243 = vmatpush1.msra.mxu0 0.0
  %244 = vmatprep.subr.mxu0 0.0
  %245 = vmatpush1.msra.mxu0 0.0
  %246 = vmatprep.subr.mxu0 0.0
  %247 = vmatpush1.msra.mxu0 0.0
  %248 = vmatprep.subr.mxu0 0.0
  %249 = vmatpush1.msra.mxu0 0.0
  %250 = vmatprep.subr.mxu0 0.0
  %251 = vmatpush1.msra.mxu0 0.0
  %252 = vmatprep.subr.mxu0 0.0
  %253 = vmatpush1.msra.mxu0 0.0
  %254 = vmatprep.subr.mxu0 0.0
  %255 = vmatpush1.msra.mxu0 0.0
  %256 = vmatprep.subr.mxu0 0.0
  %257 = vmatpush1.msra.mxu0 0.0
  %258 = vmatprep.subr.mxu0 0.0
  %259 = vmatpush1.msra.mxu0 0.0
  %260 = vmatprep.subr.mxu0 0.0
  %261 = vmatpush1.msra.mxu0 0.0
  %262 = vmatprep.subr.mxu0 0.0
  %263 = vmatpush1.msra.mxu0 0.0
  %264 = vmatprep.mubr.f32.mxu0 0.0
  %265 = vmatmul.mubr.f32.gmra.mrb[0].mxu0 %v176
  %v266 = vpop.f32.mrb[0].mxu0
  %v267 = vadd.f32 0.0, %v266
  %v268 = vpop.f32.mrb[0].mxu0
  %269 = vmatprep.mubr.f32.mxu0 0.0
  %270 = vmatmul.mubr.f32.gmra.mrb[0].mxu0 %v177
  %v271 = vpop.f32.mrb[0].mxu0
  %v272 = vadd.f32 0.0, %v271
  %v273 = vpop.f32.mrb[0].mxu0
  %274 = vmatprep.mubr.f32.mxu0 0.0
  %275 = vmatmul.mubr.f32.gmra.mrb[0].mxu0 %v178
  %v276 = vpop.f32.mrb[0].mxu0
  %v277 = vadd.f32 0.0, %v276
  %v278 = vpop.f32.mrb[0].mxu0
  %279 = vmatprep.mubr.f32.mxu0 0.0
  %280 = vmatmul.mubr.f32.gmra.mrb[0].mxu0 %v179
  %v281 = vpop.f32.mrb[0].mxu0
  %v282 = vadd.f32 0.0, %v281
  %v283 = vpop.f32.mrb[0].mxu0
  %284 = vmatprep.mubr.f32.mxu0 0.0
  %285 = vmatmul.mubr.f32.gmra.mrb[0].mxu0 %v180
  %v286 = vpop.f32.mrb[0].mxu0
  %v287 = vadd.f32 0.0, %v286
  %v288 = vpop.f32.mrb[0].mxu0
  %289 = vmatprep.mubr.f32.mxu0 0.0
  %290 = vmatmul.mubr.f32.gmra.mrb[0].mxu0 %v181
  %v291 = vpop.f32.mrb[0].mxu0
  %v292 = vadd.f32 0.0, %v291
  %v293 = vpop.f32.mrb[0].mxu0
  %294 = vmatprep.mubr.f32.mxu0 0.0
  %295 = vmatmul.mubr.f32.gmra.mrb[0].mxu0 %v182
  %v296 = vpop.f32.mrb[0].mxu0
  %v297 = vadd.f32 0.0, %v296
  %v298 = vpop.f32.mrb[0].mxu0
  %299 = vmatprep.mubr.f32.mxu0 0.0
  %300 = vmatmul.mubr.f32.gmra.mrb[0].mxu0 %v183
  %v301 = vpop.f32.mrb[0].mxu0
  %v302 = vadd.f32 0.0, %v301
  %v303 = vpop.f32.mrb[0].mxu0
  %304 = vdwg.mxu0
  %vm305 = vcmask 7168
  %v306 = vsel %vm305, %v267, -inf
  %v307 = vsel %vm305, %v272, -inf
  %v308 = vsel %vm305, %v277, -inf
  %v309 = vsel %vm305, %v282, -inf
  %v310 = vsel %vm305, %v287, -inf
  %v311 = vmax.f32 %v306, %v310
  %v312 = vsel %vm305, %v292, -inf
  %v313 = vmax.f32 %v307, %v312
  %v314 = vsel %vm305, %v297, -inf
  %v315 = vmax.f32 %v308, %v314
  %v316 = vsel %vm305, %v302, -inf
  %v317 = vmax.f32 %v309, %v316
  %v318 = vmax.f32 %v311, %v313
  %v319 = vmax.f32 %v315, %v317
  %v320 = vmax.f32 %v318, %v319
  %321 = vmax.xlane.f32.xlu0 %v320
  %v322 = vpop.xlane.xlu0 %321
  %v323 = vrot.slane %v322, 4
  %v324 = vmax.f32 %v322, %v323
  %v325 = vrot.slane %v324, 2
  %v326 = vmax.f32 %v324, %v325
  %v327 = vrot.slane %v326, 1
  %v328 = vmax.f32 %v326, %v327
  %s329 = vtos %v328
  %v330 = vstv %s329
  %v331 = vsub.f32 %v267, %v330
  %v332 = vsub.f32 %v272, %v330
  %v333 = vsub.f32 %v277, %v330
  %v334 = vsub.f32 %v282, %v330
  %v335 = vsub.f32 %v287, %v330
  %v336 = vsub.f32 %v292, %v330
  %v337 = vsub.f32 %v297, %v330
  %v338 = vsub.f32 %v302, %v330
  %v339 = vmul.f32 %v331, 1.442695
  %v340 = vpow.pop %v339
  %v341 = vmul.f32 %v332, 1.442695
  %v342 = vpow.pop %v341
  %v343 = vmul.f32 %v333, 1.442695
  %v344 = vpow.pop %v343
  %v345 = vmul.f32 %v334, 1.442695
  %v346 = vpow.pop %v345
  %v347 = vmul.f32 %v335, 1.442695
  %v348 = vpow.pop %v347
  %v349 = vmul.f32 %v336, 1.442695
  %v350 = vpow.pop %v349
  %v351 = vmul.f32 %v337, 1.442695
  %v352 = vpow.pop %v351
  %v353 = vmul.f32 %v338, 1.442695
  %v354 = vpow.pop %v353
  %v355 = vld [vmem:[%s4] sm:$0xff]
  %v357 = vsel %vm46, %v355, 0
  %359 = vmatprep.subr.mxu0 0.0
  %360 = vmatpush1.msra.mxu0 %v340
  %361 = vmatprep.subr.mxu0 0.0
  %362 = vmatpush1.msra.mxu0 %v342
  %363 = vmatprep.subr.mxu0 0.0
  %364 = vmatpush1.msra.mxu0 %v344
  %365 = vmatprep.subr.mxu0 0.0
  %366 = vmatpush1.msra.mxu0 %v346
  %367 = vmatprep.subr.mxu0 0.0
  %368 = vmatpush1.msra.mxu0 %v348
  %369 = vmatprep.subr.mxu0 0.0
  %370 = vmatpush1.msra.mxu0 %v350
  %371 = vmatprep.subr.mxu0 0.0
  %372 = vmatpush1.msra.mxu0 %v352
  %373 = vmatprep.subr.mxu0 0.0
  %374 = vmatpush1.msra.mxu0 %v354
  %375 = vmatprep.subr.mxu0 0.0
  %376 = vmatpush1.msra.mxu0 0.0
  %377 = vmatprep.subr.mxu0 0.0
  %378 = vmatpush1.msra.mxu0 0.0
  %379 = vmatprep.subr.mxu0 0.0
  %380 = vmatpush1.msra.mxu0 0.0
  %381 = vmatprep.subr.mxu0 0.0
  %382 = vmatpush1.msra.mxu0 0.0
  %383 = vmatprep.subr.mxu0 0.0
  %384 = vmatpush1.msra.mxu0 0.0
  %385 = vmatprep.subr.mxu0 0.0
  %386 = vmatpush1.msra.mxu0 0.0
  %387 = vmatprep.subr.mxu0 0.0
  %388 = vmatpush1.msra.mxu0 0.0
  %389 = vmatprep.subr.mxu0 0.0
  %390 = vmatpush1.msra.mxu0 0.0
  %391 = vmatprep.subr.mxu0 0.0
  %392 = vmatpush1.msra.mxu0 0.0
  %393 = vmatprep.subr.mxu0 0.0
  %394 = vmatpush1.msra.mxu0 0.0
  %395 = vmatprep.subr.mxu0 0.0
  %396 = vmatpush1.msra.mxu0 0.0
  %397 = vmatprep.subr.mxu0 0.0
  %398 = vmatpush1.msra.mxu0 0.0
  %399 = vmatprep.subr.mxu0 0.0
  %400 = vmatpush1.msra.mxu0 0.0
  %401 = vmatprep.subr.mxu0 0.0
  %402 = vmatpush1.msra.mxu0 0.0
  %403 = vmatprep.subr.mxu0 0.0
  %404 = vmatpush1.msra.mxu0 0.0
  %405 = vmatprep.subr.mxu0 0.0
  %406 = vmatpush1.msra.mxu0 0.0
  %407 = vmatprep.subr.mxu0 0.0
  %408 = vmatpush1.msra.mxu0 0.0
  %409 = vmatprep.subr.mxu0 0.0
  %410 = vmatpush1.msra.mxu0 0.0
  %411 = vmatprep.subr.mxu0 0.0
  %412 = vmatpush1.msra.mxu0 0.0
  %413 = vmatprep.subr.mxu0 0.0
  %414 = vmatpush1.msra.mxu0 0.0
  %415 = vmatprep.subr.mxu0 0.0
  %416 = vmatpush1.msra.mxu0 0.0
  %417 = vmatprep.subr.mxu0 0.0
  %418 = vmatpush1.msra.mxu0 0.0
  %419 = vmatprep.subr.mxu0 0.0
  %420 = vmatpush1.msra.mxu0 0.0
  %421 = vmatprep.subr.mxu0 0.0
  %422 = vmatpush1.msra.mxu0 0.0
  %423 = vmatprep.mubr.f32.mxu0 0.0
  %424 = vmatmul.mubr.f32.gmra.mrb[0].mxu0 %v357
  %v425 = vpop.f32.mrb[0].mxu0
  %v426 = vadd.f32 0.0, %v425
  %v427 = vpop.f32.mrb[0].mxu0
  %428 = vdwg.mxu0
  %v429 = vld [vmem:[%s5] sm:$0xff]
  %v430 = vld [vmem:[%s5 + $0x8] sm:$0xff]
  %v431 = vld [vmem:[%s5 + $0x10] sm:$0xff]
  %v432 = vld [vmem:[%s5 + $0x18] sm:$0xff]
  %v433 = vld [vmem:[%s5 + $0x20] sm:$0xff]
  %v434 = vld [vmem:[%s5 + $0x28] sm:$0xff]
  %v435 = vld [vmem:[%s5 + $0x30] sm:$0xff]
  %v436 = vld [vmem:[%s5 + $0x38] sm:$0xff]
  %vm437 = vcmask 64512
  %v439 = vsel %vm437, %v429, 0
  %v442 = vsel %vm437, %v430, 0
  %v445 = vsel %vm437, %v431, 0
  %v448 = vsel %vm437, %v432, 0
  %v451 = vsel %vm437, %v433, 0
  %v454 = vsel %vm437, %v434, 0
  %v457 = vsel %vm437, %v435, 0
  %v460 = vsel %vm437, %v436, 0
  %462 = vmatprep.subr.mxu0 0.0
  %463 = vmatpush1.msra.mxu0 %v426
  %464 = vmatprep.subr.mxu0 0.0
  %465 = vmatpush1.msra.mxu0 0.0
  %466 = vmatprep.subr.mxu0 0.0
  %467 = vmatpush1.msra.mxu0 0.0
  %468 = vmatprep.subr.mxu0 0.0
  %469 = vmatpush1.msra.mxu0 0.0
  %470 = vmatprep.subr.mxu0 0.0
  %471 = vmatpush1.msra.mxu0 0.0
  %472 = vmatprep.subr.mxu0 0.0
  %473 = vmatpush1.msra.mxu0 0.0
  %474 = vmatprep.subr.mxu0 0.0
  %475 = vmatpush1.msra.mxu0 0.0
  %476 = vmatprep.subr.mxu0 0.0
  %477 = vmatpush1.msra.mxu0 0.0
  %478 = vmatprep.subr.mxu0 0.0
  %479 = vmatpush1.msra.mxu0 0.0
  %480 = vmatprep.subr.mxu0 0.0
  %481 = vmatpush1.msra.mxu0 0.0
  %482 = vmatprep.subr.mxu0 0.0
  %483 = vmatpush1.msra.mxu0 0.0
  %484 = vmatprep.subr.mxu0 0.0
  %485 = vmatpush1.msra.mxu0 0.0
  %486 = vmatprep.subr.mxu0 0.0
  %487 = vmatpush1.msra.mxu0 0.0
  %488 = vmatprep.subr.mxu0 0.0
  %489 = vmatpush1.msra.mxu0 0.0
  %490 = vmatprep.subr.mxu0 0.0
  %491 = vmatpush1.msra.mxu0 0.0
  %492 = vmatprep.subr.mxu0 0.0
  %493 = vmatpush1.msra.mxu0 0.0
  %494 = vmatprep.subr.mxu0 0.0
  %495 = vmatpush1.msra.mxu0 0.0
  %496 = vmatprep.subr.mxu0 0.0
  %497 = vmatpush1.msra.mxu0 0.0
  %498 = vmatprep.subr.mxu0 0.0
  %499 = vmatpush1.msra.mxu0 0.0
  %500 = vmatprep.subr.mxu0 0.0
  %501 = vmatpush1.msra.mxu0 0.0
  %502 = vmatprep.subr.mxu0 0.0
  %503 = vmatpush1.msra.mxu0 0.0
  %504 = vmatprep.subr.mxu0 0.0
  %505 = vmatpush1.msra.mxu0 0.0
  %506 = vmatprep.subr.mxu0 0.0
  %507 = vmatpush1.msra.mxu0 0.0
  %508 = vmatprep.subr.mxu0 0.0
  %509 = vmatpush1.msra.mxu0 0.0
  %510 = vmatprep.subr.mxu0 0.0
  %511 = vmatpush1.msra.mxu0 0.0
  %512 = vmatprep.subr.mxu0 0.0
  %513 = vmatpush1.msra.mxu0 0.0
  %514 = vmatprep.subr.mxu0 0.0
  %515 = vmatpush1.msra.mxu0 0.0
  %516 = vmatprep.subr.mxu0 0.0
  %517 = vmatpush1.msra.mxu0 0.0
  %518 = vmatprep.subr.mxu0 0.0
  %519 = vmatpush1.msra.mxu0 0.0
  %520 = vmatprep.subr.mxu0 0.0
  %521 = vmatpush1.msra.mxu0 0.0
  %522 = vmatprep.subr.mxu0 0.0
  %523 = vmatpush1.msra.mxu0 0.0
  %524 = vmatprep.subr.mxu0 0.0
  %525 = vmatpush1.msra.mxu0 0.0
  %526 = vmatprep.mubr.f32.mxu0 0.0
  %527 = vmatmul.mubr.f32.gmra.mrb[0].mxu0 %v439
  %v528 = vpop.f32.mrb[0].mxu0
  %v529 = vadd.f32 0.0, %v528
  %v530 = vpop.f32.mrb[0].mxu0
  %531 = vmatprep.mubr.f32.mxu0 0.0
  %532 = vmatmul.mubr.f32.gmra.mrb[0].mxu0 %v442
  %v533 = vpop.f32.mrb[0].mxu0
  %v534 = vadd.f32 0.0, %v533
  %v535 = vpop.f32.mrb[0].mxu0
  %536 = vmatprep.mubr.f32.mxu0 0.0
  %537 = vmatmul.mubr.f32.gmra.mrb[0].mxu0 %v445
  %v538 = vpop.f32.mrb[0].mxu0
  %v539 = vadd.f32 0.0, %v538
  %v540 = vpop.f32.mrb[0].mxu0
  %541 = vmatprep.mubr.f32.mxu0 0.0
  %542 = vmatmul.mubr.f32.gmra.mrb[0].mxu0 %v448
  %v543 = vpop.f32.mrb[0].mxu0
  %v544 = vadd.f32 0.0, %v543
  %v545 = vpop.f32.mrb[0].mxu0
  %546 = vmatprep.mubr.f32.mxu0 0.0
  %547 = vmatmul.mubr.f32.gmra.mrb[0].mxu0 %v451
  %v548 = vpop.f32.mrb[0].mxu0
  %v549 = vadd.f32 0.0, %v548
  %v550 = vpop.f32.mrb[0].mxu0
  %551 = vmatprep.mubr.f32.mxu0 0.0
  %552 = vmatmul.mubr.f32.gmra.mrb[0].mxu0 %v454
  %v553 = vpop.f32.mrb[0].mxu0
  %v554 = vadd.f32 0.0, %v553
  %v555 = vpop.f32.mrb[0].mxu0
  %556 = vmatprep.mubr.f32.mxu0 0.0
  %557 = vmatmul.mubr.f32.gmra.mrb[0].mxu0 %v457
  %v558 = vpop.f32.mrb[0].mxu0
  %v559 = vadd.f32 0.0, %v558
  %v560 = vpop.f32.mrb[0].mxu0
  %561 = vmatprep.mubr.f32.mxu0 0.0
  %562 = vmatmul.mubr.f32.gmra.mrb[0].mxu0 %v460
  %v563 = vpop.f32.mrb[0].mxu0
  %v564 = vadd.f32 0.0, %v563
  %v565 = vpop.f32.mrb[0].mxu0
  %566 = vdwg.mxu0
  %v567 = vrcp.pop %v529
  %v568 = vmul.f32 %v340, %v567
  %v569 = vrcp.pop %v534
  %v570 = vmul.f32 %v342, %v569
  %v571 = vrcp.pop %v539
  %v572 = vmul.f32 %v344, %v571
  %v573 = vrcp.pop %v544
  %v574 = vmul.f32 %v346, %v573
  %v575 = vrcp.pop %v549
  %v576 = vmul.f32 %v348, %v575
  %v577 = vrcp.pop %v554
  %v578 = vmul.f32 %v350, %v577
  %v579 = vrcp.pop %v559
  %v580 = vmul.f32 %v352, %v579
  %v581 = vrcp.pop %v564
  %v582 = vmul.f32 %v354, %v581
  %584 = vset.pattern.permute.xlu0 0
  %585 = vperm.xlu0 %584, %v568
  %v586 = vpop.permute.xlu0 %585
  %589 = vset.pattern.permute.xlu0 0
  %590 = vperm.xlu0 %589, %v570
  %v591 = vpop.permute.xlu0 %590
  %594 = vset.pattern.permute.xlu0 0
  %595 = vperm.xlu0 %594, %v572
  %v596 = vpop.permute.xlu0 %595
  %599 = vset.pattern.permute.xlu0 0
  %600 = vperm.xlu0 %599, %v574
  %v601 = vpop.permute.xlu0 %600
  %604 = vset.pattern.permute.xlu0 0
  %605 = vperm.xlu0 %604, %v576
  %v606 = vpop.permute.xlu0 %605
  %609 = vset.pattern.permute.xlu0 0
  %610 = vperm.xlu0 %609, %v578
  %v611 = vpop.permute.xlu0 %610
  %614 = vset.pattern.permute.xlu0 0
  %615 = vperm.xlu0 %614, %v580
  %v616 = vpop.permute.xlu0 %615
  %619 = vset.pattern.permute.xlu0 0
  %620 = vperm.xlu0 %619, %v582
  %v621 = vpop.permute.xlu0 %620
  %v623 = vmul.f32 %v586, %v23
  %v624 = vmul.f32 %v591, %v24
  %v625 = vmul.f32 %v596, %v25
  %v626 = vmul.f32 %v601, %v26
  %v627 = vmul.f32 %v606, %v27
  %v628 = vmul.f32 %v611, %v28
  %v629 = vmul.f32 %v616, %v29
  %v630 = vmul.f32 %v621, %v30
  %631 = vmatprep.subr.mxu0 0.0
  %632 = vmatpush1.msra.mxu0 %v623
  %633 = vmatprep.subr.mxu0 0.0
  %634 = vmatpush1.msra.mxu0 %v624
  %635 = vmatprep.subr.mxu0 0.0
  %636 = vmatpush1.msra.mxu0 %v625
  %637 = vmatprep.subr.mxu0 0.0
  %638 = vmatpush1.msra.mxu0 %v626
  %639 = vmatprep.subr.mxu0 0.0
  %640 = vmatpush1.msra.mxu0 %v627
  %641 = vmatprep.subr.mxu0 0.0
  %642 = vmatpush1.msra.mxu0 %v628
  %643 = vmatprep.subr.mxu0 0.0
  %644 = vmatpush1.msra.mxu0 %v629
  %645 = vmatprep.subr.mxu0 0.0
  %646 = vmatpush1.msra.mxu0 %v630
  %647 = vmatprep.subr.mxu0 0.0
  %648 = vmatpush1.msra.mxu0 0.0
  %649 = vmatprep.subr.mxu0 0.0
  %650 = vmatpush1.msra.mxu0 0.0
  %651 = vmatprep.subr.mxu0 0.0
  %652 = vmatpush1.msra.mxu0 0.0
  %653 = vmatprep.subr.mxu0 0.0
  %654 = vmatpush1.msra.mxu0 0.0
  %655 = vmatprep.subr.mxu0 0.0
  %656 = vmatpush1.msra.mxu0 0.0
  %657 = vmatprep.subr.mxu0 0.0
  %658 = vmatpush1.msra.mxu0 0.0
  %659 = vmatprep.subr.mxu0 0.0
  %660 = vmatpush1.msra.mxu0 0.0
  %661 = vmatprep.subr.mxu0 0.0
  %662 = vmatpush1.msra.mxu0 0.0
  %663 = vmatprep.subr.mxu0 0.0
  %664 = vmatpush1.msra.mxu0 0.0
  %665 = vmatprep.subr.mxu0 0.0
  %666 = vmatpush1.msra.mxu0 0.0
  %667 = vmatprep.subr.mxu0 0.0
  %668 = vmatpush1.msra.mxu0 0.0
  %669 = vmatprep.subr.mxu0 0.0
  %670 = vmatpush1.msra.mxu0 0.0
  %671 = vmatprep.subr.mxu0 0.0
  %672 = vmatpush1.msra.mxu0 0.0
  %673 = vmatprep.subr.mxu0 0.0
  %674 = vmatpush1.msra.mxu0 0.0
  %675 = vmatprep.subr.mxu0 0.0
  %676 = vmatpush1.msra.mxu0 0.0
  %677 = vmatprep.subr.mxu0 0.0
  %678 = vmatpush1.msra.mxu0 0.0
  %679 = vmatprep.subr.mxu0 0.0
  %680 = vmatpush1.msra.mxu0 0.0
  %681 = vmatprep.subr.mxu0 0.0
  %682 = vmatpush1.msra.mxu0 0.0
  %683 = vmatprep.subr.mxu0 0.0
  %684 = vmatpush1.msra.mxu0 0.0
  %685 = vmatprep.subr.mxu0 0.0
  %686 = vmatpush1.msra.mxu0 0.0
  %687 = vmatprep.subr.mxu0 0.0
  %688 = vmatpush1.msra.mxu0 0.0
  %689 = vmatprep.subr.mxu0 0.0
  %690 = vmatpush1.msra.mxu0 0.0
  %691 = vmatprep.subr.mxu0 0.0
  %692 = vmatpush1.msra.mxu0 0.0
  %693 = vmatprep.subr.mxu0 0.0
  %694 = vmatpush1.msra.mxu0 0.0
  %695 = vmatprep.mubr.f32.mxu0 0.0
  %696 = vmatmul.mubr.f32.gmra.mrb[0].mxu0 %v357
  %v697 = vpop.f32.mrb[0].mxu0
  %v698 = vadd.f32 0.0, %v697
  %v699 = vpop.f32.mrb[0].mxu0
  %700 = vdwg.mxu0
  %702 = vrot.lane.b32.xlu0 %v698, 64
  %v703 = vpop.permute.xlu0 %702
  %v705 = vsel %vm46, %v30, %v703
  %706 = vst [vmem:[%s6] sm:$0xff] %v705
  // Predicated region
  $region26: #{res_altsm_features.15} parent=0 // pred_check
    _
  $region27: #{res_altsm_features.15} parent=0 // pred_check_branch
    %708 = sbr.rel (0) target = $region29
  $region28: #{res_altsm_features.15} parent=0 // pred_region
    _
  $region29: #{res_altsm_features.15} parent=0 // pred_fallthru
    _
  // Predicated region
  $region30: #{res_altsm_features.15} parent=0 // pred_check
    _
  $region31: #{res_altsm_features.15} parent=0 // pred_check_branch
    %710 = sbr.rel (0) target = $region33
  $region32: #{res_altsm_features.15} parent=0 // pred_region
    _
  $region33: #{res_altsm_features.15} parent=0 // pred_fallthru
    _

// kernel: res_altsm_features.10
$region0: #{res_altsm_features.10}
  #allocation0 [shape = 'u32[]', space=smem, size = 0x4, offset = 0x4, fixed_abs, tag = 'smem constant byte address 0x4 - core index']
  #allocation1 [shape = 'u32[144,128]{1,0:T(1,128)}', space=vmem, size = 0x12000, scoped, tag = 'internal scratch']
  #allocation2 [shape = 'f32[64,192]{1,0:T(8,128)}', space=vmem, size = 0x10000, scoped, tag = 'scratch operand']
  %s0 = inlined_call_operand.vmem [shape: f32[64,64], index: 0, kind: input, shape index: {}]
  %s1 = inlined_call_operand.vmem [shape: f32[64,192], index: 1, kind: input, shape index: {}]
  %s2 = inlined_call_operand.vmem [shape: bf16[64,192], index: 2, kind: input, shape index: {}]
  %s3 = inlined_call_operand.vmem [shape: f32[1,192], index: 3, kind: input, shape index: {}]
  %s4 = inlined_call_operand.vmem [shape: f32[1,192], index: 4, kind: input, shape index: {}]
  %s5 = inlined_call_operand.vmem [shape: f32[64,64], index: 5, kind: output, shape index: {}]
  %s6 = sld [smem:[#allocation0]]
  $region30: #{res_altsm_features.10} parent=0
    _
  %s8 = ssub.s32 1, %s6
  %s9 = scalar_select 0, %s8, %s6
  // Predicated region
  $region2: #{res_altsm_features.10} parent=0 // pred_check
    _
  $region3: #{res_altsm_features.10} parent=0 // pred_check_branch
    %11 = sbr.rel (0) target = $region5
  $region4: #{res_altsm_features.10} parent=0 // pred_region
    _
  $region5: #{res_altsm_features.10} parent=0 // pred_fallthru
    _
  // Predicated region
  $region6: #{res_altsm_features.10} parent=0 // pred_check
    _
  $region7: #{res_altsm_features.10} parent=0 // pred_check_branch
    %13 = sbr.rel (0) target = $region9
  $region8: #{res_altsm_features.10} parent=0 // pred_region
    _
  $region9: #{res_altsm_features.10} parent=0 // pred_fallthru
    _
  // Predicated region
  $region10: #{res_altsm_features.10} parent=0 // pred_check
    _
  $region11: #{res_altsm_features.10} parent=0 // pred_check_branch
    %15 = sbr.rel (0) target = $region13
  $region12: #{res_altsm_features.10} parent=0 // pred_region
    _
  $region13: #{res_altsm_features.10} parent=0 // pred_fallthru
    _
  // Predicated region
  $region14: #{res_altsm_features.10} parent=0 // pred_check
    _
  $region15: #{res_altsm_features.10} parent=0 // pred_check_branch
    %17 = sbr.rel (0) target = $region17
  $region16: #{res_altsm_features.10} parent=0 // pred_region
    _
  $region17: #{res_altsm_features.10} parent=0 // pred_fallthru
    _
  // Predicated region
  $region18: #{res_altsm_features.10} parent=0 // pred_check
    _
  $region19: #{res_altsm_features.10} parent=0 // pred_check_branch
    %19 = sbr.rel (0) target = $region21
  $region20: #{res_altsm_features.10} parent=0 // pred_region
    _
  $region21: #{res_altsm_features.10} parent=0 // pred_fallthru
    _
  %v21 = vld [vmem:[%s0] sm:$0xff]
  %v22 = vld [vmem:[%s0 + $0x8] sm:$0xff]
  %v23 = vld [vmem:[%s0 + $0x10] sm:$0xff]
  %v24 = vld [vmem:[%s0 + $0x18] sm:$0xff]
  %v25 = vld [vmem:[%s0 + $0x20] sm:$0xff]
  %v26 = vld [vmem:[%s0 + $0x28] sm:$0xff]
  %v27 = vld [vmem:[%s0 + $0x30] sm:$0xff]
  %v28 = vld [vmem:[%s0 + $0x38] sm:$0xff]
  %v29 = vld [vmem:[%s1] sm:$0xff]
  %v30 = vld [vmem:[%s1 + $0x8] sm:$0xff]
  %v31 = vld [vmem:[%s1 + $0x10] sm:$0xff]
  %v32 = vld [vmem:[%s1 + $0x18] sm:$0xff]
  %v33 = vld [vmem:[%s1 + $0x20] sm:$0xff]
  %v34 = vld [vmem:[%s1 + $0x28] sm:$0xff]
  %v35 = vld [vmem:[%s1 + $0x30] sm:$0xff]
  %v36 = vld [vmem:[%s1 + $0x38] sm:$0xff]
  %v37 = vld [vmem:[%s1 + $0x40] sm:$0xff]
  %v38 = vld [vmem:[%s1 + $0x48] sm:$0xff]
  %v39 = vld [vmem:[%s1 + $0x50] sm:$0xff]
  %v40 = vld [vmem:[%s1 + $0x58] sm:$0xff]
  %v41 = vld [vmem:[%s1 + $0x60] sm:$0xff]
  %v42 = vld [vmem:[%s1 + $0x68] sm:$0xff]
  %v43 = vld [vmem:[%s1 + $0x70] sm:$0xff]
  %v44 = vld [vmem:[%s1 + $0x78] sm:$0xff]
  %v45 = vld [vmem:[%s3] sm:$0x3]
  %v47 = vlaneseq
  %v48 = vshrl.u32 %v47, 7
  %v49 = vsub.s32 0, %v48
  %v50 = vrot.slane %v45, %v49
  %v51 = vlaneseq
  %v52 = vshrl.u32 %v51, 7
  %v53 = vsub.s32 1, %v52
  %v54 = vrot.slane %v45, %v53
  %vm57 = vcmask 523264
  %v59 = vsel %vm57, %v21, 0
  %v62 = vsel %vm57, %v22, 0
  %v65 = vsel %vm57, %v23, 0
  %v68 = vsel %vm57, %v24, 0
  %v71 = vsel %vm57, %v25, 0
  %v74 = vsel %vm57, %v26, 0
  %v77 = vsel %vm57, %v27, 0
  %v80 = vsel %vm57, %v28, 0
  %82 = vmatprep.subr.mxu0 %v30
  %83 = vmatpush1.msra.mxu0 %v29
  %84 = vmatprep.subr.mxu0 %v32
  %85 = vmatpush1.msra.mxu0 %v31
  %86 = vmatprep.subr.mxu0 %v34
  %87 = vmatpush1.msra.mxu0 %v33
  %88 = vmatprep.subr.mxu0 %v36
  %89 = vmatpush1.msra.mxu0 %v35
  %90 = vmatprep.subr.mxu0 %v38
  %91 = vmatpush1.msra.mxu0 %v37
  %92 = vmatprep.subr.mxu0 %v40
  %93 = vmatpush1.msra.mxu0 %v39
  %94 = vmatprep.subr.mxu0 %v42
  %95 = vmatpush1.msra.mxu0 %v41
  %96 = vmatprep.subr.mxu0 %v44
  %97 = vmatpush1.msra.mxu0 %v43
  %98 = vmatprep.subr.mxu0 0.0
  %99 = vmatpush1.msra.mxu0 0.0
  %100 = vmatprep.subr.mxu0 0.0
  %101 = vmatpush1.msra.mxu0 0.0
  %102 = vmatprep.subr.mxu0 0.0
  %103 = vmatpush1.msra.mxu0 0.0
  %104 = vmatprep.subr.mxu0 0.0
  %105 = vmatpush1.msra.mxu0 0.0
  %106 = vmatprep.subr.mxu0 0.0
  %107 = vmatpush1.msra.mxu0 0.0
  %108 = vmatprep.subr.mxu0 0.0
  %109 = vmatpush1.msra.mxu0 0.0
  %110 = vmatprep.subr.mxu0 0.0
  %111 = vmatpush1.msra.mxu0 0.0
  %112 = vmatprep.subr.mxu0 0.0
  %113 = vmatpush1.msra.mxu0 0.0
  %114 = vmatprep.subr.mxu0 0.0
  %115 = vmatpush1.msra.mxu0 0.0
  %116 = vmatprep.subr.mxu0 0.0
  %117 = vmatpush1.msra.mxu0 0.0
  %118 = vmatprep.subr.mxu0 0.0
  %119 = vmatpush1.msra.mxu0 0.0
  %120 = vmatprep.subr.mxu0 0.0
  %121 = vmatpush1.msra.mxu0 0.0
  %122 = vmatprep.subr.mxu0 0.0
  %123 = vmatpush1.msra.mxu0 0.0
  %124 = vmatprep.subr.mxu0 0.0
  %125 = vmatpush1.msra.mxu0 0.0
  %126 = vmatprep.subr.mxu0 0.0
  %127 = vmatpush1.msra.mxu0 0.0
  %128 = vmatprep.subr.mxu0 0.0
  %129 = vmatpush1.msra.mxu0 0.0
  %130 = vmatprep.subr.mxu0 0.0
  %131 = vmatpush1.msra.mxu0 0.0
  %132 = vmatprep.subr.mxu0 0.0
  %133 = vmatpush1.msra.mxu0 0.0
  %134 = vmatprep.subr.mxu0 0.0
  %135 = vmatpush1.msra.mxu0 0.0
  %136 = vmatprep.subr.mxu0 0.0
  %137 = vmatpush1.msra.mxu0 0.0
  %138 = vmatprep.subr.mxu0 0.0
  %139 = vmatpush1.msra.mxu0 0.0
  %140 = vmatprep.subr.mxu0 0.0
  %141 = vmatpush1.msra.mxu0 0.0
  %142 = vmatprep.subr.mxu0 0.0
  %143 = vmatpush1.msra.mxu0 0.0
  %144 = vmatprep.subr.mxu0 0.0
  %145 = vmatpush1.msra.mxu0 0.0
  %146 = vmatprep.mubr.f32.mxu0 0.0
  %147 = vmatmul.mubr.f32.gmra.mrb[0].mxu0 %v59
  %v148 = vpop.f32.mrb[0].mxu0
  %v149 = vadd.f32 %v50, %v148
  %v150 = vpop.f32.mrb[0].mxu0
  %v151 = vadd.f32 %v54, %v150
  %152 = vmatprep.mubr.f32.mxu0 0.0
  %153 = vmatmul.mubr.f32.gmra.mrb[0].mxu0 %v62
  %v154 = vpop.f32.mrb[0].mxu0
  %v155 = vadd.f32 %v50, %v154
  %v156 = vpop.f32.mrb[0].mxu0
  %v157 = vadd.f32 %v54, %v156
  %158 = vmatprep.mubr.f32.mxu0 0.0
  %159 = vmatmul.mubr.f32.gmra.mrb[0].mxu0 %v65
  %v160 = vpop.f32.mrb[0].mxu0
  %v161 = vadd.f32 %v50, %v160
  %v162 = vpop.f32.mrb[0].mxu0
  %v163 = vadd.f32 %v54, %v162
  %164 = vmatprep.mubr.f32.mxu0 0.0
  %165 = vmatmul.mubr.f32.gmra.mrb[0].mxu0 %v68
  %v166 = vpop.f32.mrb[0].mxu0
  %v167 = vadd.f32 %v50, %v166
  %v168 = vpop.f32.mrb[0].mxu0
  %v169 = vadd.f32 %v54, %v168
  %170 = vmatprep.mubr.f32.mxu0 0.0
  %171 = vmatmul.mubr.f32.gmra.mrb[0].mxu0 %v71
  %v172 = vpop.f32.mrb[0].mxu0
  %v173 = vadd.f32 %v50, %v172
  %v174 = vpop.f32.mrb[0].mxu0
  %v175 = vadd.f32 %v54, %v174
  %176 = vmatprep.mubr.f32.mxu0 0.0
  %177 = vmatmul.mubr.f32.gmra.mrb[0].mxu0 %v74
  %v178 = vpop.f32.mrb[0].mxu0
  %v179 = vadd.f32 %v50, %v178
  %v180 = vpop.f32.mrb[0].mxu0
  %v181 = vadd.f32 %v54, %v180
  %182 = vmatprep.mubr.f32.mxu0 0.0
  %183 = vmatmul.mubr.f32.gmra.mrb[0].mxu0 %v77
  %v184 = vpop.f32.mrb[0].mxu0
  %v185 = vadd.f32 %v50, %v184
  %v186 = vpop.f32.mrb[0].mxu0
  %v187 = vadd.f32 %v54, %v186
  %188 = vmatprep.mubr.f32.mxu0 0.0
  %189 = vmatmul.mubr.f32.gmra.mrb[0].mxu0 %v80
  %v190 = vpop.f32.mrb[0].mxu0
  %v191 = vadd.f32 %v50, %v190
  %v192 = vpop.f32.mrb[0].mxu0
  %v193 = vadd.f32 %v54, %v192
  %194 = vdwg.mxu0
  %195 = vst [vmem:[#allocation2] sm:$0xff] %v149
  %196 = vst.msk [vmem:[#allocation2 + $0x8] sm:$0xff] %vm57, %v151
  %197 = vst [vmem:[#allocation2 + $0x10] sm:$0xff] %v155
  %198 = vst.msk [vmem:[#allocation2 + $0x18] sm:$0xff] %vm57, %v157
  %199 = vst [vmem:[#allocation2 + $0x20] sm:$0xff] %v161
  %200 = vst.msk [vmem:[#allocation2 + $0x28] sm:$0xff] %vm57, %v163
  %201 = vst [vmem:[#allocation2 + $0x30] sm:$0xff] %v167
  %202 = vst.msk [vmem:[#allocation2 + $0x38] sm:$0xff] %vm57, %v169
  %203 = vst [vmem:[#allocation2 + $0x40] sm:$0xff] %v173
  %204 = vst.msk [vmem:[#allocation2 + $0x48] sm:$0xff] %vm57, %v175
  %205 = vst [vmem:[#allocation2 + $0x50] sm:$0xff] %v179
  %206 = vst.msk [vmem:[#allocation2 + $0x58] sm:$0xff] %vm57, %v181
  %207 = vst [vmem:[#allocation2 + $0x60] sm:$0xff] %v185
  %208 = vst.msk [vmem:[#allocation2 + $0x68] sm:$0xff] %vm57, %v187
  %209 = vst [vmem:[#allocation2 + $0x70] sm:$0xff] %v191
  %210 = vst.msk [vmem:[#allocation2 + $0x78] sm:$0xff] %vm57, %v193
  %v211 = vld [vmem:[%s4] sm:$0x3]
  %v212 = vpack.c.bf16 0.0, 0.0
  %v213 = vld [vmem:[%s2] sm:$0xff]
  %v214 = vld [vmem:[%s2 + $0x8] sm:$0xff]
  %v215 = vld [vmem:[%s2 + $0x10] sm:$0xff]
  %v216 = vld [vmem:[%s2 + $0x18] sm:$0xff]
  %v217 = vld [vmem:[%s2 + $0x20] sm:$0xff]
  %v218 = vld [vmem:[%s2 + $0x28] sm:$0xff]
  %v219 = vld [vmem:[%s2 + $0x30] sm:$0xff]
  %v220 = vld [vmem:[%s2 + $0x38] sm:$0xff]
  %v222 = vlaneseq
  %v223 = vshrl.u32 %v222, 7
  %v224 = vsub.s32 0, %v223
  %v225 = vrot.slane %v211, %v224
  %v226 = vlaneseq
  %v227 = vshrl.u32 %v226, 7
  %v228 = vsub.s32 1, %v227
  %v229 = vrot.slane %v211, %v228
  %v240 = vunpack.c.l.b16 %v213
  %v241 = vunpack.c.h.b16 %v213
  %v242 = vunpack.c.l.b16 %v214
  %v243 = vunpack.c.h.b16 %v214
  %v244 = vunpack.c.l.b16 %v215
  %v245 = vunpack.c.h.b16 %v215
  %v246 = vunpack.c.l.b16 %v216
  %v247 = vunpack.c.h.b16 %v216
  %v248 = vunpack.c.l.b16 %v217
  %v249 = vunpack.c.h.b16 %v217
  %v250 = vunpack.c.l.b16 %v218
  %v251 = vunpack.c.h.b16 %v218
  %v252 = vunpack.c.l.b16 %v219
  %v253 = vunpack.c.h.b16 %v219
  %v254 = vunpack.c.l.b16 %v220
  %v255 = vunpack.c.h.b16 %v220
  %v256 = vpack.c.b16 %v242, %v240
  %v257 = vpack.c.b16 %v243, %v241
  %v258 = vpack.c.b16 %v246, %v244
  %v259 = vpack.c.b16 %v247, %v245
  %v260 = vpack.c.b16 %v250, %v248
  %v261 = vpack.c.b16 %v251, %v249
  %v262 = vpack.c.b16 %v254, %v252
  %v263 = vpack.c.b16 %v255, %v253
  %v273 = vsel %vm57, %v212, 0
  %275 = vmatprep.subr.bf16.mxu0 %v257
  %276 = vmatpush1.bf16.msra.mxu0 %v256
  %277 = vmatprep.subr.bf16.mxu0 %v259
  %278 = vmatpush1.bf16.msra.mxu0 %v258
  %279 = vmatprep.subr.bf16.mxu0 %v261
  %280 = vmatpush1.bf16.msra.mxu0 %v260
  %281 = vmatprep.subr.bf16.mxu0 %v263
  %282 = vmatpush1.bf16.msra.mxu0 %v262
  %283 = vmatprep.subr.bf16.mxu0 0
  %284 = vmatpush1.bf16.msra.mxu0 0
  %285 = vmatprep.subr.bf16.mxu0 0
  %286 = vmatpush1.bf16.msra.mxu0 0
  %287 = vmatprep.subr.bf16.mxu0 0
  %288 = vmatpush1.bf16.msra.mxu0 0
  %289 = vmatprep.subr.bf16.mxu0 0
  %290 = vmatpush1.bf16.msra.mxu0 0
  %291 = vmatprep.subr.bf16.mxu0 0
  %292 = vmatpush1.bf16.msra.mxu0 0
  %293 = vmatprep.subr.bf16.mxu0 0
  %294 = vmatpush1.bf16.msra.mxu0 0
  %295 = vmatprep.subr.bf16.mxu0 0
  %296 = vmatpush1.bf16.msra.mxu0 0
  %297 = vmatprep.subr.bf16.mxu0 0
  %298 = vmatpush1.bf16.msra.mxu0 0
  %299 = vmatprep.subr.bf16.mxu0 0
  %300 = vmatpush1.bf16.msra.mxu0 0
  %301 = vmatprep.subr.bf16.mxu0 0
  %302 = vmatpush1.bf16.msra.mxu0 0
  %303 = vmatprep.subr.bf16.mxu0 0
  %304 = vmatpush1.bf16.msra.mxu0 0
  %305 = vmatprep.subr.bf16.mxu0 0
  %306 = vmatpush1.bf16.msra.mxu0 0
  %307 = vmatprep.mubr.bf16.mxu0 0
  %308 = vmatmul.mubr.bf16.gmra.mrb[0].mxu0 %v273
  %v309 = vpop.f32.mrb[0].mxu0
  %v310 = vadd.f32 %v225, %v309
  %v311 = vpop.f32.mrb[0].mxu0
  %v312 = vadd.f32 %v229, %v311
  %v313 = vpop.f32.mrb[0].mxu0
  %v314 = vpop.f32.mrb[0].mxu0
  %315 = vdwg.mxu0
  %v316 = vld [vmem:[#allocation2] sm:$0xff]
  %v317 = vld [vmem:[#allocation2 + $0x70] sm:$0xff]
  %v318 = vld [vmem:[#allocation2 + $0x78] sm:$0xff]
  %v319 = vadd.f32 %v316, %v310
  %v320 = vxor.u32 %v319, 2147483648
  %v321 = vmul.f32 %v320, 1.442695
  %v322 = vpow.pop %v321
  %v323 = vadd.f32 %v322, 1.0
  %v324 = vrcp.pop %v323
  %v325 = vmul.f32 1.0, %v324
  %327 = vrot.lane.b32.xlu0 %v310, 64
  %v328 = vpop.permute.xlu0 %327
  %v330 = vmul.f32 %v325, %v328
  %332 = vrot.lane.b32.xlu0 %v330, 64
  %v333 = vpop.permute.xlu0 %332
  %v335 = vadd.f32 %v316, %v333
  %v336 = vtanh.pop %v335
  %v337 = vsub.f32 1.0, %v325
  %339 = vrot.lane.b32.xlu0 %v336, 96
  %v340 = vpop.permute.xlu0 %339
  %v342 = vmul.f32 %v337, %v340
  %v343 = vmul.f32 %v325, 0.0
  %v344 = vadd.f32 %v342, %v343
  %v345 = vadd.f32 %v317, %v310
  %v346 = vxor.u32 %v345, 2147483648
  %v347 = vmul.f32 %v346, 1.442695
  %v348 = vpow.pop %v347
  %v349 = vadd.f32 %v348, 1.0
  %v350 = vrcp.pop %v349
  %v351 = vmul.f32 1.0, %v350
  %v352 = vadd.f32 %v318, %v312
  %v353 = vxor.u32 %v352, 2147483648
  %v354 = vmul.f32 %v353, 1.442695
  %v355 = vpow.pop %v354
  %v356 = vadd.f32 %v355, 1.0
  %v357 = vrcp.pop %v356
  %v358 = vmul.f32 1.0, %v357
  %360 = vrot.lane.b32.xlu0 %v312, 64
  %v361 = vpop.permute.xlu0 %360
  %v363 = vmul.f32 %v351, %v361
  %365 = vrot.lane.b32.xlu0 %v363, 64
  %v366 = vpop.permute.xlu0 %365
  %v368 = vadd.f32 %v318, %v366
  %v369 = vtanh.pop %v368
  %v370 = vsub.f32 1.0, %v358
  %372 = vrot.lane.b32.xlu0 %v369, 96
  %v373 = vpop.permute.xlu0 %372
  %v375 = vmul.f32 %v370, %v373
  %v376 = vmul.f32 %v358, 0.0
  %v377 = vadd.f32 %v375, %v376
  %379 = vrot.lane.b32.xlu0 %v344, 96
  %v380 = vpop.permute.xlu0 %379
  %vm382 = vcmask 261120
  %383 = vst.msk [vmem:[%s5] sm:$0xff] %vm382, %v380
  %385 = vrot.lane.b32.xlu0 %v377, 32
  %v386 = vpop.permute.xlu0 %385
  %vm388 = vcmask 523520
  %389 = vst.msk [vmem:[%s5 + $0x38] sm:$0xff] %vm388, %v386
  %v390 = vsel %vm382, %v380, %v386
  %v391 = vpack.c.bf16 %v390, %v390
  %v392 = vld [vmem:[%s2] sm:$0xff]
  %v393 = vld [vmem:[%s2 + $0x8] sm:$0xff]
  %v394 = vld [vmem:[%s2 + $0x10] sm:$0xff]
  %v395 = vld [vmem:[%s2 + $0x18] sm:$0xff]
  %v396 = vld [vmem:[%s2 + $0x20] sm:$0xff]
  %v397 = vld [vmem:[%s2 + $0x28] sm:$0xff]
  %v398 = vld [vmem:[%s2 + $0x30] sm:$0xff]
  %v399 = vld [vmem:[%s2 + $0x38] sm:$0xff]
  %v408 = vunpack.c.l.b16 %v392
  %v409 = vunpack.c.h.b16 %v392
  %v410 = vunpack.c.l.b16 %v393
  %v411 = vunpack.c.h.b16 %v393
  %v412 = vunpack.c.l.b16 %v394
  %v413 = vunpack.c.h.b16 %v394
  %v414 = vunpack.c.l.b16 %v395
  %v415 = vunpack.c.h.b16 %v395
  %v416 = vunpack.c.l.b16 %v396
  %v417 = vunpack.c.h.b16 %v396
  %v418 = vunpack.c.l.b16 %v397
  %v419 = vunpack.c.h.b16 %v397
  %v420 = vunpack.c.l.b16 %v398
  %v421 = vunpack.c.h.b16 %v398
  %v422 = vunpack.c.l.b16 %v399
  %v423 = vunpack.c.h.b16 %v399
  %v424 = vpack.c.b16 %v410, %v408
  %v425 = vpack.c.b16 %v411, %v409
  %v426 = vpack.c.b16 %v414, %v412
  %v427 = vpack.c.b16 %v415, %v413
  %v428 = vpack.c.b16 %v418, %v416
  %v429 = vpack.c.b16 %v419, %v417
  %v430 = vpack.c.b16 %v422, %v420
  %v431 = vpack.c.b16 %v423, %v421
  %v441 = vsel %vm57, %v391, 0
  %443 = vmatprep.subr.bf16.mxu0 %v425
  %444 = vmatpush1.bf16.msra.mxu0 %v424
  %445 = vmatprep.subr.bf16.mxu0 %v427
  %446 = vmatpush1.bf16.msra.mxu0 %v426
  %447 = vmatprep.subr.bf16.mxu0 %v429
  %448 = vmatpush1.bf16.msra.mxu0 %v428
  %449 = vmatprep.subr.bf16.mxu0 %v431
  %450 = vmatpush1.bf16.msra.mxu0 %v430
  %451 = vmatprep.subr.bf16.mxu0 0
  %452 = vmatpush1.bf16.msra.mxu0 0
  %453 = vmatprep.subr.bf16.mxu0 0
  %454 = vmatpush1.bf16.msra.mxu0 0
  %455 = vmatprep.subr.bf16.mxu0 0
  %456 = vmatpush1.bf16.msra.mxu0 0
  %457 = vmatprep.subr.bf16.mxu0 0
  %458 = vmatpush1.bf16.msra.mxu0 0
  %459 = vmatprep.subr.bf16.mxu0 0
  %460 = vmatpush1.bf16.msra.mxu0 0
  %461 = vmatprep.subr.bf16.mxu0 0
  %462 = vmatpush1.bf16.msra.mxu0 0
  %463 = vmatprep.subr.bf16.mxu0 0
  %464 = vmatpush1.bf16.msra.mxu0 0
  %465 = vmatprep.subr.bf16.mxu0 0
  %466 = vmatpush1.bf16.msra.mxu0 0
  %467 = vmatprep.subr.bf16.mxu0 0
  %468 = vmatpush1.bf16.msra.mxu0 0
  %469 = vmatprep.subr.bf16.mxu0 0
  %470 = vmatpush1.bf16.msra.mxu0 0
  %471 = vmatprep.subr.bf16.mxu0 0
  %472 = vmatpush1.bf16.msra.mxu0 0
  %473 = vmatprep.subr.bf16.mxu0 0
  %474 = vmatpush1.bf16.msra.mxu0 0
  %475 = vmatprep.mubr.bf16.mxu0 0
  %476 = vmatmul.mubr.bf16.gmra.mrb[0].mxu0 %v441
  %v477 = vpop.f32.mrb[0].mxu0
  %v478 = vadd.f32 %v225, %v477
  %v479 = vpop.f32.mrb[0].mxu0
  %v480 = vadd.f32 %v229, %v479
  %v481 = vpop.f32.mrb[0].mxu0
  %v482 = vpop.f32.mrb[0].mxu0
  %483 = vdwg.mxu0
  %v484 = vld [vmem:[#allocation2 + $0x10] sm:$0xff]
  %v485 = vld [vmem:[#allocation2 + $0x60] sm:$0xff]
  %v486 = vld [vmem:[#allocation2 + $0x68] sm:$0xff]
  %v487 = vadd.f32 %v484, %v478
  %v488 = vxor.u32 %v487, 2147483648
  %v489 = vmul.f32 %v488, 1.442695
  %v490 = vpow.pop %v489
  %v491 = vadd.f32 %v490, 1.0
  %v492 = vrcp.pop %v491
  %v493 = vmul.f32 1.0, %v492
  %495 = vrot.lane.b32.xlu0 %v478, 64
  %v496 = vpop.permute.xlu0 %495
  %v498 = vmul.f32 %v493, %v496
  %500 = vrot.lane.b32.xlu0 %v498, 64
  %v501 = vpop.permute.xlu0 %500
  %v503 = vadd.f32 %v484, %v501
  %v504 = vtanh.pop %v503
  %v505 = vsub.f32 1.0, %v493
  %507 = vrot.lane.b32.xlu0 %v504, 96
  %v508 = vpop.permute.xlu0 %507
  %v510 = vmul.f32 %v505, %v508
  %v511 = vmul.f32 %v493, %v344
  %v512 = vadd.f32 %v510, %v511
  %v513 = vadd.f32 %v485, %v478
  %v514 = vxor.u32 %v513, 2147483648
  %v515 = vmul.f32 %v514, 1.442695
  %v516 = vpow.pop %v515
  %v517 = vadd.f32 %v516, 1.0
  %v518 = vrcp.pop %v517
  %v519 = vmul.f32 1.0, %v518
  %v520 = vadd.f32 %v486, %v480
  %v521 = vxor.u32 %v520, 2147483648
  %v522 = vmul.f32 %v521, 1.442695
  %v523 = vpow.pop %v522
  %v524 = vadd.f32 %v523, 1.0
  %v525 = vrcp.pop %v524
  %v526 = vmul.f32 1.0, %v525
  %528 = vrot.lane.b32.xlu0 %v480, 64
  %v529 = vpop.permute.xlu0 %528
  %v531 = vmul.f32 %v519, %v529
  %533 = vrot.lane.b32.xlu0 %v531, 64
  %v534 = vpop.permute.xlu0 %533
  %v536 = vadd.f32 %v486, %v534
  %v537 = vtanh.pop %v536
  %v538 = vsub.f32 1.0, %v526
  %540 = vrot.lane.b32.xlu0 %v537, 96
  %v541 = vpop.permute.xlu0 %540
  %v543 = vmul.f32 %v538, %v541
  %v544 = vmul.f32 %v526, %v377
  %v545 = vadd.f32 %v543, %v544
  %547 = vrot.lane.b32.xlu0 %v512, 96
  %v548 = vpop.permute.xlu0 %547
  %550 = vst.msk [vmem:[%s5 + $0x8] sm:$0xff] %vm382, %v548
  %552 = vrot.lane.b32.xlu0 %v545, 32
  %v553 = vpop.permute.xlu0 %552
  %555 = vst.msk [vmem:[%s5 + $0x30] sm:$0xff] %vm388, %v553
  %v556 = vsel %vm382, %v548, %v553
  %v557 = vpack.c.bf16 %v556, %v556
  %v558 = vld [vmem:[%s2] sm:$0xff]
  %v559 = vld [vmem:[%s2 + $0x8] sm:$0xff]
  %v560 = vld [vmem:[%s2 + $0x10] sm:$0xff]
  %v561 = vld [vmem:[%s2 + $0x18] sm:$0xff]
  %v562 = vld [vmem:[%s2 + $0x20] sm:$0xff]
  %v563 = vld [vmem:[%s2 + $0x28] sm:$0xff]
  %v564 = vld [vmem:[%s2 + $0x30] sm:$0xff]
  %v565 = vld [vmem:[%s2 + $0x38] sm:$0xff]
  %v574 = vunpack.c.l.b16 %v558
  %v575 = vunpack.c.h.b16 %v558
  %v576 = vunpack.c.l.b16 %v559
  %v577 = vunpack.c.h.b16 %v559
  %v578 = vunpack.c.l.b16 %v560
  %v579 = vunpack.c.h.b16 %v560
  %v580 = vunpack.c.l.b16 %v561
  %v581 = vunpack.c.h.b16 %v561
  %v582 = vunpack.c.l.b16 %v562
  %v583 = vunpack.c.h.b16 %v562
  %v584 = vunpack.c.l.b16 %v563
  %v585 = vunpack.c.h.b16 %v563
  %v586 = vunpack.c.l.b16 %v564
  %v587 = vunpack.c.h.b16 %v564
  %v588 = vunpack.c.l.b16 %v565
  %v589 = vunpack.c.h.b16 %v565
  %v590 = vpack.c.b16 %v576, %v574
  %v591 = vpack.c.b16 %v577, %v575
  %v592 = vpack.c.b16 %v580, %v578
  %v593 = vpack.c.b16 %v581, %v579
  %v594 = vpack.c.b16 %v584, %v582
  %v595 = vpack.c.b16 %v585, %v583
  %v596 = vpack.c.b16 %v588, %v586
  %v597 = vpack.c.b16 %v589, %v587
  %v607 = vsel %vm57, %v557, 0
  %609 = vmatprep.subr.bf16.mxu0 %v591
  %610 = vmatpush1.bf16.msra.mxu0 %v590
  %611 = vmatprep.subr.bf16.mxu0 %v593
  %612 = vmatpush1.bf16.msra.mxu0 %v592
  %613 = vmatprep.subr.bf16.mxu0 %v595
  %614 = vmatpush1.bf16.msra.mxu0 %v594
  %615 = vmatprep.subr.bf16.mxu0 %v597
  %616 = vmatpush1.bf16.msra.mxu0 %v596
  %617 = vmatprep.subr.bf16.mxu0 0
  %618 = vmatpush1.bf16.msra.mxu0 0
  %619 = vmatprep.subr.bf16.mxu0 0
  %620 = vmatpush1.bf16.msra.mxu0 0
  %621 = vmatprep.subr.bf16.mxu0 0
  %622 = vmatpush1.bf16.msra.mxu0 0
  %623 = vmatprep.subr.bf16.mxu0 0
  %624 = vmatpush1.bf16.msra.mxu0 0
  %625 = vmatprep.subr.bf16.mxu0 0
  %626 = vmatpush1.bf16.msra.mxu0 0
  %627 = vmatprep.subr.bf16.mxu0 0
  %628 = vmatpush1.bf16.msra.mxu0 0
  %629 = vmatprep.subr.bf16.mxu0 0
  %630 = vmatpush1.bf16.msra.mxu0 0
  %631 = vmatprep.subr.bf16.mxu0 0
  %632 = vmatpush1.bf16.msra.mxu0 0
  %633 = vmatprep.subr.bf16.mxu0 0
  %634 = vmatpush1.bf16.msra.mxu0 0
  %635 = vmatprep.subr.bf16.mxu0 0
  %636 = vmatpush1.bf16.msra.mxu0 0
  %637 = vmatprep.subr.bf16.mxu0 0
  %638 = vmatpush1.bf16.msra.mxu0 0
  %639 = vmatprep.subr.bf16.mxu0 0
  %640 = vmatpush1.bf16.msra.mxu0 0
  %641 = vmatprep.mubr.bf16.mxu0 0
  %642 = vmatmul.mubr.bf16.gmra.mrb[0].mxu0 %v607
  %v643 = vpop.f32.mrb[0].mxu0
  %v644 = vadd.f32 %v225, %v643
  %v645 = vpop.f32.mrb[0].mxu0
  %v646 = vadd.f32 %v229, %v645
  %v647 = vpop.f32.mrb[0].mxu0
  %v648 = vpop.f32.mrb[0].mxu0
  %649 = vdwg.mxu0
  %v650 = vld [vmem:[#allocation2 + $0x20] sm:$0xff]
  %v651 = vld [vmem:[#allocation2 + $0x50] sm:$0xff]
  %v652 = vld [vmem:[#allocation2 + $0x58] sm:$0xff]
  %v653 = vadd.f32 %v650, %v644
  %v654 = vxor.u32 %v653, 2147483648
  %v655 = vmul.f32 %v654, 1.442695
  %v656 = vpow.pop %v655
  %v657 = vadd.f32 %v656, 1.0
  %v658 = vrcp.pop %v657
  %v659 = vmul.f32 1.0, %v658
  %661 = vrot.lane.b32.xlu0 %v644, 64
  %v662 = vpop.permute.xlu0 %661
  %v664 = vmul.f32 %v659, %v662
  %666 = vrot.lane.b32.xlu0 %v664, 64
  %v667 = vpop.permute.xlu0 %666
  %v669 = vadd.f32 %v650, %v667
  %v670 = vtanh.pop %v669
  %v671 = vsub.f32 1.0, %v659
  %673 = vrot.lane.b32.xlu0 %v670, 96
  %v674 = vpop.permute.xlu0 %673
  %v676 = vmul.f32 %v671, %v674
  %v677 = vmul.f32 %v659, %v512
  %v678 = vadd.f32 %v676, %v677
  %v679 = vadd.f32 %v651, %v644
  %v680 = vxor.u32 %v679, 2147483648
  %v681 = vmul.f32 %v680, 1.442695
  %v682 = vpow.pop %v681
  %v683 = vadd.f32 %v682, 1.0
  %v684 = vrcp.pop %v683
  %v685 = vmul.f32 1.0, %v684
  %v686 = vadd.f32 %v652, %v646
  %v687 = vxor.u32 %v686, 2147483648
  %v688 = vmul.f32 %v687, 1.442695
  %v689 = vpow.pop %v688
  %v690 = vadd.f32 %v689, 1.0
  %v691 = vrcp.pop %v690
  %v692 = vmul.f32 1.0, %v691
  %694 = vrot.lane.b32.xlu0 %v646, 64
  %v695 = vpop.permute.xlu0 %694
  %v697 = vmul.f32 %v685, %v695
  %699 = vrot.lane.b32.xlu0 %v697, 64
  %v700 = vpop.permute.xlu0 %699
  %v702 = vadd.f32 %v652, %v700
  %v703 = vtanh.pop %v702
  %v704 = vsub.f32 1.0, %v692
  %706 = vrot.lane.b32.xlu0 %v703, 96
  %v707 = vpop.permute.xlu0 %706
  %v709 = vmul.f32 %v704, %v707
  %v710 = vmul.f32 %v692, %v545
  %v711 = vadd.f32 %v709, %v710
  %713 = vrot.lane.b32.xlu0 %v678, 96
  %v714 = vpop.permute.xlu0 %713
  %716 = vst.msk [vmem:[%s5 + $0x10] sm:$0xff] %vm382, %v714
  %718 = vrot.lane.b32.xlu0 %v711, 32
  %v719 = vpop.permute.xlu0 %718
  %721 = vst.msk [vmem:[%s5 + $0x28] sm:$0xff] %vm388, %v719
  %v722 = vsel %vm382, %v714, %v719
  %v723 = vpack.c.bf16 %v722, %v722
  %v724 = vld [vmem:[%s2] sm:$0xff]
  %v725 = vld [vmem:[%s2 + $0x8] sm:$0xff]
  %v726 = vld [vmem:[%s2 + $0x10] sm:$0xff]
  %v727 = vld [vmem:[%s2 + $0x18] sm:$0xff]
  %v728 = vld [vmem:[%s2 + $0x20] sm:$0xff]
  %v729 = vld [vmem:[%s2 + $0x28] sm:$0xff]
  %v730 = vld [vmem:[%s2 + $0x30] sm:$0xff]
  %v731 = vld [vmem:[%s2 + $0x38] sm:$0xff]
  %v740 = vunpack.c.l.b16 %v724
  %v741 = vunpack.c.h.b16 %v724
  %v742 = vunpack.c.l.b16 %v725
  %v743 = vunpack.c.h.b16 %v725
  %v744 = vunpack.c.l.b16 %v726
  %v745 = vunpack.c.h.b16 %v726
  %v746 = vunpack.c.l.b16 %v727
  %v747 = vunpack.c.h.b16 %v727
  %v748 = vunpack.c.l.b16 %v728
  %v749 = vunpack.c.h.b16 %v728
  %v750 = vunpack.c.l.b16 %v729
  %v751 = vunpack.c.h.b16 %v729
  %v752 = vunpack.c.l.b16 %v730
  %v753 = vunpack.c.h.b16 %v730
  %v754 = vunpack.c.l.b16 %v731
  %v755 = vunpack.c.h.b16 %v731
  %v756 = vpack.c.b16 %v742, %v740
  %v757 = vpack.c.b16 %v743, %v741
  %v758 = vpack.c.b16 %v746, %v744
  %v759 = vpack.c.b16 %v747, %v745
  %v760 = vpack.c.b16 %v750, %v748
  %v761 = vpack.c.b16 %v751, %v749
  %v762 = vpack.c.b16 %v754, %v752
  %v763 = vpack.c.b16 %v755, %v753
  %v773 = vsel %vm57, %v723, 0
  %775 = vmatprep.subr.bf16.mxu0 %v757
  %776 = vmatpush1.bf16.msra.mxu0 %v756
  %777 = vmatprep.subr.bf16.mxu0 %v759
  %778 = vmatpush1.bf16.msra.mxu0 %v758
  %779 = vmatprep.subr.bf16.mxu0 %v761
  %780 = vmatpush1.bf16.msra.mxu0 %v760
  %781 = vmatprep.subr.bf16.mxu0 %v763
  %782 = vmatpush1.bf16.msra.mxu0 %v762
  %783 = vmatprep.subr.bf16.mxu0 0
  %784 = vmatpush1.bf16.msra.mxu0 0
  %785 = vmatprep.subr.bf16.mxu0 0
  %786 = vmatpush1.bf16.msra.mxu0 0
  %787 = vmatprep.subr.bf16.mxu0 0
  %788 = vmatpush1.bf16.msra.mxu0 0
  %789 = vmatprep.subr.bf16.mxu0 0
  %790 = vmatpush1.bf16.msra.mxu0 0
  %791 = vmatprep.subr.bf16.mxu0 0
  %792 = vmatpush1.bf16.msra.mxu0 0
  %793 = vmatprep.subr.bf16.mxu0 0
  %794 = vmatpush1.bf16.msra.mxu0 0
  %795 = vmatprep.subr.bf16.mxu0 0
  %796 = vmatpush1.bf16.msra.mxu0 0
  %797 = vmatprep.subr.bf16.mxu0 0
  %798 = vmatpush1.bf16.msra.mxu0 0
  %799 = vmatprep.subr.bf16.mxu0 0
  %800 = vmatpush1.bf16.msra.mxu0 0
  %801 = vmatprep.subr.bf16.mxu0 0
  %802 = vmatpush1.bf16.msra.mxu0 0
  %803 = vmatprep.subr.bf16.mxu0 0
  %804 = vmatpush1.bf16.msra.mxu0 0
  %805 = vmatprep.subr.bf16.mxu0 0
  %806 = vmatpush1.bf16.msra.mxu0 0
  %807 = vmatprep.mubr.bf16.mxu0 0
  %808 = vmatmul.mubr.bf16.gmra.mrb[0].mxu0 %v773
  %v809 = vpop.f32.mrb[0].mxu0
  %v810 = vadd.f32 %v225, %v809
  %v811 = vpop.f32.mrb[0].mxu0
  %v812 = vadd.f32 %v229, %v811
  %v813 = vpop.f32.mrb[0].mxu0
  %v814 = vpop.f32.mrb[0].mxu0
  %815 = vdwg.mxu0
  %v816 = vld [vmem:[#allocation2 + $0x30] sm:$0xff]
  %v817 = vld [vmem:[#allocation2 + $0x40] sm:$0xff]
  %v818 = vld [vmem:[#allocation2 + $0x48] sm:$0xff]
  %v819 = vadd.f32 %v816, %v810
  %v820 = vxor.u32 %v819, 2147483648
  %v821 = vmul.f32 %v820, 1.442695
  %v822 = vpow.pop %v821
  %v823 = vadd.f32 %v822, 1.0
  %v824 = vrcp.pop %v823
  %v825 = vmul.f32 1.0, %v824
  %827 = vrot.lane.b32.xlu0 %v810, 64
  %v828 = vpop.permute.xlu0 %827
  %v830 = vmul.f32 %v825, %v828
  %832 = vrot.lane.b32.xlu0 %v830, 64
  %v833 = vpop.permute.xlu0 %832
  %v835 = vadd.f32 %v816, %v833
  %v836 = vtanh.pop %v835
  %v837 = vsub.f32 1.0, %v825
  %839 = vrot.lane.b32.xlu0 %v836, 96
  %v840 = vpop.permute.xlu0 %839
  %v842 = vmul.f32 %v837, %v840
  %v843 = vmul.f32 %v825, %v678
  %v844 = vadd.f32 %v842, %v843
  %v845 = vadd.f32 %v817, %v810
  %v846 = vxor.u32 %v845, 2147483648
  %v847 = vmul.f32 %v846, 1.442695
  %v848 = vpow.pop %v847
  %v849 = vadd.f32 %v848, 1.0
  %v850 = vrcp.pop %v849
  %v851 = vmul.f32 1.0, %v850
  %v852 = vadd.f32 %v818, %v812
  %v853 = vxor.u32 %v852, 2147483648
  %v854 = vmul.f32 %v853, 1.442695
  %v855 = vpow.pop %v854
  %v856 = vadd.f32 %v855, 1.0
  %v857 = vrcp.pop %v856
  %v858 = vmul.f32 1.0, %v857
  %860 = vrot.lane.b32.xlu0 %v812, 64
  %v861 = vpop.permute.xlu0 %860
  %v863 = vmul.f32 %v851, %v861
  %865 = vrot.lane.b32.xlu0 %v863, 64
  %v866 = vpop.permute.xlu0 %865
  %v868 = vadd.f32 %v818, %v866
  %v869 = vtanh.pop %v868
  %v870 = vsub.f32 1.0, %v858
  %872 = vrot.lane.b32.xlu0 %v869, 96
  %v873 = vpop.permute.xlu0 %872
  %v875 = vmul.f32 %v870, %v873
  %v876 = vmul.f32 %v858, %v711
  %v877 = vadd.f32 %v875, %v876
  %879 = vrot.lane.b32.xlu0 %v844, 96
  %v880 = vpop.permute.xlu0 %879
  %882 = vst.msk [vmem:[%s5 + $0x18] sm:$0xff] %vm382, %v880
  %884 = vrot.lane.b32.xlu0 %v877, 32
  %v885 = vpop.permute.xlu0 %884
  %887 = vst.msk [vmem:[%s5 + $0x20] sm:$0xff] %vm388, %v885
  %v888 = vsel %vm382, %v880, %v885
  %v889 = vpack.c.bf16 %v888, %v888
  %v890 = vld [vmem:[%s2] sm:$0xff]
  %v891 = vld [vmem:[%s2 + $0x8] sm:$0xff]
  %v892 = vld [vmem:[%s2 + $0x10] sm:$0xff]
  %v893 = vld [vmem:[%s2 + $0x18] sm:$0xff]
  %v894 = vld [vmem:[%s2 + $0x20] sm:$0xff]
  %v895 = vld [vmem:[%s2 + $0x28] sm:$0xff]
  %v896 = vld [vmem:[%s2 + $0x30] sm:$0xff]
  %v897 = vld [vmem:[%s2 + $0x38] sm:$0xff]
  %v906 = vunpack.c.l.b16 %v890
  %v907 = vunpack.c.h.b16 %v890
  %v908 = vunpack.c.l.b16 %v891
  %v909 = vunpack.c.h.b16 %v891
  %v910 = vunpack.c.l.b16 %v892
  %v911 = vunpack.c.h.b16 %v892
  %v912 = vunpack.c.l.b16 %v893
  %v913 = vunpack.c.h.b16 %v893
  %v914 = vunpack.c.l.b16 %v894
  %v915 = vunpack.c.h.b16 %v894
  %v916 = vunpack.c.l.b16 %v895
  %v917 = vunpack.c.h.b16 %v895
  %v918 = vunpack.c.l.b16 %v896
  %v919 = vunpack.c.h.b16 %v896
  %v920 = vunpack.c.l.b16 %v897
  %v921 = vunpack.c.h.b16 %v897
  %v922 = vpack.c.b16 %v908, %v906
  %v923 = vpack.c.b16 %v909, %v907
  %v924 = vpack.c.b16 %v912, %v910
  %v925 = vpack.c.b16 %v913, %v911
  %v926 = vpack.c.b16 %v916, %v914
  %v927 = vpack.c.b16 %v917, %v915
  %v928 = vpack.c.b16 %v920, %v918
  %v929 = vpack.c.b16 %v921, %v919
  %v939 = vsel %vm57, %v889, 0
  %941 = vmatprep.subr.bf16.mxu0 %v923
  %942 = vmatpush1.bf16.msra.mxu0 %v922
  %943 = vmatprep.subr.bf16.mxu0 %v925
  %944 = vmatpush1.bf16.msra.mxu0 %v924
  %945 = vmatprep.subr.bf16.mxu0 %v927
  %946 = vmatpush1.bf16.msra.mxu0 %v926
  %947 = vmatprep.subr.bf16.mxu0 %v929
  %948 = vmatpush1.bf16.msra.mxu0 %v928
  %949 = vmatprep.subr.bf16.mxu0 0
  %950 = vmatpush1.bf16.msra.mxu0 0
  %951 = vmatprep.subr.bf16.mxu0 0
  %952 = vmatpush1.bf16.msra.mxu0 0
  %953 = vmatprep.subr.bf16.mxu0 0
  %954 = vmatpush1.bf16.msra.mxu0 0
  %955 = vmatprep.subr.bf16.mxu0 0
  %956 = vmatpush1.bf16.msra.mxu0 0
  %957 = vmatprep.subr.bf16.mxu0 0
  %958 = vmatpush1.bf16.msra.mxu0 0
  %959 = vmatprep.subr.bf16.mxu0 0
  %960 = vmatpush1.bf16.msra.mxu0 0
  %961 = vmatprep.subr.bf16.mxu0 0
  %962 = vmatpush1.bf16.msra.mxu0 0
  %963 = vmatprep.subr.bf16.mxu0 0
  %964 = vmatpush1.bf16.msra.mxu0 0
  %965 = vmatprep.subr.bf16.mxu0 0
  %966 = vmatpush1.bf16.msra.mxu0 0
  %967 = vmatprep.subr.bf16.mxu0 0
  %968 = vmatpush1.bf16.msra.mxu0 0
  %969 = vmatprep.subr.bf16.mxu0 0
  %970 = vmatpush1.bf16.msra.mxu0 0
  %971 = vmatprep.subr.bf16.mxu0 0
  %972 = vmatpush1.bf16.msra.mxu0 0
  %973 = vmatprep.mubr.bf16.mxu0 0
  %974 = vmatmul.mubr.bf16.gmra.mrb[0].mxu0 %v939
  %v975 = vpop.f32.mrb[0].mxu0
  %v976 = vadd.f32 %v225, %v975
  %v977 = vpop.f32.mrb[0].mxu0
  %v978 = vadd.f32 %v229, %v977
  %v979 = vpop.f32.mrb[0].mxu0
  %v980 = vpop.f32.mrb[0].mxu0
  %981 = vdwg.mxu0
  %v982 = vld [vmem:[#allocation2 + $0x40] sm:$0xff]
  %v983 = vld [vmem:[#allocation2 + $0x30] sm:$0xff]
  %v984 = vld [vmem:[#allocation2 + $0x38] sm:$0xff]
  %v985 = vadd.f32 %v982, %v976
  %v986 = vxor.u32 %v985, 2147483648
  %v987 = vmul.f32 %v986, 1.442695
  %v988 = vpow.pop %v987
  %v989 = vadd.f32 %v988, 1.0
  %v990 = vrcp.pop %v989
  %v991 = vmul.f32 1.0, %v990
  %993 = vrot.lane.b32.xlu0 %v976, 64
  %v994 = vpop.permute.xlu0 %993
  %v996 = vmul.f32 %v991, %v994
  %998 = vrot.lane.b32.xlu0 %v996, 64
  %v999 = vpop.permute.xlu0 %998
  %v1001 = vadd.f32 %v982, %v999
  %v1002 = vtanh.pop %v1001
  %v1003 = vsub.f32 1.0, %v991
  %1005 = vrot.lane.b32.xlu0 %v1002, 96
  %v1006 = vpop.permute.xlu0 %1005
  %v1008 = vmul.f32 %v1003, %v1006
  %v1009 = vmul.f32 %v991, %v844
  %v1010 = vadd.f32 %v1008, %v1009
  %v1011 = vadd.f32 %v983, %v976
  %v1012 = vxor.u32 %v1011, 2147483648
  %v1013 = vmul.f32 %v1012, 1.442695
  %v1014 = vpow.pop %v1013
  %v1015 = vadd.f32 %v1014, 1.0
  %v1016 = vrcp.pop %v1015
  %v1017 = vmul.f32 1.0, %v1016
  %v1018 = vadd.f32 %v984, %v978
  %v1019 = vxor.u32 %v1018, 2147483648
  %v1020 = vmul.f32 %v1019, 1.442695
  %v1021 = vpow.pop %v1020
  %v1022 = vadd.f32 %v1021, 1.0
  %v1023 = vrcp.pop %v1022
  %v1024 = vmul.f32 1.0, %v1023
  %1026 = vrot.lane.b32.xlu0 %v978, 64
  %v1027 = vpop.permute.xlu0 %1026
  %v1029 = vmul.f32 %v1017, %v1027
  %1031 = vrot.lane.b32.xlu0 %v1029, 64
  %v1032 = vpop.permute.xlu0 %1031
  %v1034 = vadd.f32 %v984, %v1032
  %v1035 = vtanh.pop %v1034
  %v1036 = vsub.f32 1.0, %v1024
  %1038 = vrot.lane.b32.xlu0 %v1035, 96
  %v1039 = vpop.permute.xlu0 %1038
  %v1041 = vmul.f32 %v1036, %v1039
  %v1042 = vmul.f32 %v1024, %v877
  %v1043 = vadd.f32 %v1041, %v1042
  %1045 = vrot.lane.b32.xlu0 %v1010, 96
  %v1046 = vpop.permute.xlu0 %1045
  %1048 = vst.msk [vmem:[%s5 + $0x20] sm:$0xff] %vm382, %v1046
  %1050 = vrot.lane.b32.xlu0 %v1043, 32
  %v1051 = vpop.permute.xlu0 %1050
  %1053 = vst.msk [vmem:[%s5 + $0x18] sm:$0xff] %vm388, %v1051
  %v1054 = vsel %vm382, %v1046, %v1051
  %v1055 = vpack.c.bf16 %v1054, %v1054
  %v1056 = vld [vmem:[%s2] sm:$0xff]
  %v1057 = vld [vmem:[%s2 + $0x8] sm:$0xff]
  %v1058 = vld [vmem:[%s2 + $0x10] sm:$0xff]
  %v1059 = vld [vmem:[%s2 + $0x18] sm:$0xff]
  %v1060 = vld [vmem:[%s2 + $0x20] sm:$0xff]
  %v1061 = vld [vmem:[%s2 + $0x28] sm:$0xff]
  %v1062 = vld [vmem:[%s2 + $0x30] sm:$0xff]
  %v1063 = vld [vmem:[%s2 + $0x38] sm:$0xff]
  %v1072 = vunpack.c.l.b16 %v1056
  %v1073 = vunpack.c.h.b16 %v1056
  %v1074 = vunpack.c.l.b16 %v1057
  %v1075 = vunpack.c.h.b16 %v1057
  %v1076 = vunpack.c.l.b16 %v1058
  %v1077 = vunpack.c.h.b16 %v1058
  %v1078 = vunpack.c.l.b16 %v1059
  %v1079 = vunpack.c.h.b16 %v1059
  %v1080 = vunpack.c.l.b16 %v1060
  %v1081 = vunpack.c.h.b16 %v1060
  %v1082 = vunpack.c.l.b16 %v1061
  %v1083 = vunpack.c.h.b16 %v1061
  %v1084 = vunpack.c.l.b16 %v1062
  %v1085 = vunpack.c.h.b16 %v1062
  %v1086 = vunpack.c.l.b16 %v1063
  %v1087 = vunpack.c.h.b16 %v1063
  %v1088 = vpack.c.b16 %v1074, %v1072
  %v1089 = vpack.c.b16 %v1075, %v1073
  %v1090 = vpack.c.b16 %v1078, %v1076
  %v1091 = vpack.c.b16 %v1079, %v1077
  %v1092 = vpack.c.b16 %v1082, %v1080
  %v1093 = vpack.c.b16 %v1083, %v1081
  %v1094 = vpack.c.b16 %v1086, %v1084
  %v1095 = vpack.c.b16 %v1087, %v1085
  %v1105 = vsel %vm57, %v1055, 0
  %1107 = vmatprep.subr.bf16.mxu0 %v1089
  %1108 = vmatpush1.bf16.msra.mxu0 %v1088
  %1109 = vmatprep.subr.bf16.mxu0 %v1091
  %1110 = vmatpush1.bf16.msra.mxu0 %v1090
  %1111 = vmatprep.subr.bf16.mxu0 %v1093
  %1112 = vmatpush1.bf16.msra.mxu0 %v1092
  %1113 = vmatprep.subr.bf16.mxu0 %v1095
  %1114 = vmatpush1.bf16.msra.mxu0 %v1094
  %1115 = vmatprep.subr.bf16.mxu0 0
  %1116 = vmatpush1.bf16.msra.mxu0 0
  %1117 = vmatprep.subr.bf16.mxu0 0
  %1118 = vmatpush1.bf16.msra.mxu0 0
  %1119 = vmatprep.subr.bf16.mxu0 0
  %1120 = vmatpush1.bf16.msra.mxu0 0
  %1121 = vmatprep.subr.bf16.mxu0 0
  %1122 = vmatpush1.bf16.msra.mxu0 0
  %1123 = vmatprep.subr.bf16.mxu0 0
  %1124 = vmatpush1.bf16.msra.mxu0 0
  %1125 = vmatprep.subr.bf16.mxu0 0
  %1126 = vmatpush1.bf16.msra.mxu0 0
  %1127 = vmatprep.subr.bf16.mxu0 0
  %1128 = vmatpush1.bf16.msra.mxu0 0
  %1129 = vmatprep.subr.bf16.mxu0 0
  %1130 = vmatpush1.bf16.msra.mxu0 0
  %1131 = vmatprep.subr.bf16.mxu0 0
  %1132 = vmatpush1.bf16.msra.mxu0 0
  %1133 = vmatprep.subr.bf16.mxu0 0
  %1134 = vmatpush1.bf16.msra.mxu0 0
  %1135 = vmatprep.subr.bf16.mxu0 0
  %1136 = vmatpush1.bf16.msra.mxu0 0
  %1137 = vmatprep.subr.bf16.mxu0 0
  %1138 = vmatpush1.bf16.msra.mxu0 0
  %1139 = vmatprep.mubr.bf16.mxu0 0
  %1140 = vmatmul.mubr.bf16.gmra.mrb[0].mxu0 %v1105
  %v1141 = vpop.f32.mrb[0].mxu0
  %v1142 = vadd.f32 %v225, %v1141
  %v1143 = vpop.f32.mrb[0].mxu0
  %v1144 = vadd.f32 %v229, %v1143
  %v1145 = vpop.f32.mrb[0].mxu0
  %v1146 = vpop.f32.mrb[0].mxu0
  %1147 = vdwg.mxu0
  %v1148 = vld [vmem:[#allocation2 + $0x50] sm:$0xff]
  %v1149 = vld [vmem:[#allocation2 + $0x20] sm:$0xff]
  %v1150 = vld [vmem:[#allocation2 + $0x28] sm:$0xff]
  %v1151 = vadd.f32 %v1148, %v1142
  %v1152 = vxor.u32 %v1151, 2147483648
  %v1153 = vmul.f32 %v1152, 1.442695
  %v1154 = vpow.pop %v1153
  %v1155 = vadd.f32 %v1154, 1.0
  %v1156 = vrcp.pop %v1155
  %v1157 = vmul.f32 1.0, %v1156
  %1159 = vrot.lane.b32.xlu0 %v1142, 64
  %v1160 = vpop.permute.xlu0 %1159
  %v1162 = vmul.f32 %v1157, %v1160
  %1164 = vrot.lane.b32.xlu0 %v1162, 64
  %v1165 = vpop.permute.xlu0 %1164
  %v1167 = vadd.f32 %v1148, %v1165
  %v1168 = vtanh.pop %v1167
  %v1169 = vsub.f32 1.0, %v1157
  %1171 = vrot.lane.b32.xlu0 %v1168, 96
  %v1172 = vpop.permute.xlu0 %1171
  %v1174 = vmul.f32 %v1169, %v1172
  %v1175 = vmul.f32 %v1157, %v1010
  %v1176 = vadd.f32 %v1174, %v1175
  %v1177 = vadd.f32 %v1149, %v1142
  %v1178 = vxor.u32 %v1177, 2147483648
  %v1179 = vmul.f32 %v1178, 1.442695
  %v1180 = vpow.pop %v1179
  %v1181 = vadd.f32 %v1180, 1.0
  %v1182 = vrcp.pop %v1181
  %v1183 = vmul.f32 1.0, %v1182
  %v1184 = vadd.f32 %v1150, %v1144
  %v1185 = vxor.u32 %v1184, 2147483648
  %v1186 = vmul.f32 %v1185, 1.442695
  %v1187 = vpow.pop %v1186
  %v1188 = vadd.f32 %v1187, 1.0
  %v1189 = vrcp.pop %v1188
  %v1190 = vmul.f32 1.0, %v1189
  %1192 = vrot.lane.b32.xlu0 %v1144, 64
  %v1193 = vpop.permute.xlu0 %1192
  %v1195 = vmul.f32 %v1183, %v1193
  %1197 = vrot.lane.b32.xlu0 %v1195, 64
  %v1198 = vpop.permute.xlu0 %1197
  %v1200 = vadd.f32 %v1150, %v1198
  %v1201 = vtanh.pop %v1200
  %v1202 = vsub.f32 1.0, %v1190
  %1204 = vrot.lane.b32.xlu0 %v1201, 96
  %v1205 = vpop.permute.xlu0 %1204
  %v1207 = vmul.f32 %v1202, %v1205
  %v1208 = vmul.f32 %v1190, %v1043
  %v1209 = vadd.f32 %v1207, %v1208
  %1211 = vrot.lane.b32.xlu0 %v1176, 96
  %v1212 = vpop.permute.xlu0 %1211
  %1214 = vst.msk [vmem:[%s5 + $0x28] sm:$0xff] %vm382, %v1212
  %1216 = vrot.lane.b32.xlu0 %v1209, 32
  %v1217 = vpop.permute.xlu0 %1216
  %1219 = vst.msk [vmem:[%s5 + $0x10] sm:$0xff] %vm388, %v1217
  %v1220 = vsel %vm382, %v1212, %v1217
  %v1221 = vpack.c.bf16 %v1220, %v1220
  %v1222 = vld [vmem:[%s2] sm:$0xff]
  %v1223 = vld [vmem:[%s2 + $0x8] sm:$0xff]
  %v1224 = vld [vmem:[%s2 + $0x10] sm:$0xff]
  %v1225 = vld [vmem:[%s2 + $0x18] sm:$0xff]
  %v1226 = vld [vmem:[%s2 + $0x20] sm:$0xff]
  %v1227 = vld [vmem:[%s2 + $0x28] sm:$0xff]
  %v1228 = vld [vmem:[%s2 + $0x30] sm:$0xff]
  %v1229 = vld [vmem:[%s2 + $0x38] sm:$0xff]
  %v1238 = vunpack.c.l.b16 %v1222
  %v1239 = vunpack.c.h.b16 %v1222
  %v1240 = vunpack.c.l.b16 %v1223
  %v1241 = vunpack.c.h.b16 %v1223
  %v1242 = vunpack.c.l.b16 %v1224
  %v1243 = vunpack.c.h.b16 %v1224
  %v1244 = vunpack.c.l.b16 %v1225
  %v1245 = vunpack.c.h.b16 %v1225
  %v1246 = vunpack.c.l.b16 %v1226
  %v1247 = vunpack.c.h.b16 %v1226
  %v1248 = vunpack.c.l.b16 %v1227
  %v1249 = vunpack.c.h.b16 %v1227
  %v1250 = vunpack.c.l.b16 %v1228
  %v1251 = vunpack.c.h.b16 %v1228
  %v1252 = vunpack.c.l.b16 %v1229
  %v1253 = vunpack.c.h.b16 %v1229
  %v1254 = vpack.c.b16 %v1240, %v1238
  %v1255 = vpack.c.b16 %v1241, %v1239
  %v1256 = vpack.c.b16 %v1244, %v1242
  %v1257 = vpack.c.b16 %v1245, %v1243
  %v1258 = vpack.c.b16 %v1248, %v1246
  %v1259 = vpack.c.b16 %v1249, %v1247
  %v1260 = vpack.c.b16 %v1252, %v1250
  %v1261 = vpack.c.b16 %v1253, %v1251
  %v1271 = vsel %vm57, %v1221, 0
  %1273 = vmatprep.subr.bf16.mxu0 %v1255
  %1274 = vmatpush1.bf16.msra.mxu0 %v1254
  %1275 = vmatprep.subr.bf16.mxu0 %v1257
  %1276 = vmatpush1.bf16.msra.mxu0 %v1256
  %1277 = vmatprep.subr.bf16.mxu0 %v1259
  %1278 = vmatpush1.bf16.msra.mxu0 %v1258
  %1279 = vmatprep.subr.bf16.mxu0 %v1261
  %1280 = vmatpush1.bf16.msra.mxu0 %v1260
  %1281 = vmatprep.subr.bf16.mxu0 0
  %1282 = vmatpush1.bf16.msra.mxu0 0
  %1283 = vmatprep.subr.bf16.mxu0 0
  %1284 = vmatpush1.bf16.msra.mxu0 0
  %1285 = vmatprep.subr.bf16.mxu0 0
  %1286 = vmatpush1.bf16.msra.mxu0 0
  %1287 = vmatprep.subr.bf16.mxu0 0
  %1288 = vmatpush1.bf16.msra.mxu0 0
  %1289 = vmatprep.subr.bf16.mxu0 0
  %1290 = vmatpush1.bf16.msra.mxu0 0
  %1291 = vmatprep.subr.bf16.mxu0 0
  %1292 = vmatpush1.bf16.msra.mxu0 0
  %1293 = vmatprep.subr.bf16.mxu0 0
  %1294 = vmatpush1.bf16.msra.mxu0 0
  %1295 = vmatprep.subr.bf16.mxu0 0
  %1296 = vmatpush1.bf16.msra.mxu0 0
  %1297 = vmatprep.subr.bf16.mxu0 0
  %1298 = vmatpush1.bf16.msra.mxu0 0
  %1299 = vmatprep.subr.bf16.mxu0 0
  %1300 = vmatpush1.bf16.msra.mxu0 0
  %1301 = vmatprep.subr.bf16.mxu0 0
  %1302 = vmatpush1.bf16.msra.mxu0 0
  %1303 = vmatprep.subr.bf16.mxu0 0
  %1304 = vmatpush1.bf16.msra.mxu0 0
  %1305 = vmatprep.mubr.bf16.mxu0 0
  %1306 = vmatmul.mubr.bf16.gmra.mrb[0].mxu0 %v1271
  %v1307 = vpop.f32.mrb[0].mxu0
  %v1308 = vadd.f32 %v225, %v1307
  %v1309 = vpop.f32.mrb[0].mxu0
  %v1310 = vadd.f32 %v229, %v1309
  %v1311 = vpop.f32.mrb[0].mxu0
  %v1312 = vpop.f32.mrb[0].mxu0
  %1313 = vdwg.mxu0
  %v1314 = vld [vmem:[#allocation2 + $0x60] sm:$0xff]
  %v1315 = vld [vmem:[#allocation2 + $0x10] sm:$0xff]
  %v1316 = vld [vmem:[#allocation2 + $0x18] sm:$0xff]
  %v1317 = vadd.f32 %v1314, %v1308
  %v1318 = vxor.u32 %v1317, 2147483648
  %v1319 = vmul.f32 %v1318, 1.442695
  %v1320 = vpow.pop %v1319
  %v1321 = vadd.f32 %v1320, 1.0
  %v1322 = vrcp.pop %v1321
  %v1323 = vmul.f32 1.0, %v1322
  %1325 = vrot.lane.b32.xlu0 %v1308, 64
  %v1326 = vpop.permute.xlu0 %1325
  %v1328 = vmul.f32 %v1323, %v1326
  %1330 = vrot.lane.b32.xlu0 %v1328, 64
  %v1331 = vpop.permute.xlu0 %1330
  %v1333 = vadd.f32 %v1314, %v1331
  %v1334 = vtanh.pop %v1333
  %v1335 = vsub.f32 1.0, %v1323
  %1337 = vrot.lane.b32.xlu0 %v1334, 96
  %v1338 = vpop.permute.xlu0 %1337
  %v1340 = vmul.f32 %v1335, %v1338
  %v1341 = vmul.f32 %v1323, %v1176
  %v1342 = vadd.f32 %v1340, %v1341
  %v1343 = vadd.f32 %v1315, %v1308
  %v1344 = vxor.u32 %v1343, 2147483648
  %v1345 = vmul.f32 %v1344, 1.442695
  %v1346 = vpow.pop %v1345
  %v1347 = vadd.f32 %v1346, 1.0
  %v1348 = vrcp.pop %v1347
  %v1349 = vmul.f32 1.0, %v1348
  %v1350 = vadd.f32 %v1316, %v1310
  %v1351 = vxor.u32 %v1350, 2147483648
  %v1352 = vmul.f32 %v1351, 1.442695
  %v1353 = vpow.pop %v1352
  %v1354 = vadd.f32 %v1353, 1.0
  %v1355 = vrcp.pop %v1354
  %v1356 = vmul.f32 1.0, %v1355
  %1358 = vrot.lane.b32.xlu0 %v1310, 64
  %v1359 = vpop.permute.xlu0 %1358
  %v1361 = vmul.f32 %v1349, %v1359
  %1363 = vrot.lane.b32.xlu0 %v1361, 64
  %v1364 = vpop.permute.xlu0 %1363
  %v1366 = vadd.f32 %v1316, %v1364
  %v1367 = vtanh.pop %v1366
  %v1368 = vsub.f32 1.0, %v1356
  %1370 = vrot.lane.b32.xlu0 %v1367, 96
  %v1371 = vpop.permute.xlu0 %1370
  %v1373 = vmul.f32 %v1368, %v1371
  %v1374 = vmul.f32 %v1356, %v1209
  %v1375 = vadd.f32 %v1373, %v1374
  %1377 = vrot.lane.b32.xlu0 %v1342, 96
  %v1378 = vpop.permute.xlu0 %1377
  %1380 = vst.msk [vmem:[%s5 + $0x30] sm:$0xff] %vm382, %v1378
  %1382 = vrot.lane.b32.xlu0 %v1375, 32
  %v1383 = vpop.permute.xlu0 %1382
  %1385 = vst.msk [vmem:[%s5 + $0x8] sm:$0xff] %vm388, %v1383
  %v1386 = vsel %vm382, %v1378, %v1383
  %v1387 = vpack.c.bf16 %v1386, %v1386
  %v1388 = vld [vmem:[%s2] sm:$0xff]
  %v1389 = vld [vmem:[%s2 + $0x8] sm:$0xff]
  %v1390 = vld [vmem:[%s2 + $0x10] sm:$0xff]
  %v1391 = vld [vmem:[%s2 + $0x18] sm:$0xff]
  %v1392 = vld [vmem:[%s2 + $0x20] sm:$0xff]
  %v1393 = vld [vmem:[%s2 + $0x28] sm:$0xff]
  %v1394 = vld [vmem:[%s2 + $0x30] sm:$0xff]
  %v1395 = vld [vmem:[%s2 + $0x38] sm:$0xff]
  %v1404 = vunpack.c.l.b16 %v1388
  %v1405 = vunpack.c.h.b16 %v1388
  %v1406 = vunpack.c.l.b16 %v1389
  %v1407 = vunpack.c.h.b16 %v1389
  %v1408 = vunpack.c.l.b16 %v1390
  %v1409 = vunpack.c.h.b16 %v1390
  %v1410 = vunpack.c.l.b16 %v1391
  %v1411 = vunpack.c.h.b16 %v1391
  %v1412 = vunpack.c.l.b16 %v1392
  %v1413 = vunpack.c.h.b16 %v1392
  %v1414 = vunpack.c.l.b16 %v1393
  %v1415 = vunpack.c.h.b16 %v1393
  %v1416 = vunpack.c.l.b16 %v1394
  %v1417 = vunpack.c.h.b16 %v1394
  %v1418 = vunpack.c.l.b16 %v1395
  %v1419 = vunpack.c.h.b16 %v1395
  %v1420 = vpack.c.b16 %v1406, %v1404
  %v1421 = vpack.c.b16 %v1407, %v1405
  %v1422 = vpack.c.b16 %v1410, %v1408
  %v1423 = vpack.c.b16 %v1411, %v1409
  %v1424 = vpack.c.b16 %v1414, %v1412
  %v1425 = vpack.c.b16 %v1415, %v1413
  %v1426 = vpack.c.b16 %v1418, %v1416
  %v1427 = vpack.c.b16 %v1419, %v1417
  %v1437 = vsel %vm57, %v1387, 0
  %1439 = vmatprep.subr.bf16.mxu0 %v1421
  %1440 = vmatpush1.bf16.msra.mxu0 %v1420
  %1441 = vmatprep.subr.bf16.mxu0 %v1423
  %1442 = vmatpush1.bf16.msra.mxu0 %v1422
  %1443 = vmatprep.subr.bf16.mxu0 %v1425
  %1444 = vmatpush1.bf16.msra.mxu0 %v1424
  %1445 = vmatprep.subr.bf16.mxu0 %v1427
  %1446 = vmatpush1.bf16.msra.mxu0 %v1426
  %1447 = vmatprep.subr.bf16.mxu0 0
  %1448 = vmatpush1.bf16.msra.mxu0 0
  %1449 = vmatprep.subr.bf16.mxu0 0
  %1450 = vmatpush1.bf16.msra.mxu0 0
  %1451 = vmatprep.subr.bf16.mxu0 0
  %1452 = vmatpush1.bf16.msra.mxu0 0
  %1453 = vmatprep.subr.bf16.mxu0 0
  %1454 = vmatpush1.bf16.msra.mxu0 0
  %1455 = vmatprep.subr.bf16.mxu0 0
  %1456 = vmatpush1.bf16.msra.mxu0 0
  %1457 = vmatprep.subr.bf16.mxu0 0
  %1458 = vmatpush1.bf16.msra.mxu0 0
  %1459 = vmatprep.subr.bf16.mxu0 0
  %1460 = vmatpush1.bf16.msra.mxu0 0
  %1461 = vmatprep.subr.bf16.mxu0 0
  %1462 = vmatpush1.bf16.msra.mxu0 0
  %1463 = vmatprep.subr.bf16.mxu0 0
  %1464 = vmatpush1.bf16.msra.mxu0 0
  %1465 = vmatprep.subr.bf16.mxu0 0
  %1466 = vmatpush1.bf16.msra.mxu0 0
  %1467 = vmatprep.subr.bf16.mxu0 0
  %1468 = vmatpush1.bf16.msra.mxu0 0
  %1469 = vmatprep.subr.bf16.mxu0 0
  %1470 = vmatpush1.bf16.msra.mxu0 0
  %1471 = vmatprep.mubr.bf16.mxu0 0
  %1472 = vmatmul.mubr.bf16.gmra.mrb[0].mxu0 %v1437
  %v1473 = vpop.f32.mrb[0].mxu0
  %v1474 = vadd.f32 %v225, %v1473
  %v1475 = vpop.f32.mrb[0].mxu0
  %v1476 = vadd.f32 %v229, %v1475
  %v1477 = vpop.f32.mrb[0].mxu0
  %v1478 = vpop.f32.mrb[0].mxu0
  %1479 = vdwg.mxu0
  %v1480 = vld [vmem:[#allocation2 + $0x70] sm:$0xff]
  %v1481 = vld [vmem:[#allocation2] sm:$0xff]
  %v1482 = vld [vmem:[#allocation2 + $0x8] sm:$0xff]
  %v1483 = vadd.f32 %v1480, %v1474
  %v1484 = vxor.u32 %v1483, 2147483648
  %v1485 = vmul.f32 %v1484, 1.442695
  %v1486 = vpow.pop %v1485
  %v1487 = vadd.f32 %v1486, 1.0
  %v1488 = vrcp.pop %v1487
  %v1489 = vmul.f32 1.0, %v1488
  %1491 = vrot.lane.b32.xlu0 %v1474, 64
  %v1492 = vpop.permute.xlu0 %1491
  %v1494 = vmul.f32 %v1489, %v1492
  %1496 = vrot.lane.b32.xlu0 %v1494, 64
  %v1497 = vpop.permute.xlu0 %1496
  %v1499 = vadd.f32 %v1480, %v1497
  %v1500 = vtanh.pop %v1499
  %v1501 = vsub.f32 1.0, %v1489
  %1503 = vrot.lane.b32.xlu0 %v1500, 96
  %v1504 = vpop.permute.xlu0 %1503
  %v1506 = vmul.f32 %v1501, %v1504
  %v1507 = vmul.f32 %v1489, %v1342
  %v1508 = vadd.f32 %v1506, %v1507
  %v1509 = vadd.f32 %v1481, %v1474
  %v1510 = vxor.u32 %v1509, 2147483648
  %v1511 = vmul.f32 %v1510, 1.442695
  %v1512 = vpow.pop %v1511
  %v1513 = vadd.f32 %v1512, 1.0
  %v1514 = vrcp.pop %v1513
  %v1515 = vmul.f32 1.0, %v1514
  %v1516 = vadd.f32 %v1482, %v1476
  %v1517 = vxor.u32 %v1516, 2147483648
  %v1518 = vmul.f32 %v1517, 1.442695
  %v1519 = vpow.pop %v1518
  %v1520 = vadd.f32 %v1519, 1.0
  %v1521 = vrcp.pop %v1520
  %v1522 = vmul.f32 1.0, %v1521
  %1524 = vrot.lane.b32.xlu0 %v1476, 64
  %v1525 = vpop.permute.xlu0 %1524
  %v1527 = vmul.f32 %v1515, %v1525
  %1529 = vrot.lane.b32.xlu0 %v1527, 64
  %v1530 = vpop.permute.xlu0 %1529
  %v1532 = vadd.f32 %v1482, %v1530
  %v1533 = vtanh.pop %v1532
  %v1534 = vsub.f32 1.0, %v1522
  %1536 = vrot.lane.b32.xlu0 %v1533, 96
  %v1537 = vpop.permute.xlu0 %1536
  %v1539 = vmul.f32 %v1534, %v1537
  %v1540 = vmul.f32 %v1522, %v1375
  %v1541 = vadd.f32 %v1539, %v1540
  %1543 = vrot.lane.b32.xlu0 %v1508, 96
  %v1544 = vpop.permute.xlu0 %1543
  %1546 = vst.msk [vmem:[%s5 + $0x38] sm:$0xff] %vm382, %v1544
  %1548 = vrot.lane.b32.xlu0 %v1541, 32
  %v1549 = vpop.permute.xlu0 %1548
  %1551 = vst.msk [vmem:[%s5] sm:$0xff] %vm388, %v1549
  // Predicated region
  $region22: #{res_altsm_features.10} parent=0 // pred_check
    _
  $region23: #{res_altsm_features.10} parent=0 // pred_check_branch
    %1553 = sbr.rel (0) target = $region25
  $region24: #{res_altsm_features.10} parent=0 // pred_region
    _
  $region25: #{res_altsm_features.10} parent=0 // pred_fallthru
    _
  // Predicated region
  $region26: #{res_altsm_features.10} parent=0 // pred_check
    _
  $region27: #{res_altsm_features.10} parent=0 // pred_check_branch
    %1555 = sbr.rel (0) target = $region29
  $region28: #{res_altsm_features.10} parent=0 // pred_region
    _
  $region29: #{res_altsm_features.10} parent=0 // pred_fallthru
    _

</llo_original>
